<compile_context>
chip_gen: v6e
topology: v6e:2x2x1
jax: 0.10.0
libtpu: 0.0.40
codegen_flags: <defaults>
</compile_context>

<pallas_src>
import functools

import jax
import jax.numpy as jnp
from jax.experimental import pallas as pl
from jax.experimental.pallas import tpu as pltpu


# ----------------------------------------------------------------------------
# Kernel: all T decoder steps in one invocation; hidden carried in vregs
# ----------------------------------------------------------------------------
def attend_decoder_kernel(
    tok_ref,    # SMEM (T,)      int32 token ids
    emb_ref,    # VMEM (V, H)    embedding table (resident)
    h0_ref,     # VMEM (1, H)    initial hidden state
    enc_ref,    # VMEM (V, H)    encoder_outputs (torch.bmm requires V == output_size)
    wcat_ref,   # VMEM (4H, H)   [w_atten (2H,V) ; w_i2h (2H,H)] sublane-stacked (H == V)
    wgru_ref,   # VMEM (2H, 3H)  [w_ih (H,3H) ; w_hh (H,3H)] sublane-stacked (gate order r,z,n)
    wout_ref,   # VMEM (H, V)    output head weight
    bias_ref,   # VMEM (5, 3H)   rows: b_atten, b_i2h, b_ih, b_hh, b_out (short rows zero-padded)
    out_ref,    # OUT  (T, 128)  per row: [out (V) | h_new (H) | attw (V) | zero pad]
):
    T = tok_ref.shape[0]
    V, H = emb_ref.shape
    PACK = out_ref.shape[1]

    # ---- hoisted loads / slices: issued once per kernel, not once per step ----
    w_att = wcat_ref[0:2 * H, :]           # (2H, V)
    w_i2h = wcat_ref[2 * H:4 * H, :]       # (2H, H)
    w_ih = wgru_ref[0:H, :]                # (H, 3H)
    w_hh = wgru_ref[H:2 * H, :]            # (H, 3H)
    w_out = wout_ref[...]                  # (H, V)
    enc = enc_ref[...]                     # (V, H)
    b_att = bias_ref[0:1, 0:V]
    b_i2h = bias_ref[1:2, 0:H]
    b_ih = bias_ref[2:3, :]
    b_hh = bias_ref[3:4, :]
    b_out = bias_ref[4:5, 0:V]
    zpad = jnp.zeros((1, PACK - (2 * V + H)), jnp.float32)

    def log_softmax(x):  # nn.LogSoftmax(dim=1) / F.log_softmax(dim=1)
        m = jnp.max(x, axis=1, keepdims=True)
        return x - (jnp.log(jnp.sum(jnp.exp(x - m), axis=1, keepdims=True)) + m)

    def dot(a, b):
        return jnp.dot(a, b, preferred_element_type=jnp.float32)

    h = h0_ref[...]                        # (1, H) recurrent carry, lives in vregs
    rows = []
    for t in range(T):                     # T is static -> fully unrolled trace
        tok = tok_ref[t]                                    # SMEM scalar read
        embed = emb_ref[pl.ds(tok, 1), :]                   # (1, H); dropout == identity (eval)

        # attention over concat([embed, hidden]) -> LogSoftmax (as in the module)
        cat1 = jnp.concatenate([embed, h], axis=1)          # (1, 2H)
        attw = log_softmax(dot(cat1, w_att) + b_att)        # (1, V)

        # torch.bmm(atten_weights[None], encoder_outputs[None]) -> (1, H)
        applied = dot(attw, enc)

        # i2h on concat([embed, applied]) + ReLU
        cat2 = jnp.concatenate([embed, applied], axis=1)    # (1, 2H)
        x = jnp.maximum(dot(cat2, w_i2h) + b_i2h, 0.0)      # (1, H)

        # single-step GRU cell, PyTorch gate order (r, z, n); fused gate matmuls
        gi = dot(x, w_ih) + b_ih                            # (1, 3H)
        gh = dot(h, w_hh) + b_hh                            # (1, 3H)
        r = jax.nn.sigmoid(gi[:, 0:H] + gh[:, 0:H])
        z = jax.nn.sigmoid(gi[:, H:2 * H] + gh[:, H:2 * H])
        n = jnp.tanh(gi[:, 2 * H:3 * H] + r * gh[:, 2 * H:3 * H])
        h = (1.0 - z) * n + z * h                           # (1, H)

        # output head + log_softmax
        o = log_softmax(dot(h, w_out) + b_out)              # (1, V)

        rows.append(jnp.concatenate([o, h, attw, zpad], axis=1))   # (1, PACK)

    # single lane-dense (T, 128) store (== one f32 vreg tile for T == 8)
    out_ref[...] = jnp.concatenate(rows, axis=0)


# ----------------------------------------------------------------------------
# Wrapper: packs parameter slabs, calls the kernel once (no grid)
# ----------------------------------------------------------------------------
@functools.partial(jax.jit, static_argnames=("hidden_size", "output_size"))
def attend_decoder_forward_seq(tokens, hidden, encoder_outputs, params,
                               *, hidden_size, output_size):
    """tokens: (T,) int32; hidden: (1,1,H); encoder_outputs: (output_size, H).

    Returns (out_seq (T,V) log-softmax, hid_seq (T,H), attw_seq (T,V))."""
    H, V = hidden_size, output_size
    assert H == V, "reference module is only shape-consistent when hidden == output size"
    T = int(tokens.shape[0])
    PACK = max(128, ((2 * V + H + 127) // 128) * 128)

    f32 = jnp.float32
    # sublane-stacked weight slabs (slices inside the kernel are 8-aligned)
    w_cat = jnp.concatenate([params["w_atten"], params["w_i2h"]], axis=0).astype(f32)  # (4H, H)
    w_gru = jnp.concatenate([params["w_ih"], params["w_hh"]], axis=0).astype(f32)      # (2H, 3H)
    w_out = params["w_out"].astype(f32)                                                # (H, V)

    G = 3 * H
    pad_to = lambda b: jnp.pad(b.astype(f32), ((0, 0), (0, G - b.shape[1])))
    bias = jnp.concatenate([
        pad_to(params["b_atten"]),        # row 0 (lanes 0:V valid)
        pad_to(params["b_i2h"]),          # row 1 (lanes 0:H valid)
        params["b_ih"].astype(f32),       # row 2 (1, 3H)
        params["b_hh"].astype(f32),       # row 3 (1, 3H)
        pad_to(params["b_out"]),          # row 4 (lanes 0:V valid)
    ], axis=0)                            # (5, 3H)

    vmem = pl.BlockSpec(memory_space=pltpu.MemorySpace.VMEM)
    smem = pl.BlockSpec(memory_space=pltpu.MemorySpace.SMEM)

    packed = pl.pallas_call(
        attend_decoder_kernel,
        out_shape=jax.ShapeDtypeStruct((T, PACK), f32),
        in_specs=[smem, vmem, vmem, vmem, vmem, vmem, vmem, vmem],
        out_specs=vmem,
    )(
        tokens.astype(jnp.int32),
        params["embedding"].astype(f32),
        hidden.reshape(1, H).astype(f32),
        encoder_outputs.astype(f32),
        w_cat, w_gru, w_out, bias,
    )

    out_seq = packed[:, 0:V]
    hid_seq = packed[:, V:V + H]
    attw_seq = packed[:, V + H:V + H + V]
    return out_seq, hid_seq, attw_seq


# ----------------------------------------------------------------------------
# Pure-JAX reference (mirrors the PyTorch module, looped over T steps)
# ----------------------------------------------------------------------------
def reference_sequence(tokens, hidden, encoder_outputs, params, hidden_size):
    H = hidden_size
    h = hidden.reshape(1, H)
    outs, hids, attws = [], [], []
    for t in range(tokens.shape[0]):
        embed = params["embedding"][tokens[t]][None, :]
        cat1 = jnp.concatenate([embed, h], axis=1)
        attw = jax.nn.log_softmax(cat1 @ params["w_atten"] + params["b_atten"], axis=1)
        applied = attw @ encoder_outputs
        cat2 = jnp.concatenate([embed, applied], axis=1)
        x = jax.nn.relu(cat2 @ params["w_i2h"] + params["b_i2h"])
        gi = x @ params["w_ih"] + params["b_ih"]
        gh = h @ params["w_hh"] + params["b_hh"]
        r = jax.nn.sigmoid(gi[:, :H] + gh[:, :H])
        z = jax.nn.sigmoid(gi[:, H:2 * H] + gh[:, H:2 * H])
        n = jnp.tanh(gi[:, 2 * H:] + r * gh[:, 2 * H:])
        h = (1.0 - z) * n + z * h
        out = jax.nn.log_softmax(h @ params["w_out"] + params["b_out"], axis=1)
        outs.append(out); hids.append(h); attws.append(attw)
    return (jnp.concatenate(outs, axis=0),
            jnp.concatenate(hids, axis=0),
            jnp.concatenate(attws, axis=0))


# ----------------------------------------------------------------------------
# Main
# ----------------------------------------------------------------------------
if __name__ == "__main__":
    hidden_size = 32
    output_size = 32   # must equal hidden_size for the reference module to be shape-consistent
    T = 8              # number of decode steps folded into the single kernel invocation

    key = jax.random.PRNGKey(0)
    keys = jax.random.split(key, 13)
    H, V = hidden_size, output_size

    params = {
        "embedding": jax.random.normal(keys[0], (V, H), jnp.float32),
        "w_atten":   0.1 * jax.random.normal(keys[1], (2 * H, V), jnp.float32),
        "b_atten":   0.1 * jax.random.normal(keys[2], (1, V), jnp.float32),
        "w_i2h":     0.1 * jax.random.normal(keys[3], (2 * H, H), jnp.float32),
        "b_i2h":     0.1 * jax.random.normal(keys[4], (1, H), jnp.float32),
        "w_ih":      0.1 * jax.random.normal(keys[5], (H, 3 * H), jnp.float32),
        "b_ih":      0.1 * jax.random.normal(keys[6], (1, 3 * H), jnp.float32),
        "w_hh":      0.1 * jax.random.normal(keys[7], (H, 3 * H), jnp.float32),
        "b_hh":      0.1 * jax.random.normal(keys[8], (1, 3 * H), jnp.float32),
        "w_out":     0.1 * jax.random.normal(keys[9], (H, V), jnp.float32),
        "b_out":     0.1 * jax.random.normal(keys[10], (1, V), jnp.float32),
    }

    tokens = jax.random.randint(keys[11], (T,), 0, V, dtype=jnp.int32)  # decoder input token ids
    hidden = jnp.zeros((1, 1, H), jnp.float32)                          # initHidden()
    encoder_outputs = jax.random.normal(keys[12], (V, H), jnp.float32)

    out_seq, hid_seq, attw_seq = attend_decoder_forward_seq(
        tokens, hidden, encoder_outputs, params,
        hidden_size=hidden_size, output_size=output_size)
    jax.block_until_ready((out_seq, hid_seq, attw_seq))

    ref_out, ref_hid, ref_attw = reference_sequence(
        tokens, hidden, encoder_outputs, params, hidden_size)

    assert jnp.allclose(out_seq, ref_out, atol=1e-4), "output mismatch"
    assert jnp.allclose(hid_seq, ref_hid, atol=1e-4), "hidden mismatch"
    assert jnp.allclose(attw_seq, ref_attw, atol=1e-4), "attention weights mismatch"

    print("KERNEL_OK")
</pallas_src>

<mosaic_0001>
module attributes {stable_mosaic.version = 11 : i64} {
  func.func @attend_decoder_kernel(%arg0: memref<8xi32, #tpu.memory_space<smem>>, %arg1: memref<32x32xf32, #tpu.memory_space<vmem>>, %arg2: memref<1x32xf32, #tpu.memory_space<vmem>>, %arg3: memref<32x32xf32, #tpu.memory_space<vmem>>, %arg4: memref<128x32xf32, #tpu.memory_space<vmem>>, %arg5: memref<64x96xf32, #tpu.memory_space<vmem>>, %arg6: memref<32x32xf32, #tpu.memory_space<vmem>>, %arg7: memref<5x96xf32, #tpu.memory_space<vmem>>, %arg8: memref<8x128xf32, #tpu.memory_space<vmem>>) attributes {dimension_semantics = [], scalar_prefetch = 0 : i64, scratch_operands = 0 : i64, tpu.core_type = #tpu.core_type<tc>} {
    %c0 = arith.constant 0 : index
    %c0_0 = arith.constant 0 : index
    %0 = vector.load %arg4[%c0, %c0_0] : memref<128x32xf32, #tpu.memory_space<vmem>>, vector<64x32xf32>
    %c64 = arith.constant 64 : index
    %c0_1 = arith.constant 0 : index
    %1 = vector.load %arg4[%c64, %c0_1] : memref<128x32xf32, #tpu.memory_space<vmem>>, vector<64x32xf32>
    %c0_2 = arith.constant 0 : index
    %c0_3 = arith.constant 0 : index
    %2 = vector.load %arg5[%c0_2, %c0_3] : memref<64x96xf32, #tpu.memory_space<vmem>>, vector<32x96xf32>
    %c32 = arith.constant 32 : index
    %c0_4 = arith.constant 0 : index
    %3 = vector.load %arg5[%c32, %c0_4] : memref<64x96xf32, #tpu.memory_space<vmem>>, vector<32x96xf32>
    %c0_5 = arith.constant 0 : index
    %c0_6 = arith.constant 0 : index
    %4 = vector.load %arg6[%c0_5, %c0_6] : memref<32x32xf32, #tpu.memory_space<vmem>>, vector<32x32xf32>
    %c0_7 = arith.constant 0 : index
    %c0_8 = arith.constant 0 : index
    %5 = vector.load %arg3[%c0_7, %c0_8] : memref<32x32xf32, #tpu.memory_space<vmem>>, vector<32x32xf32>
    %c0_9 = arith.constant 0 : index
    %c0_10 = arith.constant 0 : index
    %6 = vector.load %arg7[%c0_9, %c0_10] : memref<5x96xf32, #tpu.memory_space<vmem>>, vector<1x32xf32>
    %c1 = arith.constant 1 : index
    %c0_11 = arith.constant 0 : index
    %7 = vector.load %arg7[%c1, %c0_11] : memref<5x96xf32, #tpu.memory_space<vmem>>, vector<1x32xf32>
    %c2 = arith.constant 2 : index
    %c0_12 = arith.constant 0 : index
    %8 = vector.load %arg7[%c2, %c0_12] : memref<5x96xf32, #tpu.memory_space<vmem>>, vector<1x96xf32>
    %c3 = arith.constant 3 : index
    %c0_13 = arith.constant 0 : index
    %9 = vector.load %arg7[%c3, %c0_13] : memref<5x96xf32, #tpu.memory_space<vmem>>, vector<1x96xf32>
    %c4 = arith.constant 4 : index
    %c0_14 = arith.constant 0 : index
    %10 = vector.load %arg7[%c4, %c0_14] : memref<5x96xf32, #tpu.memory_space<vmem>>, vector<1x32xf32>
    %cst = arith.constant 0.000000e+00 : f32
    %11 = vector.broadcast %cst : f32 to vector<1x32xf32>
    %c0_15 = arith.constant 0 : index
    %c0_16 = arith.constant 0 : index
    %12 = vector.load %arg2[%c0_15, %c0_16] : memref<1x32xf32, #tpu.memory_space<vmem>>, vector<1x32xf32>
    %c0_17 = arith.constant 0 : index
    %13 = memref.load %arg0[%c0_17] : memref<8xi32, #tpu.memory_space<smem>>
    %14 = arith.index_cast %13 : i32 to index
    %c0_18 = arith.constant 0 : index
    %15 = vector.load %arg1[%14, %c0_18] : memref<32x32xf32, #tpu.memory_space<vmem>>, vector<1x32xf32>
    %16 = tpu.concatenate %15, %12 in 1 : vector<1x32xf32>, vector<1x32xf32> -> vector<1x64xf32>
    %cst_19 = arith.constant dense<0.000000e+00> : vector<1x32xf32>
    %17 = tpu.matmul %16, %0, %cst_19 {dimension_numbers = #tpu.dot_dimension_numbers<[1], [0], [0], [1], [0, 0, 1, 1], [], []>} : vector<1x64xf32>, vector<64x32xf32>, vector<1x32xf32> -> vector<1x32xf32>
    %18 = arith.addf %17, %6 : vector<1x32xf32>
    %cst_20 = arith.constant dense<0xFF800000> : vector<1xf32>
    %19 = vector.multi_reduction <maximumf>, %18, %cst_20 [1] : vector<1x32xf32> to vector<1xf32>
    %20 = vector.shape_cast %19 : vector<1xf32> to vector<1x1xf32>
    %21 = vector.broadcast %20 : vector<1x1xf32> to vector<1x32xf32>
    %22 = arith.subf %18, %21 : vector<1x32xf32>
    %23 = math.exp %22 : vector<1x32xf32>
    %cst_21 = arith.constant dense<0.000000e+00> : vector<1xf32>
    %24 = vector.multi_reduction <add>, %23, %cst_21 [1] : vector<1x32xf32> to vector<1xf32>
    %25 = vector.shape_cast %24 : vector<1xf32> to vector<1x1xf32>
    %26 = math.log %25 : vector<1x1xf32>
    %27 = arith.addf %26, %20 : vector<1x1xf32>
    %28 = vector.broadcast %27 : vector<1x1xf32> to vector<1x32xf32>
    %29 = arith.subf %18, %28 : vector<1x32xf32>
    %cst_22 = arith.constant dense<0.000000e+00> : vector<1x32xf32>
    %30 = tpu.matmul %29, %5, %cst_22 {dimension_numbers = #tpu.dot_dimension_numbers<[1], [0], [0], [1], [0, 0, 1, 1], [], []>} : vector<1x32xf32>, vector<32x32xf32>, vector<1x32xf32> -> vector<1x32xf32>
    %31 = tpu.concatenate %15, %30 in 1 : vector<1x32xf32>, vector<1x32xf32> -> vector<1x64xf32>
    %cst_23 = arith.constant dense<0.000000e+00> : vector<1x32xf32>
    %32 = tpu.matmul %31, %1, %cst_23 {dimension_numbers = #tpu.dot_dimension_numbers<[1], [0], [0], [1], [0, 0, 1, 1], [], []>} : vector<1x64xf32>, vector<64x32xf32>, vector<1x32xf32> -> vector<1x32xf32>
    %33 = arith.addf %32, %7 : vector<1x32xf32>
    %cst_24 = arith.constant 0.000000e+00 : f32
    %34 = vector.broadcast %cst_24 : f32 to vector<1x32xf32>
    %35 = arith.maximumf %33, %34 : vector<1x32xf32>
    %cst_25 = arith.constant dense<0.000000e+00> : vector<1x96xf32>
    %36 = tpu.matmul %35, %2, %cst_25 {dimension_numbers = #tpu.dot_dimension_numbers<[1], [0], [0], [1], [0, 0, 1, 1], [], []>} : vector<1x32xf32>, vector<32x96xf32>, vector<1x96xf32> -> vector<1x96xf32>
    %37 = arith.addf %36, %8 : vector<1x96xf32>
    %cst_26 = arith.constant dense<0.000000e+00> : vector<1x96xf32>
    %38 = tpu.matmul %12, %3, %cst_26 {dimension_numbers = #tpu.dot_dimension_numbers<[1], [0], [0], [1], [0, 0, 1, 1], [], []>} : vector<1x32xf32>, vector<32x96xf32>, vector<1x96xf32> -> vector<1x96xf32>
    %39 = arith.addf %38, %9 : vector<1x96xf32>
    %40 = vector.extract_strided_slice %37 {offsets = [0, 0], sizes = [1, 32], strides = [1, 1]} : vector<1x96xf32> to vector<1x32xf32>
    %41 = vector.extract_strided_slice %39 {offsets = [0, 0], sizes = [1, 32], strides = [1, 1]} : vector<1x96xf32> to vector<1x32xf32>
    %42 = arith.addf %40, %41 : vector<1x32xf32>
    %43 = arith.negf %42 : vector<1x32xf32>
    %44 = math.exp %43 : vector<1x32xf32>
    %cst_27 = arith.constant 1.000000e+00 : f32
    %45 = vector.broadcast %cst_27 : f32 to vector<1x32xf32>
    %46 = arith.addf %45, %44 : vector<1x32xf32>
    %47 = arith.divf %45, %46 : vector<1x32xf32>
    %48 = vector.extract_strided_slice %37 {offsets = [0, 32], sizes = [1, 32], strides = [1, 1]} : vector<1x96xf32> to vector<1x32xf32>
    %49 = vector.extract_strided_slice %39 {offsets = [0, 32], sizes = [1, 32], strides = [1, 1]} : vector<1x96xf32> to vector<1x32xf32>
    %50 = arith.addf %48, %49 : vector<1x32xf32>
    %51 = arith.negf %50 : vector<1x32xf32>
    %52 = math.exp %51 : vector<1x32xf32>
    %cst_28 = arith.constant 1.000000e+00 : f32
    %53 = vector.broadcast %cst_28 : f32 to vector<1x32xf32>
    %54 = arith.addf %53, %52 : vector<1x32xf32>
    %55 = arith.divf %53, %54 : vector<1x32xf32>
    %56 = vector.extract_strided_slice %37 {offsets = [0, 64], sizes = [1, 32], strides = [1, 1]} : vector<1x96xf32> to vector<1x32xf32>
    %57 = vector.extract_strided_slice %39 {offsets = [0, 64], sizes = [1, 32], strides = [1, 1]} : vector<1x96xf32> to vector<1x32xf32>
    %58 = arith.mulf %47, %57 : vector<1x32xf32>
    %59 = arith.addf %56, %58 : vector<1x32xf32>
    %60 = math.tanh %59 : vector<1x32xf32>
    %cst_29 = arith.constant 1.000000e+00 : f32
    %61 = vector.broadcast %cst_29 : f32 to vector<1x32xf32>
    %62 = arith.subf %61, %55 : vector<1x32xf32>
    %63 = arith.mulf %62, %60 : vector<1x32xf32>
    %64 = arith.mulf %55, %12 : vector<1x32xf32>
    %65 = arith.addf %63, %64 : vector<1x32xf32>
    %cst_30 = arith.constant dense<0.000000e+00> : vector<1x32xf32>
    %66 = tpu.matmul %65, %4, %cst_30 {dimension_numbers = #tpu.dot_dimension_numbers<[1], [0], [0], [1], [0, 0, 1, 1], [], []>} : vector<1x32xf32>, vector<32x32xf32>, vector<1x32xf32> -> vector<1x32xf32>
    %67 = arith.addf %66, %10 : vector<1x32xf32>
    %cst_31 = arith.constant dense<0xFF800000> : vector<1xf32>
    %68 = vector.multi_reduction <maximumf>, %67, %cst_31 [1] : vector<1x32xf32> to vector<1xf32>
    %69 = vector.shape_cast %68 : vector<1xf32> to vector<1x1xf32>
    %70 = vector.broadcast %69 : vector<1x1xf32> to vector<1x32xf32>
    %71 = arith.subf %67, %70 : vector<1x32xf32>
    %72 = math.exp %71 : vector<1x32xf32>
    %cst_32 = arith.constant dense<0.000000e+00> : vector<1xf32>
    %73 = vector.multi_reduction <add>, %72, %cst_32 [1] : vector<1x32xf32> to vector<1xf32>
    %74 = vector.shape_cast %73 : vector<1xf32> to vector<1x1xf32>
    %75 = math.log %74 : vector<1x1xf32>
    %76 = arith.addf %75, %69 : vector<1x1xf32>
    %77 = vector.broadcast %76 : vector<1x1xf32> to vector<1x32xf32>
    %78 = arith.subf %67, %77 : vector<1x32xf32>
    %79 = tpu.concatenate %78, %65, %29, %11 in 1 : vector<1x32xf32>, vector<1x32xf32>, vector<1x32xf32>, vector<1x32xf32> -> vector<1x128xf32>
    %c1_33 = arith.constant 1 : index
    %80 = memref.load %arg0[%c1_33] : memref<8xi32, #tpu.memory_space<smem>>
    %81 = arith.index_cast %80 : i32 to index
    %c0_34 = arith.constant 0 : index
    %82 = vector.load %arg1[%81, %c0_34] : memref<32x32xf32, #tpu.memory_space<vmem>>, vector<1x32xf32>
    %83 = tpu.concatenate %82, %65 in 1 : vector<1x32xf32>, vector<1x32xf32> -> vector<1x64xf32>
    %cst_35 = arith.constant dense<0.000000e+00> : vector<1x32xf32>
    %84 = tpu.matmul %83, %0, %cst_35 {dimension_numbers = #tpu.dot_dimension_numbers<[1], [0], [0], [1], [0, 0, 1, 1], [], []>} : vector<1x64xf32>, vector<64x32xf32>, vector<1x32xf32> -> vector<1x32xf32>
    %85 = arith.addf %84, %6 : vector<1x32xf32>
    %cst_36 = arith.constant dense<0xFF800000> : vector<1xf32>
    %86 = vector.multi_reduction <maximumf>, %85, %cst_36 [1] : vector<1x32xf32> to vector<1xf32>
    %87 = vector.shape_cast %86 : vector<1xf32> to vector<1x1xf32>
    %88 = vector.broadcast %87 : vector<1x1xf32> to vector<1x32xf32>
    %89 = arith.subf %85, %88 : vector<1x32xf32>
    %90 = math.exp %89 : vector<1x32xf32>
    %cst_37 = arith.constant dense<0.000000e+00> : vector<1xf32>
    %91 = vector.multi_reduction <add>, %90, %cst_37 [1] : vector<1x32xf32> to vector<1xf32>
    %92 = vector.shape_cast %91 : vector<1xf32> to vector<1x1xf32>
    %93 = math.log %92 : vector<1x1xf32>
    %94 = arith.addf %93, %87 : vector<1x1xf32>
    %95 = vector.broadcast %94 : vector<1x1xf32> to vector<1x32xf32>
    %96 = arith.subf %85, %95 : vector<1x32xf32>
    %cst_38 = arith.constant dense<0.000000e+00> : vector<1x32xf32>
    %97 = tpu.matmul %96, %5, %cst_38 {dimension_numbers = #tpu.dot_dimension_numbers<[1], [0], [0], [1], [0, 0, 1, 1], [], []>} : vector<1x32xf32>, vector<32x32xf32>, vector<1x32xf32> -> vector<1x32xf32>
    %98 = tpu.concatenate %82, %97 in 1 : vector<1x32xf32>, vector<1x32xf32> -> vector<1x64xf32>
    %cst_39 = arith.constant dense<0.000000e+00> : vector<1x32xf32>
    %99 = tpu.matmul %98, %1, %cst_39 {dimension_numbers = #tpu.dot_dimension_numbers<[1], [0], [0], [1], [0, 0, 1, 1], [], []>} : vector<1x64xf32>, vector<64x32xf32>, vector<1x32xf32> -> vector<1x32xf32>
    %100 = arith.addf %99, %7 : vector<1x32xf32>
    %cst_40 = arith.constant 0.000000e+00 : f32
    %101 = vector.broadcast %cst_40 : f32 to vector<1x32xf32>
    %102 = arith.maximumf %100, %101 : vector<1x32xf32>
    %cst_41 = arith.constant dense<0.000000e+00> : vector<1x96xf32>
    %103 = tpu.matmul %102, %2, %cst_41 {dimension_numbers = #tpu.dot_dimension_numbers<[1], [0], [0], [1], [0, 0, 1, 1], [], []>} : vector<1x32xf32>, vector<32x96xf32>, vector<1x96xf32> -> vector<1x96xf32>
    %104 = arith.addf %103, %8 : vector<1x96xf32>
    %cst_42 = arith.constant dense<0.000000e+00> : vector<1x96xf32>
    %105 = tpu.matmul %65, %3, %cst_42 {dimension_numbers = #tpu.dot_dimension_numbers<[1], [0], [0], [1], [0, 0, 1, 1], [], []>} : vector<1x32xf32>, vector<32x96xf32>, vector<1x96xf32> -> vector<1x96xf32>
    %106 = arith.addf %105, %9 : vector<1x96xf32>
    %107 = vector.extract_strided_slice %104 {offsets = [0, 0], sizes = [1, 32], strides = [1, 1]} : vector<1x96xf32> to vector<1x32xf32>
    %108 = vector.extract_strided_slice %106 {offsets = [0, 0], sizes = [1, 32], strides = [1, 1]} : vector<1x96xf32> to vector<1x32xf32>
    %109 = arith.addf %107, %108 : vector<1x32xf32>
    %110 = arith.negf %109 : vector<1x32xf32>
    %111 = math.exp %110 : vector<1x32xf32>
    %cst_43 = arith.constant 1.000000e+00 : f32
    %112 = vector.broadcast %cst_43 : f32 to vector<1x32xf32>
    %113 = arith.addf %112, %111 : vector<1x32xf32>
    %114 = arith.divf %112, %113 : vector<1x32xf32>
    %115 = vector.extract_strided_slice %104 {offsets = [0, 32], sizes = [1, 32], strides = [1, 1]} : vector<1x96xf32> to vector<1x32xf32>
    %116 = vector.extract_strided_slice %106 {offsets = [0, 32], sizes = [1, 32], strides = [1, 1]} : vector<1x96xf32> to vector<1x32xf32>
    %117 = arith.addf %115, %116 : vector<1x32xf32>
    %118 = arith.negf %117 : vector<1x32xf32>
    %119 = math.exp %118 : vector<1x32xf32>
    %cst_44 = arith.constant 1.000000e+00 : f32
    %120 = vector.broadcast %cst_44 : f32 to vector<1x32xf32>
    %121 = arith.addf %120, %119 : vector<1x32xf32>
    %122 = arith.divf %120, %121 : vector<1x32xf32>
    %123 = vector.extract_strided_slice %104 {offsets = [0, 64], sizes = [1, 32], strides = [1, 1]} : vector<1x96xf32> to vector<1x32xf32>
    %124 = vector.extract_strided_slice %106 {offsets = [0, 64], sizes = [1, 32], strides = [1, 1]} : vector<1x96xf32> to vector<1x32xf32>
    %125 = arith.mulf %114, %124 : vector<1x32xf32>
    %126 = arith.addf %123, %125 : vector<1x32xf32>
    %127 = math.tanh %126 : vector<1x32xf32>
    %cst_45 = arith.constant 1.000000e+00 : f32
    %128 = vector.broadcast %cst_45 : f32 to vector<1x32xf32>
    %129 = arith.subf %128, %122 : vector<1x32xf32>
    %130 = arith.mulf %129, %127 : vector<1x32xf32>
    %131 = arith.mulf %122, %65 : vector<1x32xf32>
    %132 = arith.addf %130, %131 : vector<1x32xf32>
    %cst_46 = arith.constant dense<0.000000e+00> : vector<1x32xf32>
    %133 = tpu.matmul %132, %4, %cst_46 {dimension_numbers = #tpu.dot_dimension_numbers<[1], [0], [0], [1], [0, 0, 1, 1], [], []>} : vector<1x32xf32>, vector<32x32xf32>, vector<1x32xf32> -> vector<1x32xf32>
    %134 = arith.addf %133, %10 : vector<1x32xf32>
    %cst_47 = arith.constant dense<0xFF800000> : vector<1xf32>
    %135 = vector.multi_reduction <maximumf>, %134, %cst_47 [1] : vector<1x32xf32> to vector<1xf32>
    %136 = vector.shape_cast %135 : vector<1xf32> to vector<1x1xf32>
    %137 = vector.broadcast %136 : vector<1x1xf32> to vector<1x32xf32>
    %138 = arith.subf %134, %137 : vector<1x32xf32>
    %139 = math.exp %138 : vector<1x32xf32>
    %cst_48 = arith.constant dense<0.000000e+00> : vector<1xf32>
    %140 = vector.multi_reduction <add>, %139, %cst_48 [1] : vector<1x32xf32> to vector<1xf32>
    %141 = vector.shape_cast %140 : vector<1xf32> to vector<1x1xf32>
    %142 = math.log %141 : vector<1x1xf32>
    %143 = arith.addf %142, %136 : vector<1x1xf32>
    %144 = vector.broadcast %143 : vector<1x1xf32> to vector<1x32xf32>
    %145 = arith.subf %134, %144 : vector<1x32xf32>
    %146 = tpu.concatenate %145, %132, %96, %11 in 1 : vector<1x32xf32>, vector<1x32xf32>, vector<1x32xf32>, vector<1x32xf32> -> vector<1x128xf32>
    %c2_49 = arith.constant 2 : index
    %147 = memref.load %arg0[%c2_49] : memref<8xi32, #tpu.memory_space<smem>>
    %148 = arith.index_cast %147 : i32 to index
    %c0_50 = arith.constant 0 : index
    %149 = vector.load %arg1[%148, %c0_50] : memref<32x32xf32, #tpu.memory_space<vmem>>, vector<1x32xf32>
    %150 = tpu.concatenate %149, %132 in 1 : vector<1x32xf32>, vector<1x32xf32> -> vector<1x64xf32>
    %cst_51 = arith.constant dense<0.000000e+00> : vector<1x32xf32>
    %151 = tpu.matmul %150, %0, %cst_51 {dimension_numbers = #tpu.dot_dimension_numbers<[1], [0], [0], [1], [0, 0, 1, 1], [], []>} : vector<1x64xf32>, vector<64x32xf32>, vector<1x32xf32> -> vector<1x32xf32>
    %152 = arith.addf %151, %6 : vector<1x32xf32>
    %cst_52 = arith.constant dense<0xFF800000> : vector<1xf32>
    %153 = vector.multi_reduction <maximumf>, %152, %cst_52 [1] : vector<1x32xf32> to vector<1xf32>
    %154 = vector.shape_cast %153 : vector<1xf32> to vector<1x1xf32>
    %155 = vector.broadcast %154 : vector<1x1xf32> to vector<1x32xf32>
    %156 = arith.subf %152, %155 : vector<1x32xf32>
    %157 = math.exp %156 : vector<1x32xf32>
    %cst_53 = arith.constant dense<0.000000e+00> : vector<1xf32>
    %158 = vector.multi_reduction <add>, %157, %cst_53 [1] : vector<1x32xf32> to vector<1xf32>
    %159 = vector.shape_cast %158 : vector<1xf32> to vector<1x1xf32>
    %160 = math.log %159 : vector<1x1xf32>
    %161 = arith.addf %160, %154 : vector<1x1xf32>
    %162 = vector.broadcast %161 : vector<1x1xf32> to vector<1x32xf32>
    %163 = arith.subf %152, %162 : vector<1x32xf32>
    %cst_54 = arith.constant dense<0.000000e+00> : vector<1x32xf32>
    %164 = tpu.matmul %163, %5, %cst_54 {dimension_numbers = #tpu.dot_dimension_numbers<[1], [0], [0], [1], [0, 0, 1, 1], [], []>} : vector<1x32xf32>, vector<32x32xf32>, vector<1x32xf32> -> vector<1x32xf32>
    %165 = tpu.concatenate %149, %164 in 1 : vector<1x32xf32>, vector<1x32xf32> -> vector<1x64xf32>
    %cst_55 = arith.constant dense<0.000000e+00> : vector<1x32xf32>
    %166 = tpu.matmul %165, %1, %cst_55 {dimension_numbers = #tpu.dot_dimension_numbers<[1], [0], [0], [1], [0, 0, 1, 1], [], []>} : vector<1x64xf32>, vector<64x32xf32>, vector<1x32xf32> -> vector<1x32xf32>
    %167 = arith.addf %166, %7 : vector<1x32xf32>
    %cst_56 = arith.constant 0.000000e+00 : f32
    %168 = vector.broadcast %cst_56 : f32 to vector<1x32xf32>
    %169 = arith.maximumf %167, %168 : vector<1x32xf32>
    %cst_57 = arith.constant dense<0.000000e+00> : vector<1x96xf32>
    %170 = tpu.matmul %169, %2, %cst_57 {dimension_numbers = #tpu.dot_dimension_numbers<[1], [0], [0], [1], [0, 0, 1, 1], [], []>} : vector<1x32xf32>, vector<32x96xf32>, vector<1x96xf32> -> vector<1x96xf32>
    %171 = arith.addf %170, %8 : vector<1x96xf32>
    %cst_58 = arith.constant dense<0.000000e+00> : vector<1x96xf32>
    %172 = tpu.matmul %132, %3, %cst_58 {dimension_numbers = #tpu.dot_dimension_numbers<[1], [0], [0], [1], [0, 0, 1, 1], [], []>} : vector<1x32xf32>, vector<32x96xf32>, vector<1x96xf32> -> vector<1x96xf32>
    %173 = arith.addf %172, %9 : vector<1x96xf32>
    %174 = vector.extract_strided_slice %171 {offsets = [0, 0], sizes = [1, 32], strides = [1, 1]} : vector<1x96xf32> to vector<1x32xf32>
    %175 = vector.extract_strided_slice %173 {offsets = [0, 0], sizes = [1, 32], strides = [1, 1]} : vector<1x96xf32> to vector<1x32xf32>
    %176 = arith.addf %174, %175 : vector<1x32xf32>
    %177 = arith.negf %176 : vector<1x32xf32>
    %178 = math.exp %177 : vector<1x32xf32>
    %cst_59 = arith.constant 1.000000e+00 : f32
    %179 = vector.broadcast %cst_59 : f32 to vector<1x32xf32>
    %180 = arith.addf %179, %178 : vector<1x32xf32>
    %181 = arith.divf %179, %180 : vector<1x32xf32>
    %182 = vector.extract_strided_slice %171 {offsets = [0, 32], sizes = [1, 32], strides = [1, 1]} : vector<1x96xf32> to vector<1x32xf32>
    %183 = vector.extract_strided_slice %173 {offsets = [0, 32], sizes = [1, 32], strides = [1, 1]} : vector<1x96xf32> to vector<1x32xf32>
    %184 = arith.addf %182, %183 : vector<1x32xf32>
    %185 = arith.negf %184 : vector<1x32xf32>
    %186 = math.exp %185 : vector<1x32xf32>
    %cst_60 = arith.constant 1.000000e+00 : f32
    %187 = vector.broadcast %cst_60 : f32 to vector<1x32xf32>
    %188 = arith.addf %187, %186 : vector<1x32xf32>
    %189 = arith.divf %187, %188 : vector<1x32xf32>
    %190 = vector.extract_strided_slice %171 {offsets = [0, 64], sizes = [1, 32], strides = [1, 1]} : vector<1x96xf32> to vector<1x32xf32>
    %191 = vector.extract_strided_slice %173 {offsets = [0, 64], sizes = [1, 32], strides = [1, 1]} : vector<1x96xf32> to vector<1x32xf32>
    %192 = arith.mulf %181, %191 : vector<1x32xf32>
    %193 = arith.addf %190, %192 : vector<1x32xf32>
    %194 = math.tanh %193 : vector<1x32xf32>
    %cst_61 = arith.constant 1.000000e+00 : f32
    %195 = vector.broadcast %cst_61 : f32 to vector<1x32xf32>
    %196 = arith.subf %195, %189 : vector<1x32xf32>
    %197 = arith.mulf %196, %194 : vector<1x32xf32>
    %198 = arith.mulf %189, %132 : vector<1x32xf32>
    %199 = arith.addf %197, %198 : vector<1x32xf32>
    %cst_62 = arith.constant dense<0.000000e+00> : vector<1x32xf32>
    %200 = tpu.matmul %199, %4, %cst_62 {dimension_numbers = #tpu.dot_dimension_numbers<[1], [0], [0], [1], [0, 0, 1, 1], [], []>} : vector<1x32xf32>, vector<32x32xf32>, vector<1x32xf32> -> vector<1x32xf32>
    %201 = arith.addf %200, %10 : vector<1x32xf32>
    %cst_63 = arith.constant dense<0xFF800000> : vector<1xf32>
    %202 = vector.multi_reduction <maximumf>, %201, %cst_63 [1] : vector<1x32xf32> to vector<1xf32>
    %203 = vector.shape_cast %202 : vector<1xf32> to vector<1x1xf32>
    %204 = vector.broadcast %203 : vector<1x1xf32> to vector<1x32xf32>
    %205 = arith.subf %201, %204 : vector<1x32xf32>
    %206 = math.exp %205 : vector<1x32xf32>
    %cst_64 = arith.constant dense<0.000000e+00> : vector<1xf32>
    %207 = vector.multi_reduction <add>, %206, %cst_64 [1] : vector<1x32xf32> to vector<1xf32>
    %208 = vector.shape_cast %207 : vector<1xf32> to vector<1x1xf32>
    %209 = math.log %208 : vector<1x1xf32>
    %210 = arith.addf %209, %203 : vector<1x1xf32>
    %211 = vector.broadcast %210 : vector<1x1xf32> to vector<1x32xf32>
    %212 = arith.subf %201, %211 : vector<1x32xf32>
    %213 = tpu.concatenate %212, %199, %163, %11 in 1 : vector<1x32xf32>, vector<1x32xf32>, vector<1x32xf32>, vector<1x32xf32> -> vector<1x128xf32>
    %c3_65 = arith.constant 3 : index
    %214 = memref.load %arg0[%c3_65] : memref<8xi32, #tpu.memory_space<smem>>
    %215 = arith.index_cast %214 : i32 to index
    %c0_66 = arith.constant 0 : index
    %216 = vector.load %arg1[%215, %c0_66] : memref<32x32xf32, #tpu.memory_space<vmem>>, vector<1x32xf32>
    %217 = tpu.concatenate %216, %199 in 1 : vector<1x32xf32>, vector<1x32xf32> -> vector<1x64xf32>
    %cst_67 = arith.constant dense<0.000000e+00> : vector<1x32xf32>
    %218 = tpu.matmul %217, %0, %cst_67 {dimension_numbers = #tpu.dot_dimension_numbers<[1], [0], [0], [1], [0, 0, 1, 1], [], []>} : vector<1x64xf32>, vector<64x32xf32>, vector<1x32xf32> -> vector<1x32xf32>
    %219 = arith.addf %218, %6 : vector<1x32xf32>
    %cst_68 = arith.constant dense<0xFF800000> : vector<1xf32>
    %220 = vector.multi_reduction <maximumf>, %219, %cst_68 [1] : vector<1x32xf32> to vector<1xf32>
    %221 = vector.shape_cast %220 : vector<1xf32> to vector<1x1xf32>
    %222 = vector.broadcast %221 : vector<1x1xf32> to vector<1x32xf32>
    %223 = arith.subf %219, %222 : vector<1x32xf32>
    %224 = math.exp %223 : vector<1x32xf32>
    %cst_69 = arith.constant dense<0.000000e+00> : vector<1xf32>
    %225 = vector.multi_reduction <add>, %224, %cst_69 [1] : vector<1x32xf32> to vector<1xf32>
    %226 = vector.shape_cast %225 : vector<1xf32> to vector<1x1xf32>
    %227 = math.log %226 : vector<1x1xf32>
    %228 = arith.addf %227, %221 : vector<1x1xf32>
    %229 = vector.broadcast %228 : vector<1x1xf32> to vector<1x32xf32>
    %230 = arith.subf %219, %229 : vector<1x32xf32>
    %cst_70 = arith.constant dense<0.000000e+00> : vector<1x32xf32>
    %231 = tpu.matmul %230, %5, %cst_70 {dimension_numbers = #tpu.dot_dimension_numbers<[1], [0], [0], [1], [0, 0, 1, 1], [], []>} : vector<1x32xf32>, vector<32x32xf32>, vector<1x32xf32> -> vector<1x32xf32>
    %232 = tpu.concatenate %216, %231 in 1 : vector<1x32xf32>, vector<1x32xf32> -> vector<1x64xf32>
    %cst_71 = arith.constant dense<0.000000e+00> : vector<1x32xf32>
    %233 = tpu.matmul %232, %1, %cst_71 {dimension_numbers = #tpu.dot_dimension_numbers<[1], [0], [0], [1], [0, 0, 1, 1], [], []>} : vector<1x64xf32>, vector<64x32xf32>, vector<1x32xf32> -> vector<1x32xf32>
    %234 = arith.addf %233, %7 : vector<1x32xf32>
    %cst_72 = arith.constant 0.000000e+00 : f32
    %235 = vector.broadcast %cst_72 : f32 to vector<1x32xf32>
    %236 = arith.maximumf %234, %235 : vector<1x32xf32>
    %cst_73 = arith.constant dense<0.000000e+00> : vector<1x96xf32>
    %237 = tpu.matmul %236, %2, %cst_73 {dimension_numbers = #tpu.dot_dimension_numbers<[1], [0], [0], [1], [0, 0, 1, 1], [], []>} : vector<1x32xf32>, vector<32x96xf32>, vector<1x96xf32> -> vector<1x96xf32>
    %238 = arith.addf %237, %8 : vector<1x96xf32>
    %cst_74 = arith.constant dense<0.000000e+00> : vector<1x96xf32>
    %239 = tpu.matmul %199, %3, %cst_74 {dimension_numbers = #tpu.dot_dimension_numbers<[1], [0], [0], [1], [0, 0, 1, 1], [], []>} : vector<1x32xf32>, vector<32x96xf32>, vector<1x96xf32> -> vector<1x96xf32>
    %240 = arith.addf %239, %9 : vector<1x96xf32>
    %241 = vector.extract_strided_slice %238 {offsets = [0, 0], sizes = [1, 32], strides = [1, 1]} : vector<1x96xf32> to vector<1x32xf32>
    %242 = vector.extract_strided_slice %240 {offsets = [0, 0], sizes = [1, 32], strides = [1, 1]} : vector<1x96xf32> to vector<1x32xf32>
    %243 = arith.addf %241, %242 : vector<1x32xf32>
    %244 = arith.negf %243 : vector<1x32xf32>
    %245 = math.exp %244 : vector<1x32xf32>
    %cst_75 = arith.constant 1.000000e+00 : f32
    %246 = vector.broadcast %cst_75 : f32 to vector<1x32xf32>
    %247 = arith.addf %246, %245 : vector<1x32xf32>
    %248 = arith.divf %246, %247 : vector<1x32xf32>
    %249 = vector.extract_strided_slice %238 {offsets = [0, 32], sizes = [1, 32], strides = [1, 1]} : vector<1x96xf32> to vector<1x32xf32>
    %250 = vector.extract_strided_slice %240 {offsets = [0, 32], sizes = [1, 32], strides = [1, 1]} : vector<1x96xf32> to vector<1x32xf32>
    %251 = arith.addf %249, %250 : vector<1x32xf32>
    %252 = arith.negf %251 : vector<1x32xf32>
    %253 = math.exp %252 : vector<1x32xf32>
    %cst_76 = arith.constant 1.000000e+00 : f32
    %254 = vector.broadcast %cst_76 : f32 to vector<1x32xf32>
    %255 = arith.addf %254, %253 : vector<1x32xf32>
    %256 = arith.divf %254, %255 : vector<1x32xf32>
    %257 = vector.extract_strided_slice %238 {offsets = [0, 64], sizes = [1, 32], strides = [1, 1]} : vector<1x96xf32> to vector<1x32xf32>
    %258 = vector.extract_strided_slice %240 {offsets = [0, 64], sizes = [1, 32], strides = [1, 1]} : vector<1x96xf32> to vector<1x32xf32>
    %259 = arith.mulf %248, %258 : vector<1x32xf32>
    %260 = arith.addf %257, %259 : vector<1x32xf32>
    %261 = math.tanh %260 : vector<1x32xf32>
    %cst_77 = arith.constant 1.000000e+00 : f32
    %262 = vector.broadcast %cst_77 : f32 to vector<1x32xf32>
    %263 = arith.subf %262, %256 : vector<1x32xf32>
    %264 = arith.mulf %263, %261 : vector<1x32xf32>
    %265 = arith.mulf %256, %199 : vector<1x32xf32>
    %266 = arith.addf %264, %265 : vector<1x32xf32>
    %cst_78 = arith.constant dense<0.000000e+00> : vector<1x32xf32>
    %267 = tpu.matmul %266, %4, %cst_78 {dimension_numbers = #tpu.dot_dimension_numbers<[1], [0], [0], [1], [0, 0, 1, 1], [], []>} : vector<1x32xf32>, vector<32x32xf32>, vector<1x32xf32> -> vector<1x32xf32>
    %268 = arith.addf %267, %10 : vector<1x32xf32>
    %cst_79 = arith.constant dense<0xFF800000> : vector<1xf32>
    %269 = vector.multi_reduction <maximumf>, %268, %cst_79 [1] : vector<1x32xf32> to vector<1xf32>
    %270 = vector.shape_cast %269 : vector<1xf32> to vector<1x1xf32>
    %271 = vector.broadcast %270 : vector<1x1xf32> to vector<1x32xf32>
    %272 = arith.subf %268, %271 : vector<1x32xf32>
    %273 = math.exp %272 : vector<1x32xf32>
    %cst_80 = arith.constant dense<0.000000e+00> : vector<1xf32>
    %274 = vector.multi_reduction <add>, %273, %cst_80 [1] : vector<1x32xf32> to vector<1xf32>
    %275 = vector.shape_cast %274 : vector<1xf32> to vector<1x1xf32>
    %276 = math.log %275 : vector<1x1xf32>
    %277 = arith.addf %276, %270 : vector<1x1xf32>
    %278 = vector.broadcast %277 : vector<1x1xf32> to vector<1x32xf32>
    %279 = arith.subf %268, %278 : vector<1x32xf32>
    %280 = tpu.concatenate %279, %266, %230, %11 in 1 : vector<1x32xf32>, vector<1x32xf32>, vector<1x32xf32>, vector<1x32xf32> -> vector<1x128xf32>
    %c4_81 = arith.constant 4 : index
    %281 = memref.load %arg0[%c4_81] : memref<8xi32, #tpu.memory_space<smem>>
    %282 = arith.index_cast %281 : i32 to index
    %c0_82 = arith.constant 0 : index
    %283 = vector.load %arg1[%282, %c0_82] : memref<32x32xf32, #tpu.memory_space<vmem>>, vector<1x32xf32>
    %284 = tpu.concatenate %283, %266 in 1 : vector<1x32xf32>, vector<1x32xf32> -> vector<1x64xf32>
    %cst_83 = arith.constant dense<0.000000e+00> : vector<1x32xf32>
    %285 = tpu.matmul %284, %0, %cst_83 {dimension_numbers = #tpu.dot_dimension_numbers<[1], [0], [0], [1], [0, 0, 1, 1], [], []>} : vector<1x64xf32>, vector<64x32xf32>, vector<1x32xf32> -> vector<1x32xf32>
    %286 = arith.addf %285, %6 : vector<1x32xf32>
    %cst_84 = arith.constant dense<0xFF800000> : vector<1xf32>
    %287 = vector.multi_reduction <maximumf>, %286, %cst_84 [1] : vector<1x32xf32> to vector<1xf32>
    %288 = vector.shape_cast %287 : vector<1xf32> to vector<1x1xf32>
    %289 = vector.broadcast %288 : vector<1x1xf32> to vector<1x32xf32>
    %290 = arith.subf %286, %289 : vector<1x32xf32>
    %291 = math.exp %290 : vector<1x32xf32>
    %cst_85 = arith.constant dense<0.000000e+00> : vector<1xf32>
    %292 = vector.multi_reduction <add>, %291, %cst_85 [1] : vector<1x32xf32> to vector<1xf32>
    %293 = vector.shape_cast %292 : vector<1xf32> to vector<1x1xf32>
    %294 = math.log %293 : vector<1x1xf32>
    %295 = arith.addf %294, %288 : vector<1x1xf32>
    %296 = vector.broadcast %295 : vector<1x1xf32> to vector<1x32xf32>
    %297 = arith.subf %286, %296 : vector<1x32xf32>
    %cst_86 = arith.constant dense<0.000000e+00> : vector<1x32xf32>
    %298 = tpu.matmul %297, %5, %cst_86 {dimension_numbers = #tpu.dot_dimension_numbers<[1], [0], [0], [1], [0, 0, 1, 1], [], []>} : vector<1x32xf32>, vector<32x32xf32>, vector<1x32xf32> -> vector<1x32xf32>
    %299 = tpu.concatenate %283, %298 in 1 : vector<1x32xf32>, vector<1x32xf32> -> vector<1x64xf32>
    %cst_87 = arith.constant dense<0.000000e+00> : vector<1x32xf32>
    %300 = tpu.matmul %299, %1, %cst_87 {dimension_numbers = #tpu.dot_dimension_numbers<[1], [0], [0], [1], [0, 0, 1, 1], [], []>} : vector<1x64xf32>, vector<64x32xf32>, vector<1x32xf32> -> vector<1x32xf32>
    %301 = arith.addf %300, %7 : vector<1x32xf32>
    %cst_88 = arith.constant 0.000000e+00 : f32
    %302 = vector.broadcast %cst_88 : f32 to vector<1x32xf32>
    %303 = arith.maximumf %301, %302 : vector<1x32xf32>
    %cst_89 = arith.constant dense<0.000000e+00> : vector<1x96xf32>
    %304 = tpu.matmul %303, %2, %cst_89 {dimension_numbers = #tpu.dot_dimension_numbers<[1], [0], [0], [1], [0, 0, 1, 1], [], []>} : vector<1x32xf32>, vector<32x96xf32>, vector<1x96xf32> -> vector<1x96xf32>
    %305 = arith.addf %304, %8 : vector<1x96xf32>
    %cst_90 = arith.constant dense<0.000000e+00> : vector<1x96xf32>
    %306 = tpu.matmul %266, %3, %cst_90 {dimension_numbers = #tpu.dot_dimension_numbers<[1], [0], [0], [1], [0, 0, 1, 1], [], []>} : vector<1x32xf32>, vector<32x96xf32>, vector<1x96xf32> -> vector<1x96xf32>
    %307 = arith.addf %306, %9 : vector<1x96xf32>
    %308 = vector.extract_strided_slice %305 {offsets = [0, 0], sizes = [1, 32], strides = [1, 1]} : vector<1x96xf32> to vector<1x32xf32>
    %309 = vector.extract_strided_slice %307 {offsets = [0, 0], sizes = [1, 32], strides = [1, 1]} : vector<1x96xf32> to vector<1x32xf32>
    %310 = arith.addf %308, %309 : vector<1x32xf32>
    %311 = arith.negf %310 : vector<1x32xf32>
    %312 = math.exp %311 : vector<1x32xf32>
    %cst_91 = arith.constant 1.000000e+00 : f32
    %313 = vector.broadcast %cst_91 : f32 to vector<1x32xf32>
    %314 = arith.addf %313, %312 : vector<1x32xf32>
    %315 = arith.divf %313, %314 : vector<1x32xf32>
    %316 = vector.extract_strided_slice %305 {offsets = [0, 32], sizes = [1, 32], strides = [1, 1]} : vector<1x96xf32> to vector<1x32xf32>
    %317 = vector.extract_strided_slice %307 {offsets = [0, 32], sizes = [1, 32], strides = [1, 1]} : vector<1x96xf32> to vector<1x32xf32>
    %318 = arith.addf %316, %317 : vector<1x32xf32>
    %319 = arith.negf %318 : vector<1x32xf32>
    %320 = math.exp %319 : vector<1x32xf32>
    %cst_92 = arith.constant 1.000000e+00 : f32
    %321 = vector.broadcast %cst_92 : f32 to vector<1x32xf32>
    %322 = arith.addf %321, %320 : vector<1x32xf32>
    %323 = arith.divf %321, %322 : vector<1x32xf32>
    %324 = vector.extract_strided_slice %305 {offsets = [0, 64], sizes = [1, 32], strides = [1, 1]} : vector<1x96xf32> to vector<1x32xf32>
    %325 = vector.extract_strided_slice %307 {offsets = [0, 64], sizes = [1, 32], strides = [1, 1]} : vector<1x96xf32> to vector<1x32xf32>
    %326 = arith.mulf %315, %325 : vector<1x32xf32>
    %327 = arith.addf %324, %326 : vector<1x32xf32>
    %328 = math.tanh %327 : vector<1x32xf32>
    %cst_93 = arith.constant 1.000000e+00 : f32
    %329 = vector.broadcast %cst_93 : f32 to vector<1x32xf32>
    %330 = arith.subf %329, %323 : vector<1x32xf32>
    %331 = arith.mulf %330, %328 : vector<1x32xf32>
    %332 = arith.mulf %323, %266 : vector<1x32xf32>
    %333 = arith.addf %331, %332 : vector<1x32xf32>
    %cst_94 = arith.constant dense<0.000000e+00> : vector<1x32xf32>
    %334 = tpu.matmul %333, %4, %cst_94 {dimension_numbers = #tpu.dot_dimension_numbers<[1], [0], [0], [1], [0, 0, 1, 1], [], []>} : vector<1x32xf32>, vector<32x32xf32>, vector<1x32xf32> -> vector<1x32xf32>
    %335 = arith.addf %334, %10 : vector<1x32xf32>
    %cst_95 = arith.constant dense<0xFF800000> : vector<1xf32>
    %336 = vector.multi_reduction <maximumf>, %335, %cst_95 [1] : vector<1x32xf32> to vector<1xf32>
    %337 = vector.shape_cast %336 : vector<1xf32> to vector<1x1xf32>
    %338 = vector.broadcast %337 : vector<1x1xf32> to vector<1x32xf32>
    %339 = arith.subf %335, %338 : vector<1x32xf32>
    %340 = math.exp %339 : vector<1x32xf32>
    %cst_96 = arith.constant dense<0.000000e+00> : vector<1xf32>
    %341 = vector.multi_reduction <add>, %340, %cst_96 [1] : vector<1x32xf32> to vector<1xf32>
    %342 = vector.shape_cast %341 : vector<1xf32> to vector<1x1xf32>
    %343 = math.log %342 : vector<1x1xf32>
    %344 = arith.addf %343, %337 : vector<1x1xf32>
    %345 = vector.broadcast %344 : vector<1x1xf32> to vector<1x32xf32>
    %346 = arith.subf %335, %345 : vector<1x32xf32>
    %347 = tpu.concatenate %346, %333, %297, %11 in 1 : vector<1x32xf32>, vector<1x32xf32>, vector<1x32xf32>, vector<1x32xf32> -> vector<1x128xf32>
    %c5 = arith.constant 5 : index
    %348 = memref.load %arg0[%c5] : memref<8xi32, #tpu.memory_space<smem>>
    %349 = arith.index_cast %348 : i32 to index
    %c0_97 = arith.constant 0 : index
    %350 = vector.load %arg1[%349, %c0_97] : memref<32x32xf32, #tpu.memory_space<vmem>>, vector<1x32xf32>
    %351 = tpu.concatenate %350, %333 in 1 : vector<1x32xf32>, vector<1x32xf32> -> vector<1x64xf32>
    %cst_98 = arith.constant dense<0.000000e+00> : vector<1x32xf32>
    %352 = tpu.matmul %351, %0, %cst_98 {dimension_numbers = #tpu.dot_dimension_numbers<[1], [0], [0], [1], [0, 0, 1, 1], [], []>} : vector<1x64xf32>, vector<64x32xf32>, vector<1x32xf32> -> vector<1x32xf32>
    %353 = arith.addf %352, %6 : vector<1x32xf32>
    %cst_99 = arith.constant dense<0xFF800000> : vector<1xf32>
    %354 = vector.multi_reduction <maximumf>, %353, %cst_99 [1] : vector<1x32xf32> to vector<1xf32>
    %355 = vector.shape_cast %354 : vector<1xf32> to vector<1x1xf32>
    %356 = vector.broadcast %355 : vector<1x1xf32> to vector<1x32xf32>
    %357 = arith.subf %353, %356 : vector<1x32xf32>
    %358 = math.exp %357 : vector<1x32xf32>
    %cst_100 = arith.constant dense<0.000000e+00> : vector<1xf32>
    %359 = vector.multi_reduction <add>, %358, %cst_100 [1] : vector<1x32xf32> to vector<1xf32>
    %360 = vector.shape_cast %359 : vector<1xf32> to vector<1x1xf32>
    %361 = math.log %360 : vector<1x1xf32>
    %362 = arith.addf %361, %355 : vector<1x1xf32>
    %363 = vector.broadcast %362 : vector<1x1xf32> to vector<1x32xf32>
    %364 = arith.subf %353, %363 : vector<1x32xf32>
    %cst_101 = arith.constant dense<0.000000e+00> : vector<1x32xf32>
    %365 = tpu.matmul %364, %5, %cst_101 {dimension_numbers = #tpu.dot_dimension_numbers<[1], [0], [0], [1], [0, 0, 1, 1], [], []>} : vector<1x32xf32>, vector<32x32xf32>, vector<1x32xf32> -> vector<1x32xf32>
    %366 = tpu.concatenate %350, %365 in 1 : vector<1x32xf32>, vector<1x32xf32> -> vector<1x64xf32>
    %cst_102 = arith.constant dense<0.000000e+00> : vector<1x32xf32>
    %367 = tpu.matmul %366, %1, %cst_102 {dimension_numbers = #tpu.dot_dimension_numbers<[1], [0], [0], [1], [0, 0, 1, 1], [], []>} : vector<1x64xf32>, vector<64x32xf32>, vector<1x32xf32> -> vector<1x32xf32>
    %368 = arith.addf %367, %7 : vector<1x32xf32>
    %cst_103 = arith.constant 0.000000e+00 : f32
    %369 = vector.broadcast %cst_103 : f32 to vector<1x32xf32>
    %370 = arith.maximumf %368, %369 : vector<1x32xf32>
    %cst_104 = arith.constant dense<0.000000e+00> : vector<1x96xf32>
    %371 = tpu.matmul %370, %2, %cst_104 {dimension_numbers = #tpu.dot_dimension_numbers<[1], [0], [0], [1], [0, 0, 1, 1], [], []>} : vector<1x32xf32>, vector<32x96xf32>, vector<1x96xf32> -> vector<1x96xf32>
    %372 = arith.addf %371, %8 : vector<1x96xf32>
    %cst_105 = arith.constant dense<0.000000e+00> : vector<1x96xf32>
    %373 = tpu.matmul %333, %3, %cst_105 {dimension_numbers = #tpu.dot_dimension_numbers<[1], [0], [0], [1], [0, 0, 1, 1], [], []>} : vector<1x32xf32>, vector<32x96xf32>, vector<1x96xf32> -> vector<1x96xf32>
    %374 = arith.addf %373, %9 : vector<1x96xf32>
    %375 = vector.extract_strided_slice %372 {offsets = [0, 0], sizes = [1, 32], strides = [1, 1]} : vector<1x96xf32> to vector<1x32xf32>
    %376 = vector.extract_strided_slice %374 {offsets = [0, 0], sizes = [1, 32], strides = [1, 1]} : vector<1x96xf32> to vector<1x32xf32>
    %377 = arith.addf %375, %376 : vector<1x32xf32>
    %378 = arith.negf %377 : vector<1x32xf32>
    %379 = math.exp %378 : vector<1x32xf32>
    %cst_106 = arith.constant 1.000000e+00 : f32
    %380 = vector.broadcast %cst_106 : f32 to vector<1x32xf32>
    %381 = arith.addf %380, %379 : vector<1x32xf32>
    %382 = arith.divf %380, %381 : vector<1x32xf32>
    %383 = vector.extract_strided_slice %372 {offsets = [0, 32], sizes = [1, 32], strides = [1, 1]} : vector<1x96xf32> to vector<1x32xf32>
    %384 = vector.extract_strided_slice %374 {offsets = [0, 32], sizes = [1, 32], strides = [1, 1]} : vector<1x96xf32> to vector<1x32xf32>
    %385 = arith.addf %383, %384 : vector<1x32xf32>
    %386 = arith.negf %385 : vector<1x32xf32>
    %387 = math.exp %386 : vector<1x32xf32>
    %cst_107 = arith.constant 1.000000e+00 : f32
    %388 = vector.broadcast %cst_107 : f32 to vector<1x32xf32>
    %389 = arith.addf %388, %387 : vector<1x32xf32>
    %390 = arith.divf %388, %389 : vector<1x32xf32>
    %391 = vector.extract_strided_slice %372 {offsets = [0, 64], sizes = [1, 32], strides = [1, 1]} : vector<1x96xf32> to vector<1x32xf32>
    %392 = vector.extract_strided_slice %374 {offsets = [0, 64], sizes = [1, 32], strides = [1, 1]} : vector<1x96xf32> to vector<1x32xf32>
    %393 = arith.mulf %382, %392 : vector<1x32xf32>
    %394 = arith.addf %391, %393 : vector<1x32xf32>
    %395 = math.tanh %394 : vector<1x32xf32>
    %cst_108 = arith.constant 1.000000e+00 : f32
    %396 = vector.broadcast %cst_108 : f32 to vector<1x32xf32>
    %397 = arith.subf %396, %390 : vector<1x32xf32>
    %398 = arith.mulf %397, %395 : vector<1x32xf32>
    %399 = arith.mulf %390, %333 : vector<1x32xf32>
    %400 = arith.addf %398, %399 : vector<1x32xf32>
    %cst_109 = arith.constant dense<0.000000e+00> : vector<1x32xf32>
    %401 = tpu.matmul %400, %4, %cst_109 {dimension_numbers = #tpu.dot_dimension_numbers<[1], [0], [0], [1], [0, 0, 1, 1], [], []>} : vector<1x32xf32>, vector<32x32xf32>, vector<1x32xf32> -> vector<1x32xf32>
    %402 = arith.addf %401, %10 : vector<1x32xf32>
    %cst_110 = arith.constant dense<0xFF800000> : vector<1xf32>
    %403 = vector.multi_reduction <maximumf>, %402, %cst_110 [1] : vector<1x32xf32> to vector<1xf32>
    %404 = vector.shape_cast %403 : vector<1xf32> to vector<1x1xf32>
    %405 = vector.broadcast %404 : vector<1x1xf32> to vector<1x32xf32>
    %406 = arith.subf %402, %405 : vector<1x32xf32>
    %407 = math.exp %406 : vector<1x32xf32>
    %cst_111 = arith.constant dense<0.000000e+00> : vector<1xf32>
    %408 = vector.multi_reduction <add>, %407, %cst_111 [1] : vector<1x32xf32> to vector<1xf32>
    %409 = vector.shape_cast %408 : vector<1xf32> to vector<1x1xf32>
    %410 = math.log %409 : vector<1x1xf32>
    %411 = arith.addf %410, %404 : vector<1x1xf32>
    %412 = vector.broadcast %411 : vector<1x1xf32> to vector<1x32xf32>
    %413 = arith.subf %402, %412 : vector<1x32xf32>
    %414 = tpu.concatenate %413, %400, %364, %11 in 1 : vector<1x32xf32>, vector<1x32xf32>, vector<1x32xf32>, vector<1x32xf32> -> vector<1x128xf32>
    %c6 = arith.constant 6 : index
    %415 = memref.load %arg0[%c6] : memref<8xi32, #tpu.memory_space<smem>>
    %416 = arith.index_cast %415 : i32 to index
    %c0_112 = arith.constant 0 : index
    %417 = vector.load %arg1[%416, %c0_112] : memref<32x32xf32, #tpu.memory_space<vmem>>, vector<1x32xf32>
    %418 = tpu.concatenate %417, %400 in 1 : vector<1x32xf32>, vector<1x32xf32> -> vector<1x64xf32>
    %cst_113 = arith.constant dense<0.000000e+00> : vector<1x32xf32>
    %419 = tpu.matmul %418, %0, %cst_113 {dimension_numbers = #tpu.dot_dimension_numbers<[1], [0], [0], [1], [0, 0, 1, 1], [], []>} : vector<1x64xf32>, vector<64x32xf32>, vector<1x32xf32> -> vector<1x32xf32>
    %420 = arith.addf %419, %6 : vector<1x32xf32>
    %cst_114 = arith.constant dense<0xFF800000> : vector<1xf32>
    %421 = vector.multi_reduction <maximumf>, %420, %cst_114 [1] : vector<1x32xf32> to vector<1xf32>
    %422 = vector.shape_cast %421 : vector<1xf32> to vector<1x1xf32>
    %423 = vector.broadcast %422 : vector<1x1xf32> to vector<1x32xf32>
    %424 = arith.subf %420, %423 : vector<1x32xf32>
    %425 = math.exp %424 : vector<1x32xf32>
    %cst_115 = arith.constant dense<0.000000e+00> : vector<1xf32>
    %426 = vector.multi_reduction <add>, %425, %cst_115 [1] : vector<1x32xf32> to vector<1xf32>
    %427 = vector.shape_cast %426 : vector<1xf32> to vector<1x1xf32>
    %428 = math.log %427 : vector<1x1xf32>
    %429 = arith.addf %428, %422 : vector<1x1xf32>
    %430 = vector.broadcast %429 : vector<1x1xf32> to vector<1x32xf32>
    %431 = arith.subf %420, %430 : vector<1x32xf32>
    %cst_116 = arith.constant dense<0.000000e+00> : vector<1x32xf32>
    %432 = tpu.matmul %431, %5, %cst_116 {dimension_numbers = #tpu.dot_dimension_numbers<[1], [0], [0], [1], [0, 0, 1, 1], [], []>} : vector<1x32xf32>, vector<32x32xf32>, vector<1x32xf32> -> vector<1x32xf32>
    %433 = tpu.concatenate %417, %432 in 1 : vector<1x32xf32>, vector<1x32xf32> -> vector<1x64xf32>
    %cst_117 = arith.constant dense<0.000000e+00> : vector<1x32xf32>
    %434 = tpu.matmul %433, %1, %cst_117 {dimension_numbers = #tpu.dot_dimension_numbers<[1], [0], [0], [1], [0, 0, 1, 1], [], []>} : vector<1x64xf32>, vector<64x32xf32>, vector<1x32xf32> -> vector<1x32xf32>
    %435 = arith.addf %434, %7 : vector<1x32xf32>
    %cst_118 = arith.constant 0.000000e+00 : f32
    %436 = vector.broadcast %cst_118 : f32 to vector<1x32xf32>
    %437 = arith.maximumf %435, %436 : vector<1x32xf32>
    %cst_119 = arith.constant dense<0.000000e+00> : vector<1x96xf32>
    %438 = tpu.matmul %437, %2, %cst_119 {dimension_numbers = #tpu.dot_dimension_numbers<[1], [0], [0], [1], [0, 0, 1, 1], [], []>} : vector<1x32xf32>, vector<32x96xf32>, vector<1x96xf32> -> vector<1x96xf32>
    %439 = arith.addf %438, %8 : vector<1x96xf32>
    %cst_120 = arith.constant dense<0.000000e+00> : vector<1x96xf32>
    %440 = tpu.matmul %400, %3, %cst_120 {dimension_numbers = #tpu.dot_dimension_numbers<[1], [0], [0], [1], [0, 0, 1, 1], [], []>} : vector<1x32xf32>, vector<32x96xf32>, vector<1x96xf32> -> vector<1x96xf32>
    %441 = arith.addf %440, %9 : vector<1x96xf32>
    %442 = vector.extract_strided_slice %439 {offsets = [0, 0], sizes = [1, 32], strides = [1, 1]} : vector<1x96xf32> to vector<1x32xf32>
    %443 = vector.extract_strided_slice %441 {offsets = [0, 0], sizes = [1, 32], strides = [1, 1]} : vector<1x96xf32> to vector<1x32xf32>
    %444 = arith.addf %442, %443 : vector<1x32xf32>
    %445 = arith.negf %444 : vector<1x32xf32>
    %446 = math.exp %445 : vector<1x32xf32>
    %cst_121 = arith.constant 1.000000e+00 : f32
    %447 = vector.broadcast %cst_121 : f32 to vector<1x32xf32>
    %448 = arith.addf %447, %446 : vector<1x32xf32>
    %449 = arith.divf %447, %448 : vector<1x32xf32>
    %450 = vector.extract_strided_slice %439 {offsets = [0, 32], sizes = [1, 32], strides = [1, 1]} : vector<1x96xf32> to vector<1x32xf32>
    %451 = vector.extract_strided_slice %441 {offsets = [0, 32], sizes = [1, 32], strides = [1, 1]} : vector<1x96xf32> to vector<1x32xf32>
    %452 = arith.addf %450, %451 : vector<1x32xf32>
    %453 = arith.negf %452 : vector<1x32xf32>
    %454 = math.exp %453 : vector<1x32xf32>
    %cst_122 = arith.constant 1.000000e+00 : f32
    %455 = vector.broadcast %cst_122 : f32 to vector<1x32xf32>
    %456 = arith.addf %455, %454 : vector<1x32xf32>
    %457 = arith.divf %455, %456 : vector<1x32xf32>
    %458 = vector.extract_strided_slice %439 {offsets = [0, 64], sizes = [1, 32], strides = [1, 1]} : vector<1x96xf32> to vector<1x32xf32>
    %459 = vector.extract_strided_slice %441 {offsets = [0, 64], sizes = [1, 32], strides = [1, 1]} : vector<1x96xf32> to vector<1x32xf32>
    %460 = arith.mulf %449, %459 : vector<1x32xf32>
    %461 = arith.addf %458, %460 : vector<1x32xf32>
    %462 = math.tanh %461 : vector<1x32xf32>
    %cst_123 = arith.constant 1.000000e+00 : f32
    %463 = vector.broadcast %cst_123 : f32 to vector<1x32xf32>
    %464 = arith.subf %463, %457 : vector<1x32xf32>
    %465 = arith.mulf %464, %462 : vector<1x32xf32>
    %466 = arith.mulf %457, %400 : vector<1x32xf32>
    %467 = arith.addf %465, %466 : vector<1x32xf32>
    %cst_124 = arith.constant dense<0.000000e+00> : vector<1x32xf32>
    %468 = tpu.matmul %467, %4, %cst_124 {dimension_numbers = #tpu.dot_dimension_numbers<[1], [0], [0], [1], [0, 0, 1, 1], [], []>} : vector<1x32xf32>, vector<32x32xf32>, vector<1x32xf32> -> vector<1x32xf32>
    %469 = arith.addf %468, %10 : vector<1x32xf32>
    %cst_125 = arith.constant dense<0xFF800000> : vector<1xf32>
    %470 = vector.multi_reduction <maximumf>, %469, %cst_125 [1] : vector<1x32xf32> to vector<1xf32>
    %471 = vector.shape_cast %470 : vector<1xf32> to vector<1x1xf32>
    %472 = vector.broadcast %471 : vector<1x1xf32> to vector<1x32xf32>
    %473 = arith.subf %469, %472 : vector<1x32xf32>
    %474 = math.exp %473 : vector<1x32xf32>
    %cst_126 = arith.constant dense<0.000000e+00> : vector<1xf32>
    %475 = vector.multi_reduction <add>, %474, %cst_126 [1] : vector<1x32xf32> to vector<1xf32>
    %476 = vector.shape_cast %475 : vector<1xf32> to vector<1x1xf32>
    %477 = math.log %476 : vector<1x1xf32>
    %478 = arith.addf %477, %471 : vector<1x1xf32>
    %479 = vector.broadcast %478 : vector<1x1xf32> to vector<1x32xf32>
    %480 = arith.subf %469, %479 : vector<1x32xf32>
    %481 = tpu.concatenate %480, %467, %431, %11 in 1 : vector<1x32xf32>, vector<1x32xf32>, vector<1x32xf32>, vector<1x32xf32> -> vector<1x128xf32>
    %c7 = arith.constant 7 : index
    %482 = memref.load %arg0[%c7] : memref<8xi32, #tpu.memory_space<smem>>
    %483 = arith.index_cast %482 : i32 to index
    %c0_127 = arith.constant 0 : index
    %484 = vector.load %arg1[%483, %c0_127] : memref<32x32xf32, #tpu.memory_space<vmem>>, vector<1x32xf32>
    %485 = tpu.concatenate %484, %467 in 1 : vector<1x32xf32>, vector<1x32xf32> -> vector<1x64xf32>
    %cst_128 = arith.constant dense<0.000000e+00> : vector<1x32xf32>
    %486 = tpu.matmul %485, %0, %cst_128 {dimension_numbers = #tpu.dot_dimension_numbers<[1], [0], [0], [1], [0, 0, 1, 1], [], []>} : vector<1x64xf32>, vector<64x32xf32>, vector<1x32xf32> -> vector<1x32xf32>
    %487 = arith.addf %486, %6 : vector<1x32xf32>
    %cst_129 = arith.constant dense<0xFF800000> : vector<1xf32>
    %488 = vector.multi_reduction <maximumf>, %487, %cst_129 [1] : vector<1x32xf32> to vector<1xf32>
    %489 = vector.shape_cast %488 : vector<1xf32> to vector<1x1xf32>
    %490 = vector.broadcast %489 : vector<1x1xf32> to vector<1x32xf32>
    %491 = arith.subf %487, %490 : vector<1x32xf32>
    %492 = math.exp %491 : vector<1x32xf32>
    %cst_130 = arith.constant dense<0.000000e+00> : vector<1xf32>
    %493 = vector.multi_reduction <add>, %492, %cst_130 [1] : vector<1x32xf32> to vector<1xf32>
    %494 = vector.shape_cast %493 : vector<1xf32> to vector<1x1xf32>
    %495 = math.log %494 : vector<1x1xf32>
    %496 = arith.addf %495, %489 : vector<1x1xf32>
    %497 = vector.broadcast %496 : vector<1x1xf32> to vector<1x32xf32>
    %498 = arith.subf %487, %497 : vector<1x32xf32>
    %cst_131 = arith.constant dense<0.000000e+00> : vector<1x32xf32>
    %499 = tpu.matmul %498, %5, %cst_131 {dimension_numbers = #tpu.dot_dimension_numbers<[1], [0], [0], [1], [0, 0, 1, 1], [], []>} : vector<1x32xf32>, vector<32x32xf32>, vector<1x32xf32> -> vector<1x32xf32>
    %500 = tpu.concatenate %484, %499 in 1 : vector<1x32xf32>, vector<1x32xf32> -> vector<1x64xf32>
    %cst_132 = arith.constant dense<0.000000e+00> : vector<1x32xf32>
    %501 = tpu.matmul %500, %1, %cst_132 {dimension_numbers = #tpu.dot_dimension_numbers<[1], [0], [0], [1], [0, 0, 1, 1], [], []>} : vector<1x64xf32>, vector<64x32xf32>, vector<1x32xf32> -> vector<1x32xf32>
    %502 = arith.addf %501, %7 : vector<1x32xf32>
    %cst_133 = arith.constant 0.000000e+00 : f32
    %503 = vector.broadcast %cst_133 : f32 to vector<1x32xf32>
    %504 = arith.maximumf %502, %503 : vector<1x32xf32>
    %cst_134 = arith.constant dense<0.000000e+00> : vector<1x96xf32>
    %505 = tpu.matmul %504, %2, %cst_134 {dimension_numbers = #tpu.dot_dimension_numbers<[1], [0], [0], [1], [0, 0, 1, 1], [], []>} : vector<1x32xf32>, vector<32x96xf32>, vector<1x96xf32> -> vector<1x96xf32>
    %506 = arith.addf %505, %8 : vector<1x96xf32>
    %cst_135 = arith.constant dense<0.000000e+00> : vector<1x96xf32>
    %507 = tpu.matmul %467, %3, %cst_135 {dimension_numbers = #tpu.dot_dimension_numbers<[1], [0], [0], [1], [0, 0, 1, 1], [], []>} : vector<1x32xf32>, vector<32x96xf32>, vector<1x96xf32> -> vector<1x96xf32>
    %508 = arith.addf %507, %9 : vector<1x96xf32>
    %509 = vector.extract_strided_slice %506 {offsets = [0, 0], sizes = [1, 32], strides = [1, 1]} : vector<1x96xf32> to vector<1x32xf32>
    %510 = vector.extract_strided_slice %508 {offsets = [0, 0], sizes = [1, 32], strides = [1, 1]} : vector<1x96xf32> to vector<1x32xf32>
    %511 = arith.addf %509, %510 : vector<1x32xf32>
    %512 = arith.negf %511 : vector<1x32xf32>
    %513 = math.exp %512 : vector<1x32xf32>
    %cst_136 = arith.constant 1.000000e+00 : f32
    %514 = vector.broadcast %cst_136 : f32 to vector<1x32xf32>
    %515 = arith.addf %514, %513 : vector<1x32xf32>
    %516 = arith.divf %514, %515 : vector<1x32xf32>
    %517 = vector.extract_strided_slice %506 {offsets = [0, 32], sizes = [1, 32], strides = [1, 1]} : vector<1x96xf32> to vector<1x32xf32>
    %518 = vector.extract_strided_slice %508 {offsets = [0, 32], sizes = [1, 32], strides = [1, 1]} : vector<1x96xf32> to vector<1x32xf32>
    %519 = arith.addf %517, %518 : vector<1x32xf32>
    %520 = arith.negf %519 : vector<1x32xf32>
    %521 = math.exp %520 : vector<1x32xf32>
    %cst_137 = arith.constant 1.000000e+00 : f32
    %522 = vector.broadcast %cst_137 : f32 to vector<1x32xf32>
    %523 = arith.addf %522, %521 : vector<1x32xf32>
    %524 = arith.divf %522, %523 : vector<1x32xf32>
    %525 = vector.extract_strided_slice %506 {offsets = [0, 64], sizes = [1, 32], strides = [1, 1]} : vector<1x96xf32> to vector<1x32xf32>
    %526 = vector.extract_strided_slice %508 {offsets = [0, 64], sizes = [1, 32], strides = [1, 1]} : vector<1x96xf32> to vector<1x32xf32>
    %527 = arith.mulf %516, %526 : vector<1x32xf32>
    %528 = arith.addf %525, %527 : vector<1x32xf32>
    %529 = math.tanh %528 : vector<1x32xf32>
    %cst_138 = arith.constant 1.000000e+00 : f32
    %530 = vector.broadcast %cst_138 : f32 to vector<1x32xf32>
    %531 = arith.subf %530, %524 : vector<1x32xf32>
    %532 = arith.mulf %531, %529 : vector<1x32xf32>
    %533 = arith.mulf %524, %467 : vector<1x32xf32>
    %534 = arith.addf %532, %533 : vector<1x32xf32>
    %cst_139 = arith.constant dense<0.000000e+00> : vector<1x32xf32>
    %535 = tpu.matmul %534, %4, %cst_139 {dimension_numbers = #tpu.dot_dimension_numbers<[1], [0], [0], [1], [0, 0, 1, 1], [], []>} : vector<1x32xf32>, vector<32x32xf32>, vector<1x32xf32> -> vector<1x32xf32>
    %536 = arith.addf %535, %10 : vector<1x32xf32>
    %cst_140 = arith.constant dense<0xFF800000> : vector<1xf32>
    %537 = vector.multi_reduction <maximumf>, %536, %cst_140 [1] : vector<1x32xf32> to vector<1xf32>
    %538 = vector.shape_cast %537 : vector<1xf32> to vector<1x1xf32>
    %539 = vector.broadcast %538 : vector<1x1xf32> to vector<1x32xf32>
    %540 = arith.subf %536, %539 : vector<1x32xf32>
    %541 = math.exp %540 : vector<1x32xf32>
    %cst_141 = arith.constant dense<0.000000e+00> : vector<1xf32>
    %542 = vector.multi_reduction <add>, %541, %cst_141 [1] : vector<1x32xf32> to vector<1xf32>
    %543 = vector.shape_cast %542 : vector<1xf32> to vector<1x1xf32>
    %544 = math.log %543 : vector<1x1xf32>
    %545 = arith.addf %544, %538 : vector<1x1xf32>
    %546 = vector.broadcast %545 : vector<1x1xf32> to vector<1x32xf32>
    %547 = arith.subf %536, %546 : vector<1x32xf32>
    %548 = tpu.concatenate %547, %534, %498, %11 in 1 : vector<1x32xf32>, vector<1x32xf32>, vector<1x32xf32>, vector<1x32xf32> -> vector<1x128xf32>
    %549 = tpu.concatenate %79, %146, %213, %280, %347, %414, %481, %548 in 0 : vector<1x128xf32>, vector<1x128xf32>, vector<1x128xf32>, vector<1x128xf32>, vector<1x128xf32>, vector<1x128xf32>, vector<1x128xf32>, vector<1x128xf32> -> vector<8x128xf32>
    %c0_142 = arith.constant 0 : index
    %c0_143 = arith.constant 0 : index
    %550 = vector.load %arg8[%c0_142, %c0_143] : memref<8x128xf32, #tpu.memory_space<vmem>>, vector<8x128xf32>
    tpu.vector_store %arg8[%c0_142, %c0_143], %549 {strides = array<i32>} : memref<8x128xf32, #tpu.memory_space<vmem>>, vector<8x128xf32>,
    return
  }
}

</mosaic_0001>

<llo_original>
// kernel: attend_decoder_forward_seq.1
$region0: #{attend_decoder_forward_seq.1}
  #allocation0 [shape = 'u32[]', space=smem, size = 0x4, offset = 0x4, fixed_abs, tag = 'smem constant byte address 0x4 - core index']
  #allocation1 [shape = 'u32[144,128]{1,0:T(1,128)}', space=vmem, size = 0x12000, scoped, tag = 'internal scratch']
  %s0 = inlined_call_operand.vmem [shape: s32[8], index: 0, kind: input, shape index: {}]
  %s1 = inlined_call_operand.vmem [shape: f32[32,32], index: 1, kind: input, shape index: {}]
  %s2 = inlined_call_operand.vmem [shape: f32[1,32], index: 2, kind: input, shape index: {}]
  %s3 = inlined_call_operand.vmem [shape: f32[32,32], index: 3, kind: input, shape index: {}]
  %s4 = inlined_call_operand.vmem [shape: f32[128,32], index: 4, kind: input, shape index: {}]
  %s5 = inlined_call_operand.vmem [shape: f32[64,96], index: 5, kind: input, shape index: {}]
  %s6 = inlined_call_operand.vmem [shape: f32[32,32], index: 6, kind: input, shape index: {}]
  %s7 = inlined_call_operand.vmem [shape: f32[5,96], index: 7, kind: input, shape index: {}]
  %s8 = inlined_call_operand.vmem [shape: f32[8,128], index: 8, kind: output, shape index: {}]
  %s9 = sld [smem:[#allocation0]]
  $region46: #{attend_decoder_forward_seq.1} parent=0
    _
  %s11 = ssub.s32 1, %s9
  %s12 = scalar_select 0, %s11, %s9
  $region1: #{attend_decoder_forward_seq.1} parent=0
    #allocation2 [shape = 'u8[512]{0}', space=smem, size = 0x200, scoped, tag = 'input window, operand 0, single buffered']
    #allocation3 [shape = 's32[1]{0}', space=sflag, size = 0x4, scoped, tag = 'scoped memory for attend_decoder_forward_seq.1']
    %13 = vsyncpa [#allocation3], 0
    // Predicated region
    $region2: #{attend_decoder_forward_seq.1} parent=1 // pred_check
      _
    $region3: #{attend_decoder_forward_seq.1} parent=1 // pred_check_branch
      %15 = sbr.rel (0) target = $region5
    $region4: #{attend_decoder_forward_seq.1} parent=1 // pred_region
      %s17 = ssub.s32 16, 16
      %18 = vsyncadd [#allocation3], %s17
      %s20 = sshll.u32 %s0, 4
      %s21 = int_to_ptr.vmem [resolvable:$true] %s20
      %23 = dma.vmem_to_smem %s21, 16, [#allocation2], [#allocation3]
    $region5: #{attend_decoder_forward_seq.1} parent=1 // pred_fallthru
      _
    // Predicated region
    $region6: #{attend_decoder_forward_seq.1} parent=1 // pred_check
      _
    $region7: #{attend_decoder_forward_seq.1} parent=1 // pred_check_branch
      %25 = sbr.rel (0) target = $region9
    $region8: #{attend_decoder_forward_seq.1} parent=1 // pred_region
      _
    $region9: #{attend_decoder_forward_seq.1} parent=1 // pred_fallthru
      _
    // Predicated region
    $region10: #{attend_decoder_forward_seq.1} parent=1 // pred_check
      _
    $region11: #{attend_decoder_forward_seq.1} parent=1 // pred_check_branch
      %27 = sbr.rel (0) target = $region13
    $region12: #{attend_decoder_forward_seq.1} parent=1 // pred_region
      _
    $region13: #{attend_decoder_forward_seq.1} parent=1 // pred_fallthru
      _
    // Predicated region
    $region14: #{attend_decoder_forward_seq.1} parent=1 // pred_check
      _
    $region15: #{attend_decoder_forward_seq.1} parent=1 // pred_check_branch
      %29 = sbr.rel (0) target = $region17
    $region16: #{attend_decoder_forward_seq.1} parent=1 // pred_region
      _
    $region17: #{attend_decoder_forward_seq.1} parent=1 // pred_fallthru
      _
    // Predicated region
    $region18: #{attend_decoder_forward_seq.1} parent=1 // pred_check
      _
    $region19: #{attend_decoder_forward_seq.1} parent=1 // pred_check_branch
      %31 = sbr.rel (0) target = $region21
    $region20: #{attend_decoder_forward_seq.1} parent=1 // pred_region
      _
    $region21: #{attend_decoder_forward_seq.1} parent=1 // pred_fallthru
      _
    // Predicated region
    $region22: #{attend_decoder_forward_seq.1} parent=1 // pred_check
      _
    $region23: #{attend_decoder_forward_seq.1} parent=1 // pred_check_branch
      %33 = sbr.rel (0) target = $region25
    $region24: #{attend_decoder_forward_seq.1} parent=1 // pred_region
      _
    $region25: #{attend_decoder_forward_seq.1} parent=1 // pred_fallthru
      _
    // Predicated region
    $region26: #{attend_decoder_forward_seq.1} parent=1 // pred_check
      _
    $region27: #{attend_decoder_forward_seq.1} parent=1 // pred_check_branch
      %35 = sbr.rel (0) target = $region29
    $region28: #{attend_decoder_forward_seq.1} parent=1 // pred_region
      _
    $region29: #{attend_decoder_forward_seq.1} parent=1 // pred_fallthru
      _
    // Predicated region
    $region30: #{attend_decoder_forward_seq.1} parent=1 // pred_check
      _
    $region31: #{attend_decoder_forward_seq.1} parent=1 // pred_check_branch
      %37 = sbr.rel (0) target = $region33
    $region32: #{attend_decoder_forward_seq.1} parent=1 // pred_region
      _
    $region33: #{attend_decoder_forward_seq.1} parent=1 // pred_fallthru
      _
    // Predicated region
    $region34: #{attend_decoder_forward_seq.1} parent=1 // pred_check
      _
    $region35: #{attend_decoder_forward_seq.1} parent=1 // pred_check_branch
      %39 = sbr.rel (0) target = $region37
    $region36: #{attend_decoder_forward_seq.1} parent=1 // pred_region
      %40 = dma.done [#allocation3], 16
    $region37: #{attend_decoder_forward_seq.1} parent=1 // pred_fallthru
      _
    %41 = sfence
    %v42 = vld [vmem:[%s4] sm:$0xff]
    %v43 = vld [vmem:[%s4 + $0x8] sm:$0xff]
    %v44 = vld [vmem:[%s4 + $0x10] sm:$0xff]
    %v45 = vld [vmem:[%s4 + $0x18] sm:$0xff]
    %v46 = vld [vmem:[%s4 + $0x20] sm:$0xff]
    %v47 = vld [vmem:[%s4 + $0x28] sm:$0xff]
    %v48 = vld [vmem:[%s4 + $0x30] sm:$0xff]
    %v49 = vld [vmem:[%s4 + $0x38] sm:$0xff]
    %v50 = vld [vmem:[%s4 + $0x40] sm:$0xff]
    %v51 = vld [vmem:[%s4 + $0x48] sm:$0xff]
    %v52 = vld [vmem:[%s4 + $0x50] sm:$0xff]
    %v53 = vld [vmem:[%s4 + $0x58] sm:$0xff]
    %v54 = vld [vmem:[%s4 + $0x60] sm:$0xff]
    %v55 = vld [vmem:[%s4 + $0x68] sm:$0xff]
    %v56 = vld [vmem:[%s4 + $0x70] sm:$0xff]
    %v57 = vld [vmem:[%s4 + $0x78] sm:$0xff]
    %v58 = vld [vmem:[%s5] sm:$0xff]
    %v59 = vld [vmem:[%s5 + $0x8] sm:$0xff]
    %v60 = vld [vmem:[%s5 + $0x10] sm:$0xff]
    %v61 = vld [vmem:[%s5 + $0x18] sm:$0xff]
    %v62 = vld [vmem:[%s5 + $0x20] sm:$0xff]
    %v63 = vld [vmem:[%s5 + $0x28] sm:$0xff]
    %v64 = vld [vmem:[%s5 + $0x30] sm:$0xff]
    %v65 = vld [vmem:[%s5 + $0x38] sm:$0xff]
    %v66 = vld [vmem:[%s6] sm:$0xff]
    %v67 = vld [vmem:[%s6 + $0x8] sm:$0xff]
    %v68 = vld [vmem:[%s6 + $0x10] sm:$0xff]
    %v69 = vld [vmem:[%s6 + $0x18] sm:$0xff]
    %v70 = vld [vmem:[%s3] sm:$0xff]
    %v71 = vld [vmem:[%s3 + $0x8] sm:$0xff]
    %v72 = vld [vmem:[%s3 + $0x10] sm:$0xff]
    %v73 = vld [vmem:[%s3 + $0x18] sm:$0xff]
    %v74 = vld [vmem:[%s7] sm:$0x1]
    %v75 = vld [vmem:[%s7 + $0x1] sm:$0x1]
    %v76 = vld [vmem:[%s7 + $0x2] sm:$0x1]
    %v77 = vld [vmem:[%s7 + $0x3] sm:$0x1]
    %v78 = vld [vmem:[%s7 + $0x4] sm:$0x1]
    %v79 = vld [vmem:[%s2] sm:$0x1]
    %s80 = sld [smem:[#allocation2]]
    %s81 = scalar_lea.vmem %s1, %s80
    %v82 = vld [vmem:[%s81] sm:$0x1]
    %v84 = vlaneseq
    %v85 = vshrl.u32 %v84, 7
    %v86 = vsub.s32 0, %v85
    %v87 = vrot.slane %v79, %v86
    %88 = vrot.lane.b32.xlu0 %v87, 32
    %v89 = vpop.permute.xlu0 %88
    %vm91 = vcmask 261120
    %v92 = vsel %vm91, %v82, %v89
    %vm93 = vcmask 523264
    %v95 = vsel %vm93, %v92, 0
    %97 = vmatprep.subr.mxu0 0.0
    %98 = vmatpush1.msra.mxu0 0.0
    %99 = vmatprep.subr.mxu0 0.0
    %100 = vmatpush1.msra.mxu0 0.0
    %101 = vmatprep.subr.mxu0 0.0
    %102 = vmatpush1.msra.mxu0 0.0
    %103 = vmatprep.subr.mxu0 0.0
    %104 = vmatpush1.msra.mxu0 0.0
    %105 = vmatprep.subr.mxu0 0.0
    %106 = vmatpush1.msra.mxu0 0.0
    %107 = vmatprep.subr.mxu0 0.0
    %108 = vmatpush1.msra.mxu0 0.0
    %109 = vmatprep.subr.mxu0 0.0
    %110 = vmatpush1.msra.mxu0 0.0
    %111 = vmatprep.subr.mxu0 0.0
    %112 = vmatpush1.msra.mxu0 0.0
    %113 = vmatprep.subr.mxu0 0.0
    %114 = vmatpush1.msra.mxu0 %v49
    %115 = vmatprep.subr.mxu0 0.0
    %116 = vmatpush1.msra.mxu0 %v48
    %117 = vmatprep.subr.mxu0 0.0
    %118 = vmatpush1.msra.mxu0 %v47
    %119 = vmatprep.subr.mxu0 0.0
    %120 = vmatpush1.msra.mxu0 %v46
    %121 = vmatprep.subr.mxu0 0.0
    %122 = vmatpush1.msra.mxu0 %v45
    %123 = vmatprep.subr.mxu0 0.0
    %124 = vmatpush1.msra.mxu0 %v44
    %125 = vmatprep.subr.mxu0 0.0
    %126 = vmatpush1.msra.mxu0 %v43
    %127 = vmatprep.subr.mxu0 0.0
    %128 = vmatpush1.msra.mxu0 %v42
    %129 = vmatprep.subr.mxu0 0.0
    %130 = vmatpush2.msra.mxu0 0.0
    %131 = vmatprep.subr.mxu0 0.0
    %132 = vmatpush2.msra.mxu0 0.0
    %133 = vmatprep.subr.mxu0 0.0
    %134 = vmatpush2.msra.mxu0 0.0
    %135 = vmatprep.subr.mxu0 0.0
    %136 = vmatpush2.msra.mxu0 0.0
    %137 = vmatprep.subr.mxu0 0.0
    %138 = vmatpush2.msra.mxu0 0.0
    %139 = vmatprep.subr.mxu0 0.0
    %140 = vmatpush2.msra.mxu0 0.0
    %141 = vmatprep.subr.mxu0 0.0
    %142 = vmatpush2.msra.mxu0 0.0
    %143 = vmatprep.subr.mxu0 0.0
    %144 = vmatpush2.msra.mxu0 0.0
    %145 = vmatprep.subr.mxu0 0.0
    %146 = vmatpush2.msra.mxu0 0.0
    %147 = vmatprep.subr.mxu0 0.0
    %148 = vmatpush2.msra.mxu0 0.0
    %149 = vmatprep.subr.mxu0 0.0
    %150 = vmatpush2.msra.mxu0 0.0
    %151 = vmatprep.subr.mxu0 0.0
    %152 = vmatpush2.msra.mxu0 0.0
    %153 = vmatprep.subr.mxu0 0.0
    %154 = vmatpush2.msra.mxu0 0.0
    %155 = vmatprep.subr.mxu0 0.0
    %156 = vmatpush2.msra.mxu0 0.0
    %157 = vmatprep.subr.mxu0 0.0
    %158 = vmatpush2.msra.mxu0 0.0
    %159 = vmatprep.subr.mxu0 0.0
    %160 = vmatpush2.msra.mxu0 0.0
    %161 = vmatprep.mubr.f32.mxu0 0.0
    %162 = vmatmul.mubr.f32.gmra.mxu0 %v95
    %v163 = vpop.f32.mrf.mxu0
    %v164 = vadd.f32 %v74, %v163
    %v165 = vpop.f32.mrf.mxu0
    %166 = vdwg.mxu0
    %vm167 = vcmask 253952
    %v168 = vsel %vm167, %v164, -inf
    %169 = vmax.xlane.f32.xlu0 %v168
    %v170 = vpop.xlane.xlu0 %169
    %v171 = vsub.f32 %v164, %v170
    %v172 = vmul.f32 %v171, 1.442695
    %v173 = vpow.pop %v172
    %v174 = vsel %vm167, %v173, 0.0
    %175 = vadd.xlane.f32.xlu0 %v174
    %v176 = vpop.xlane.xlu0 %175
    %v177 = vlog2.pop %v176
    %v178 = vmul.f32 %v177, 0.6931472
    %v179 = vadd.f32 %v178, %v170
    %v180 = vsub.f32 %v164, %v179
    %v182 = vsel %vm91, %v180, 0
    %184 = vmatprep.subr.mxu0 0.0
    %185 = vmatpush1.msra.mxu0 0.0
    %186 = vmatprep.subr.mxu0 0.0
    %187 = vmatpush1.msra.mxu0 0.0
    %188 = vmatprep.subr.mxu0 0.0
    %189 = vmatpush1.msra.mxu0 0.0
    %190 = vmatprep.subr.mxu0 0.0
    %191 = vmatpush1.msra.mxu0 0.0
    %192 = vmatprep.subr.mxu0 0.0
    %193 = vmatpush1.msra.mxu0 0.0
    %194 = vmatprep.subr.mxu0 0.0
    %195 = vmatpush1.msra.mxu0 0.0
    %196 = vmatprep.subr.mxu0 0.0
    %197 = vmatpush1.msra.mxu0 0.0
    %198 = vmatprep.subr.mxu0 0.0
    %199 = vmatpush1.msra.mxu0 0.0
    %200 = vmatprep.subr.mxu0 0.0
    %201 = vmatpush1.msra.mxu0 0.0
    %202 = vmatprep.subr.mxu0 0.0
    %203 = vmatpush1.msra.mxu0 0.0
    %204 = vmatprep.subr.mxu0 0.0
    %205 = vmatpush1.msra.mxu0 0.0
    %206 = vmatprep.subr.mxu0 0.0
    %207 = vmatpush1.msra.mxu0 0.0
    %208 = vmatprep.subr.mxu0 0.0
    %209 = vmatpush1.msra.mxu0 %v73
    %210 = vmatprep.subr.mxu0 0.0
    %211 = vmatpush1.msra.mxu0 %v72
    %212 = vmatprep.subr.mxu0 0.0
    %213 = vmatpush1.msra.mxu0 %v71
    %214 = vmatprep.subr.mxu0 0.0
    %215 = vmatpush1.msra.mxu0 %v70
    %216 = vmatprep.subr.mxu0 0.0
    %217 = vmatpush2.msra.mxu0 0.0
    %218 = vmatprep.subr.mxu0 0.0
    %219 = vmatpush2.msra.mxu0 0.0
    %220 = vmatprep.subr.mxu0 0.0
    %221 = vmatpush2.msra.mxu0 0.0
    %222 = vmatprep.subr.mxu0 0.0
    %223 = vmatpush2.msra.mxu0 0.0
    %224 = vmatprep.subr.mxu0 0.0
    %225 = vmatpush2.msra.mxu0 0.0
    %226 = vmatprep.subr.mxu0 0.0
    %227 = vmatpush2.msra.mxu0 0.0
    %228 = vmatprep.subr.mxu0 0.0
    %229 = vmatpush2.msra.mxu0 0.0
    %230 = vmatprep.subr.mxu0 0.0
    %231 = vmatpush2.msra.mxu0 0.0
    %232 = vmatprep.subr.mxu0 0.0
    %233 = vmatpush2.msra.mxu0 0.0
    %234 = vmatprep.subr.mxu0 0.0
    %235 = vmatpush2.msra.mxu0 0.0
    %236 = vmatprep.subr.mxu0 0.0
    %237 = vmatpush2.msra.mxu0 0.0
    %238 = vmatprep.subr.mxu0 0.0
    %239 = vmatpush2.msra.mxu0 0.0
    %240 = vmatprep.subr.mxu0 0.0
    %241 = vmatpush2.msra.mxu0 0.0
    %242 = vmatprep.subr.mxu0 0.0
    %243 = vmatpush2.msra.mxu0 0.0
    %244 = vmatprep.subr.mxu0 0.0
    %245 = vmatpush2.msra.mxu0 0.0
    %246 = vmatprep.subr.mxu0 0.0
    %247 = vmatpush2.msra.mxu0 0.0
    %248 = vmatprep.mubr.f32.mxu0 0.0
    %249 = vmatmul.mubr.f32.gmra.mxu0 %v182
    %v250 = vpop.f32.mrf.mxu0
    %v251 = vadd.f32 0.0, %v250
    %v252 = vpop.f32.mrf.mxu0
    %253 = vdwg.mxu0
    %255 = vrot.lane.b32.xlu0 %v251, 32
    %v256 = vpop.permute.xlu0 %255
    %v258 = vsel %vm91, %v82, %v256
    %v260 = vsel %vm93, %v258, 0
    %262 = vmatprep.subr.mxu0 0.0
    %263 = vmatpush1.msra.mxu0 0.0
    %264 = vmatprep.subr.mxu0 0.0
    %265 = vmatpush1.msra.mxu0 0.0
    %266 = vmatprep.subr.mxu0 0.0
    %267 = vmatpush1.msra.mxu0 0.0
    %268 = vmatprep.subr.mxu0 0.0
    %269 = vmatpush1.msra.mxu0 0.0
    %270 = vmatprep.subr.mxu0 0.0
    %271 = vmatpush1.msra.mxu0 0.0
    %272 = vmatprep.subr.mxu0 0.0
    %273 = vmatpush1.msra.mxu0 0.0
    %274 = vmatprep.subr.mxu0 0.0
    %275 = vmatpush1.msra.mxu0 0.0
    %276 = vmatprep.subr.mxu0 0.0
    %277 = vmatpush1.msra.mxu0 0.0
    %278 = vmatprep.subr.mxu0 0.0
    %279 = vmatpush1.msra.mxu0 %v57
    %280 = vmatprep.subr.mxu0 0.0
    %281 = vmatpush1.msra.mxu0 %v56
    %282 = vmatprep.subr.mxu0 0.0
    %283 = vmatpush1.msra.mxu0 %v55
    %284 = vmatprep.subr.mxu0 0.0
    %285 = vmatpush1.msra.mxu0 %v54
    %286 = vmatprep.subr.mxu0 0.0
    %287 = vmatpush1.msra.mxu0 %v53
    %288 = vmatprep.subr.mxu0 0.0
    %289 = vmatpush1.msra.mxu0 %v52
    %290 = vmatprep.subr.mxu0 0.0
    %291 = vmatpush1.msra.mxu0 %v51
    %292 = vmatprep.subr.mxu0 0.0
    %293 = vmatpush1.msra.mxu0 %v50
    %294 = vmatprep.subr.mxu0 0.0
    %295 = vmatpush2.msra.mxu0 0.0
    %296 = vmatprep.subr.mxu0 0.0
    %297 = vmatpush2.msra.mxu0 0.0
    %298 = vmatprep.subr.mxu0 0.0
    %299 = vmatpush2.msra.mxu0 0.0
    %300 = vmatprep.subr.mxu0 0.0
    %301 = vmatpush2.msra.mxu0 0.0
    %302 = vmatprep.subr.mxu0 0.0
    %303 = vmatpush2.msra.mxu0 0.0
    %304 = vmatprep.subr.mxu0 0.0
    %305 = vmatpush2.msra.mxu0 0.0
    %306 = vmatprep.subr.mxu0 0.0
    %307 = vmatpush2.msra.mxu0 0.0
    %308 = vmatprep.subr.mxu0 0.0
    %309 = vmatpush2.msra.mxu0 0.0
    %310 = vmatprep.subr.mxu0 0.0
    %311 = vmatpush2.msra.mxu0 0.0
    %312 = vmatprep.subr.mxu0 0.0
    %313 = vmatpush2.msra.mxu0 0.0
    %314 = vmatprep.subr.mxu0 0.0
    %315 = vmatpush2.msra.mxu0 0.0
    %316 = vmatprep.subr.mxu0 0.0
    %317 = vmatpush2.msra.mxu0 0.0
    %318 = vmatprep.subr.mxu0 0.0
    %319 = vmatpush2.msra.mxu0 0.0
    %320 = vmatprep.subr.mxu0 0.0
    %321 = vmatpush2.msra.mxu0 0.0
    %322 = vmatprep.subr.mxu0 0.0
    %323 = vmatpush2.msra.mxu0 0.0
    %324 = vmatprep.subr.mxu0 0.0
    %325 = vmatpush2.msra.mxu0 0.0
    %326 = vmatprep.mubr.f32.mxu0 0.0
    %327 = vmatmul.mubr.f32.gmra.mxu0 %v260
    %v328 = vpop.f32.mrf.mxu0
    %v329 = vadd.f32 %v75, %v328
    %v330 = vpop.f32.mrf.mxu0
    %331 = vdwg.mxu0
    %v332 = vmax.f32 %v329, 0.0
    %v334 = vsel %vm91, %v332, 0
    %336 = vmatprep.subr.mxu0 0.0
    %337 = vmatpush1.msra.mxu0 0.0
    %338 = vmatprep.subr.mxu0 0.0
    %339 = vmatpush1.msra.mxu0 0.0
    %340 = vmatprep.subr.mxu0 0.0
    %341 = vmatpush1.msra.mxu0 0.0
    %342 = vmatprep.subr.mxu0 0.0
    %343 = vmatpush1.msra.mxu0 0.0
    %344 = vmatprep.subr.mxu0 0.0
    %345 = vmatpush1.msra.mxu0 0.0
    %346 = vmatprep.subr.mxu0 0.0
    %347 = vmatpush1.msra.mxu0 0.0
    %348 = vmatprep.subr.mxu0 0.0
    %349 = vmatpush1.msra.mxu0 0.0
    %350 = vmatprep.subr.mxu0 0.0
    %351 = vmatpush1.msra.mxu0 0.0
    %352 = vmatprep.subr.mxu0 0.0
    %353 = vmatpush1.msra.mxu0 0.0
    %354 = vmatprep.subr.mxu0 0.0
    %355 = vmatpush1.msra.mxu0 0.0
    %356 = vmatprep.subr.mxu0 0.0
    %357 = vmatpush1.msra.mxu0 0.0
    %358 = vmatprep.subr.mxu0 0.0
    %359 = vmatpush1.msra.mxu0 0.0
    %360 = vmatprep.subr.mxu0 0.0
    %361 = vmatpush1.msra.mxu0 %v61
    %362 = vmatprep.subr.mxu0 0.0
    %363 = vmatpush1.msra.mxu0 %v60
    %364 = vmatprep.subr.mxu0 0.0
    %365 = vmatpush1.msra.mxu0 %v59
    %366 = vmatprep.subr.mxu0 0.0
    %367 = vmatpush1.msra.mxu0 %v58
    %368 = vmatprep.subr.mxu0 0.0
    %369 = vmatpush2.msra.mxu0 0.0
    %370 = vmatprep.subr.mxu0 0.0
    %371 = vmatpush2.msra.mxu0 0.0
    %372 = vmatprep.subr.mxu0 0.0
    %373 = vmatpush2.msra.mxu0 0.0
    %374 = vmatprep.subr.mxu0 0.0
    %375 = vmatpush2.msra.mxu0 0.0
    %376 = vmatprep.subr.mxu0 0.0
    %377 = vmatpush2.msra.mxu0 0.0
    %378 = vmatprep.subr.mxu0 0.0
    %379 = vmatpush2.msra.mxu0 0.0
    %380 = vmatprep.subr.mxu0 0.0
    %381 = vmatpush2.msra.mxu0 0.0
    %382 = vmatprep.subr.mxu0 0.0
    %383 = vmatpush2.msra.mxu0 0.0
    %384 = vmatprep.subr.mxu0 0.0
    %385 = vmatpush2.msra.mxu0 0.0
    %386 = vmatprep.subr.mxu0 0.0
    %387 = vmatpush2.msra.mxu0 0.0
    %388 = vmatprep.subr.mxu0 0.0
    %389 = vmatpush2.msra.mxu0 0.0
    %390 = vmatprep.subr.mxu0 0.0
    %391 = vmatpush2.msra.mxu0 0.0
    %392 = vmatprep.subr.mxu0 0.0
    %393 = vmatpush2.msra.mxu0 0.0
    %394 = vmatprep.subr.mxu0 0.0
    %395 = vmatpush2.msra.mxu0 0.0
    %396 = vmatprep.subr.mxu0 0.0
    %397 = vmatpush2.msra.mxu0 0.0
    %398 = vmatprep.subr.mxu0 0.0
    %399 = vmatpush2.msra.mxu0 0.0
    %400 = vmatprep.mubr.f32.mxu0 0.0
    %401 = vmatmul.mubr.f32.gmra.mxu0 %v334
    %v402 = vpop.f32.mrf.mxu0
    %v403 = vadd.f32 %v76, %v402
    %v404 = vpop.f32.mrf.mxu0
    %405 = vdwg.mxu0
    %v406 = vsel %vm91, %v79, 0
    %408 = vmatprep.subr.mxu0 0.0
    %409 = vmatpush1.msra.mxu0 0.0
    %410 = vmatprep.subr.mxu0 0.0
    %411 = vmatpush1.msra.mxu0 0.0
    %412 = vmatprep.subr.mxu0 0.0
    %413 = vmatpush1.msra.mxu0 0.0
    %414 = vmatprep.subr.mxu0 0.0
    %415 = vmatpush1.msra.mxu0 0.0
    %416 = vmatprep.subr.mxu0 0.0
    %417 = vmatpush1.msra.mxu0 0.0
    %418 = vmatprep.subr.mxu0 0.0
    %419 = vmatpush1.msra.mxu0 0.0
    %420 = vmatprep.subr.mxu0 0.0
    %421 = vmatpush1.msra.mxu0 0.0
    %422 = vmatprep.subr.mxu0 0.0
    %423 = vmatpush1.msra.mxu0 0.0
    %424 = vmatprep.subr.mxu0 0.0
    %425 = vmatpush1.msra.mxu0 0.0
    %426 = vmatprep.subr.mxu0 0.0
    %427 = vmatpush1.msra.mxu0 0.0
    %428 = vmatprep.subr.mxu0 0.0
    %429 = vmatpush1.msra.mxu0 0.0
    %430 = vmatprep.subr.mxu0 0.0
    %431 = vmatpush1.msra.mxu0 0.0
    %432 = vmatprep.subr.mxu0 0.0
    %433 = vmatpush1.msra.mxu0 %v65
    %434 = vmatprep.subr.mxu0 0.0
    %435 = vmatpush1.msra.mxu0 %v64
    %436 = vmatprep.subr.mxu0 0.0
    %437 = vmatpush1.msra.mxu0 %v63
    %438 = vmatprep.subr.mxu0 0.0
    %439 = vmatpush1.msra.mxu0 %v62
    %440 = vmatprep.subr.mxu0 0.0
    %441 = vmatpush2.msra.mxu0 0.0
    %442 = vmatprep.subr.mxu0 0.0
    %443 = vmatpush2.msra.mxu0 0.0
    %444 = vmatprep.subr.mxu0 0.0
    %445 = vmatpush2.msra.mxu0 0.0
    %446 = vmatprep.subr.mxu0 0.0
    %447 = vmatpush2.msra.mxu0 0.0
    %448 = vmatprep.subr.mxu0 0.0
    %449 = vmatpush2.msra.mxu0 0.0
    %450 = vmatprep.subr.mxu0 0.0
    %451 = vmatpush2.msra.mxu0 0.0
    %452 = vmatprep.subr.mxu0 0.0
    %453 = vmatpush2.msra.mxu0 0.0
    %454 = vmatprep.subr.mxu0 0.0
    %455 = vmatpush2.msra.mxu0 0.0
    %456 = vmatprep.subr.mxu0 0.0
    %457 = vmatpush2.msra.mxu0 0.0
    %458 = vmatprep.subr.mxu0 0.0
    %459 = vmatpush2.msra.mxu0 0.0
    %460 = vmatprep.subr.mxu0 0.0
    %461 = vmatpush2.msra.mxu0 0.0
    %462 = vmatprep.subr.mxu0 0.0
    %463 = vmatpush2.msra.mxu0 0.0
    %464 = vmatprep.subr.mxu0 0.0
    %465 = vmatpush2.msra.mxu0 0.0
    %466 = vmatprep.subr.mxu0 0.0
    %467 = vmatpush2.msra.mxu0 0.0
    %468 = vmatprep.subr.mxu0 0.0
    %469 = vmatpush2.msra.mxu0 0.0
    %470 = vmatprep.subr.mxu0 0.0
    %471 = vmatpush2.msra.mxu0 0.0
    %472 = vmatprep.mubr.f32.mxu0 0.0
    %473 = vmatmul.mubr.f32.gmra.mxu0 %v406
    %v474 = vpop.f32.mrf.mxu0
    %v475 = vadd.f32 %v77, %v474
    %v476 = vpop.f32.mrf.mxu0
    %477 = vdwg.mxu0
    %v478 = vadd.f32 %v403, %v475
    %v479 = vxor.u32 %v478, 2147483648
    %v480 = vmul.f32 %v479, 1.442695
    %v481 = vpow.pop %v480
    %v482 = vadd.f32 %v481, 1.0
    %v483 = vrcp.pop %v482
    %v484 = vmul.f32 1.0, %v483
    %486 = vrot.lane.b32.xlu0 %v475, 64
    %v487 = vpop.permute.xlu0 %486
    %v489 = vmul.f32 %v484, %v487
    %491 = vrot.lane.b32.xlu0 %v489, 64
    %v492 = vpop.permute.xlu0 %491
    %v494 = vadd.f32 %v403, %v492
    %v495 = vtanh.pop %v494
    %v496 = vsub.f32 1.0, %v484
    %498 = vrot.lane.b32.xlu0 %v495, 96
    %v499 = vpop.permute.xlu0 %498
    %v501 = vmul.f32 %v496, %v499
    %v502 = vmul.f32 %v484, %v89
    %v503 = vadd.f32 %v501, %v502
    %505 = vrot.lane.b32.xlu0 %v503, 96
    %v506 = vpop.permute.xlu0 %505
    %v507 = vsel %vm91, %v506, 0
    %509 = vmatprep.subr.mxu0 0.0
    %510 = vmatpush1.msra.mxu0 0.0
    %511 = vmatprep.subr.mxu0 0.0
    %512 = vmatpush1.msra.mxu0 0.0
    %513 = vmatprep.subr.mxu0 0.0
    %514 = vmatpush1.msra.mxu0 0.0
    %515 = vmatprep.subr.mxu0 0.0
    %516 = vmatpush1.msra.mxu0 0.0
    %517 = vmatprep.subr.mxu0 0.0
    %518 = vmatpush1.msra.mxu0 0.0
    %519 = vmatprep.subr.mxu0 0.0
    %520 = vmatpush1.msra.mxu0 0.0
    %521 = vmatprep.subr.mxu0 0.0
    %522 = vmatpush1.msra.mxu0 0.0
    %523 = vmatprep.subr.mxu0 0.0
    %524 = vmatpush1.msra.mxu0 0.0
    %525 = vmatprep.subr.mxu0 0.0
    %526 = vmatpush1.msra.mxu0 0.0
    %527 = vmatprep.subr.mxu0 0.0
    %528 = vmatpush1.msra.mxu0 0.0
    %529 = vmatprep.subr.mxu0 0.0
    %530 = vmatpush1.msra.mxu0 0.0
    %531 = vmatprep.subr.mxu0 0.0
    %532 = vmatpush1.msra.mxu0 0.0
    %533 = vmatprep.subr.mxu0 0.0
    %534 = vmatpush1.msra.mxu0 %v69
    %535 = vmatprep.subr.mxu0 0.0
    %536 = vmatpush1.msra.mxu0 %v68
    %537 = vmatprep.subr.mxu0 0.0
    %538 = vmatpush1.msra.mxu0 %v67
    %539 = vmatprep.subr.mxu0 0.0
    %540 = vmatpush1.msra.mxu0 %v66
    %541 = vmatprep.subr.mxu0 0.0
    %542 = vmatpush2.msra.mxu0 0.0
    %543 = vmatprep.subr.mxu0 0.0
    %544 = vmatpush2.msra.mxu0 0.0
    %545 = vmatprep.subr.mxu0 0.0
    %546 = vmatpush2.msra.mxu0 0.0
    %547 = vmatprep.subr.mxu0 0.0
    %548 = vmatpush2.msra.mxu0 0.0
    %549 = vmatprep.subr.mxu0 0.0
    %550 = vmatpush2.msra.mxu0 0.0
    %551 = vmatprep.subr.mxu0 0.0
    %552 = vmatpush2.msra.mxu0 0.0
    %553 = vmatprep.subr.mxu0 0.0
    %554 = vmatpush2.msra.mxu0 0.0
    %555 = vmatprep.subr.mxu0 0.0
    %556 = vmatpush2.msra.mxu0 0.0
    %557 = vmatprep.subr.mxu0 0.0
    %558 = vmatpush2.msra.mxu0 0.0
    %559 = vmatprep.subr.mxu0 0.0
    %560 = vmatpush2.msra.mxu0 0.0
    %561 = vmatprep.subr.mxu0 0.0
    %562 = vmatpush2.msra.mxu0 0.0
    %563 = vmatprep.subr.mxu0 0.0
    %564 = vmatpush2.msra.mxu0 0.0
    %565 = vmatprep.subr.mxu0 0.0
    %566 = vmatpush2.msra.mxu0 0.0
    %567 = vmatprep.subr.mxu0 0.0
    %568 = vmatpush2.msra.mxu0 0.0
    %569 = vmatprep.subr.mxu0 0.0
    %570 = vmatpush2.msra.mxu0 0.0
    %571 = vmatprep.subr.mxu0 0.0
    %572 = vmatpush2.msra.mxu0 0.0
    %573 = vmatprep.mubr.f32.mxu0 0.0
    %574 = vmatmul.mubr.f32.gmra.mxu0 %v507
    %v575 = vpop.f32.mrf.mxu0
    %v576 = vadd.f32 %v78, %v575
    %v577 = vpop.f32.mrf.mxu0
    %578 = vdwg.mxu0
    %v579 = vsel %vm167, %v576, -inf
    %580 = vmax.xlane.f32.xlu0 %v579
    %v581 = vpop.xlane.xlu0 %580
    %v582 = vsub.f32 %v576, %v581
    %v583 = vmul.f32 %v582, 1.442695
    %v584 = vpow.pop %v583
    %v585 = vsel %vm167, %v584, 0.0
    %586 = vadd.xlane.f32.xlu0 %v585
    %v587 = vpop.xlane.xlu0 %586
    %v588 = vlog2.pop %v587
    %v589 = vmul.f32 %v588, 0.6931472
    %v590 = vadd.f32 %v589, %v581
    %v591 = vsub.f32 %v576, %v590
    %592 = vrot.lane.b32.xlu0 %v180, 64
    %v593 = vpop.permute.xlu0 %592
    %v595 = vsel %vm91, %v591, %v503
    %v596 = vsel %vm93, %v595, %v593
    %vm597 = vcmask 785408
    %v598 = vsel %vm597, %v596, 0.0
    %s599 = sld [smem:[#allocation2 + $0x1]]
    %s600 = scalar_lea.vmem %s1, %s599
    %v601 = vld [vmem:[%s600] sm:$0x1]
    %v602 = vsel %vm91, %v601, %v503
    %v604 = vsel %vm93, %v602, 0
    %606 = vmatprep.subr.mxu0 0.0
    %607 = vmatpush1.msra.mxu0 0.0
    %608 = vmatprep.subr.mxu0 0.0
    %609 = vmatpush1.msra.mxu0 0.0
    %610 = vmatprep.subr.mxu0 0.0
    %611 = vmatpush1.msra.mxu0 0.0
    %612 = vmatprep.subr.mxu0 0.0
    %613 = vmatpush1.msra.mxu0 0.0
    %614 = vmatprep.subr.mxu0 0.0
    %615 = vmatpush1.msra.mxu0 0.0
    %616 = vmatprep.subr.mxu0 0.0
    %617 = vmatpush1.msra.mxu0 0.0
    %618 = vmatprep.subr.mxu0 0.0
    %619 = vmatpush1.msra.mxu0 0.0
    %620 = vmatprep.subr.mxu0 0.0
    %621 = vmatpush1.msra.mxu0 0.0
    %622 = vmatprep.subr.mxu0 0.0
    %623 = vmatpush1.msra.mxu0 %v49
    %624 = vmatprep.subr.mxu0 0.0
    %625 = vmatpush1.msra.mxu0 %v48
    %626 = vmatprep.subr.mxu0 0.0
    %627 = vmatpush1.msra.mxu0 %v47
    %628 = vmatprep.subr.mxu0 0.0
    %629 = vmatpush1.msra.mxu0 %v46
    %630 = vmatprep.subr.mxu0 0.0
    %631 = vmatpush1.msra.mxu0 %v45
    %632 = vmatprep.subr.mxu0 0.0
    %633 = vmatpush1.msra.mxu0 %v44
    %634 = vmatprep.subr.mxu0 0.0
    %635 = vmatpush1.msra.mxu0 %v43
    %636 = vmatprep.subr.mxu0 0.0
    %637 = vmatpush1.msra.mxu0 %v42
    %638 = vmatprep.subr.mxu0 0.0
    %639 = vmatpush2.msra.mxu0 0.0
    %640 = vmatprep.subr.mxu0 0.0
    %641 = vmatpush2.msra.mxu0 0.0
    %642 = vmatprep.subr.mxu0 0.0
    %643 = vmatpush2.msra.mxu0 0.0
    %644 = vmatprep.subr.mxu0 0.0
    %645 = vmatpush2.msra.mxu0 0.0
    %646 = vmatprep.subr.mxu0 0.0
    %647 = vmatpush2.msra.mxu0 0.0
    %648 = vmatprep.subr.mxu0 0.0
    %649 = vmatpush2.msra.mxu0 0.0
    %650 = vmatprep.subr.mxu0 0.0
    %651 = vmatpush2.msra.mxu0 0.0
    %652 = vmatprep.subr.mxu0 0.0
    %653 = vmatpush2.msra.mxu0 0.0
    %654 = vmatprep.subr.mxu0 0.0
    %655 = vmatpush2.msra.mxu0 0.0
    %656 = vmatprep.subr.mxu0 0.0
    %657 = vmatpush2.msra.mxu0 0.0
    %658 = vmatprep.subr.mxu0 0.0
    %659 = vmatpush2.msra.mxu0 0.0
    %660 = vmatprep.subr.mxu0 0.0
    %661 = vmatpush2.msra.mxu0 0.0
    %662 = vmatprep.subr.mxu0 0.0
    %663 = vmatpush2.msra.mxu0 0.0
    %664 = vmatprep.subr.mxu0 0.0
    %665 = vmatpush2.msra.mxu0 0.0
    %666 = vmatprep.subr.mxu0 0.0
    %667 = vmatpush2.msra.mxu0 0.0
    %668 = vmatprep.subr.mxu0 0.0
    %669 = vmatpush2.msra.mxu0 0.0
    %670 = vmatprep.mubr.f32.mxu0 0.0
    %671 = vmatmul.mubr.f32.gmra.mxu0 %v604
    %v672 = vpop.f32.mrf.mxu0
    %v673 = vadd.f32 %v74, %v672
    %v674 = vpop.f32.mrf.mxu0
    %675 = vdwg.mxu0
    %v676 = vsel %vm167, %v673, -inf
    %677 = vmax.xlane.f32.xlu0 %v676
    %v678 = vpop.xlane.xlu0 %677
    %v679 = vsub.f32 %v673, %v678
    %v680 = vmul.f32 %v679, 1.442695
    %v681 = vpow.pop %v680
    %v682 = vsel %vm167, %v681, 0.0
    %683 = vadd.xlane.f32.xlu0 %v682
    %v684 = vpop.xlane.xlu0 %683
    %v685 = vlog2.pop %v684
    %v686 = vmul.f32 %v685, 0.6931472
    %v687 = vadd.f32 %v686, %v678
    %v688 = vsub.f32 %v673, %v687
    %v690 = vsel %vm91, %v688, 0
    %692 = vmatprep.subr.mxu0 0.0
    %693 = vmatpush1.msra.mxu0 0.0
    %694 = vmatprep.subr.mxu0 0.0
    %695 = vmatpush1.msra.mxu0 0.0
    %696 = vmatprep.subr.mxu0 0.0
    %697 = vmatpush1.msra.mxu0 0.0
    %698 = vmatprep.subr.mxu0 0.0
    %699 = vmatpush1.msra.mxu0 0.0
    %700 = vmatprep.subr.mxu0 0.0
    %701 = vmatpush1.msra.mxu0 0.0
    %702 = vmatprep.subr.mxu0 0.0
    %703 = vmatpush1.msra.mxu0 0.0
    %704 = vmatprep.subr.mxu0 0.0
    %705 = vmatpush1.msra.mxu0 0.0
    %706 = vmatprep.subr.mxu0 0.0
    %707 = vmatpush1.msra.mxu0 0.0
    %708 = vmatprep.subr.mxu0 0.0
    %709 = vmatpush1.msra.mxu0 0.0
    %710 = vmatprep.subr.mxu0 0.0
    %711 = vmatpush1.msra.mxu0 0.0
    %712 = vmatprep.subr.mxu0 0.0
    %713 = vmatpush1.msra.mxu0 0.0
    %714 = vmatprep.subr.mxu0 0.0
    %715 = vmatpush1.msra.mxu0 0.0
    %716 = vmatprep.subr.mxu0 0.0
    %717 = vmatpush1.msra.mxu0 %v73
    %718 = vmatprep.subr.mxu0 0.0
    %719 = vmatpush1.msra.mxu0 %v72
    %720 = vmatprep.subr.mxu0 0.0
    %721 = vmatpush1.msra.mxu0 %v71
    %722 = vmatprep.subr.mxu0 0.0
    %723 = vmatpush1.msra.mxu0 %v70
    %724 = vmatprep.subr.mxu0 0.0
    %725 = vmatpush2.msra.mxu0 0.0
    %726 = vmatprep.subr.mxu0 0.0
    %727 = vmatpush2.msra.mxu0 0.0
    %728 = vmatprep.subr.mxu0 0.0
    %729 = vmatpush2.msra.mxu0 0.0
    %730 = vmatprep.subr.mxu0 0.0
    %731 = vmatpush2.msra.mxu0 0.0
    %732 = vmatprep.subr.mxu0 0.0
    %733 = vmatpush2.msra.mxu0 0.0
    %734 = vmatprep.subr.mxu0 0.0
    %735 = vmatpush2.msra.mxu0 0.0
    %736 = vmatprep.subr.mxu0 0.0
    %737 = vmatpush2.msra.mxu0 0.0
    %738 = vmatprep.subr.mxu0 0.0
    %739 = vmatpush2.msra.mxu0 0.0
    %740 = vmatprep.subr.mxu0 0.0
    %741 = vmatpush2.msra.mxu0 0.0
    %742 = vmatprep.subr.mxu0 0.0
    %743 = vmatpush2.msra.mxu0 0.0
    %744 = vmatprep.subr.mxu0 0.0
    %745 = vmatpush2.msra.mxu0 0.0
    %746 = vmatprep.subr.mxu0 0.0
    %747 = vmatpush2.msra.mxu0 0.0
    %748 = vmatprep.subr.mxu0 0.0
    %749 = vmatpush2.msra.mxu0 0.0
    %750 = vmatprep.subr.mxu0 0.0
    %751 = vmatpush2.msra.mxu0 0.0
    %752 = vmatprep.subr.mxu0 0.0
    %753 = vmatpush2.msra.mxu0 0.0
    %754 = vmatprep.subr.mxu0 0.0
    %755 = vmatpush2.msra.mxu0 0.0
    %756 = vmatprep.mubr.f32.mxu0 0.0
    %757 = vmatmul.mubr.f32.gmra.mxu0 %v690
    %v758 = vpop.f32.mrf.mxu0
    %v759 = vadd.f32 0.0, %v758
    %v760 = vpop.f32.mrf.mxu0
    %761 = vdwg.mxu0
    %763 = vrot.lane.b32.xlu0 %v759, 32
    %v764 = vpop.permute.xlu0 %763
    %v766 = vsel %vm91, %v601, %v764
    %v768 = vsel %vm93, %v766, 0
    %770 = vmatprep.subr.mxu0 0.0
    %771 = vmatpush1.msra.mxu0 0.0
    %772 = vmatprep.subr.mxu0 0.0
    %773 = vmatpush1.msra.mxu0 0.0
    %774 = vmatprep.subr.mxu0 0.0
    %775 = vmatpush1.msra.mxu0 0.0
    %776 = vmatprep.subr.mxu0 0.0
    %777 = vmatpush1.msra.mxu0 0.0
    %778 = vmatprep.subr.mxu0 0.0
    %779 = vmatpush1.msra.mxu0 0.0
    %780 = vmatprep.subr.mxu0 0.0
    %781 = vmatpush1.msra.mxu0 0.0
    %782 = vmatprep.subr.mxu0 0.0
    %783 = vmatpush1.msra.mxu0 0.0
    %784 = vmatprep.subr.mxu0 0.0
    %785 = vmatpush1.msra.mxu0 0.0
    %786 = vmatprep.subr.mxu0 0.0
    %787 = vmatpush1.msra.mxu0 %v57
    %788 = vmatprep.subr.mxu0 0.0
    %789 = vmatpush1.msra.mxu0 %v56
    %790 = vmatprep.subr.mxu0 0.0
    %791 = vmatpush1.msra.mxu0 %v55
    %792 = vmatprep.subr.mxu0 0.0
    %793 = vmatpush1.msra.mxu0 %v54
    %794 = vmatprep.subr.mxu0 0.0
    %795 = vmatpush1.msra.mxu0 %v53
    %796 = vmatprep.subr.mxu0 0.0
    %797 = vmatpush1.msra.mxu0 %v52
    %798 = vmatprep.subr.mxu0 0.0
    %799 = vmatpush1.msra.mxu0 %v51
    %800 = vmatprep.subr.mxu0 0.0
    %801 = vmatpush1.msra.mxu0 %v50
    %802 = vmatprep.subr.mxu0 0.0
    %803 = vmatpush2.msra.mxu0 0.0
    %804 = vmatprep.subr.mxu0 0.0
    %805 = vmatpush2.msra.mxu0 0.0
    %806 = vmatprep.subr.mxu0 0.0
    %807 = vmatpush2.msra.mxu0 0.0
    %808 = vmatprep.subr.mxu0 0.0
    %809 = vmatpush2.msra.mxu0 0.0
    %810 = vmatprep.subr.mxu0 0.0
    %811 = vmatpush2.msra.mxu0 0.0
    %812 = vmatprep.subr.mxu0 0.0
    %813 = vmatpush2.msra.mxu0 0.0
    %814 = vmatprep.subr.mxu0 0.0
    %815 = vmatpush2.msra.mxu0 0.0
    %816 = vmatprep.subr.mxu0 0.0
    %817 = vmatpush2.msra.mxu0 0.0
    %818 = vmatprep.subr.mxu0 0.0
    %819 = vmatpush2.msra.mxu0 0.0
    %820 = vmatprep.subr.mxu0 0.0
    %821 = vmatpush2.msra.mxu0 0.0
    %822 = vmatprep.subr.mxu0 0.0
    %823 = vmatpush2.msra.mxu0 0.0
    %824 = vmatprep.subr.mxu0 0.0
    %825 = vmatpush2.msra.mxu0 0.0
    %826 = vmatprep.subr.mxu0 0.0
    %827 = vmatpush2.msra.mxu0 0.0
    %828 = vmatprep.subr.mxu0 0.0
    %829 = vmatpush2.msra.mxu0 0.0
    %830 = vmatprep.subr.mxu0 0.0
    %831 = vmatpush2.msra.mxu0 0.0
    %832 = vmatprep.subr.mxu0 0.0
    %833 = vmatpush2.msra.mxu0 0.0
    %834 = vmatprep.mubr.f32.mxu0 0.0
    %835 = vmatmul.mubr.f32.gmra.mxu0 %v768
    %v836 = vpop.f32.mrf.mxu0
    %v837 = vadd.f32 %v75, %v836
    %v838 = vpop.f32.mrf.mxu0
    %839 = vdwg.mxu0
    %v840 = vmax.f32 %v837, 0.0
    %v842 = vsel %vm91, %v840, 0
    %844 = vmatprep.subr.mxu0 0.0
    %845 = vmatpush1.msra.mxu0 0.0
    %846 = vmatprep.subr.mxu0 0.0
    %847 = vmatpush1.msra.mxu0 0.0
    %848 = vmatprep.subr.mxu0 0.0
    %849 = vmatpush1.msra.mxu0 0.0
    %850 = vmatprep.subr.mxu0 0.0
    %851 = vmatpush1.msra.mxu0 0.0
    %852 = vmatprep.subr.mxu0 0.0
    %853 = vmatpush1.msra.mxu0 0.0
    %854 = vmatprep.subr.mxu0 0.0
    %855 = vmatpush1.msra.mxu0 0.0
    %856 = vmatprep.subr.mxu0 0.0
    %857 = vmatpush1.msra.mxu0 0.0
    %858 = vmatprep.subr.mxu0 0.0
    %859 = vmatpush1.msra.mxu0 0.0
    %860 = vmatprep.subr.mxu0 0.0
    %861 = vmatpush1.msra.mxu0 0.0
    %862 = vmatprep.subr.mxu0 0.0
    %863 = vmatpush1.msra.mxu0 0.0
    %864 = vmatprep.subr.mxu0 0.0
    %865 = vmatpush1.msra.mxu0 0.0
    %866 = vmatprep.subr.mxu0 0.0
    %867 = vmatpush1.msra.mxu0 0.0
    %868 = vmatprep.subr.mxu0 0.0
    %869 = vmatpush1.msra.mxu0 %v61
    %870 = vmatprep.subr.mxu0 0.0
    %871 = vmatpush1.msra.mxu0 %v60
    %872 = vmatprep.subr.mxu0 0.0
    %873 = vmatpush1.msra.mxu0 %v59
    %874 = vmatprep.subr.mxu0 0.0
    %875 = vmatpush1.msra.mxu0 %v58
    %876 = vmatprep.subr.mxu0 0.0
    %877 = vmatpush2.msra.mxu0 0.0
    %878 = vmatprep.subr.mxu0 0.0
    %879 = vmatpush2.msra.mxu0 0.0
    %880 = vmatprep.subr.mxu0 0.0
    %881 = vmatpush2.msra.mxu0 0.0
    %882 = vmatprep.subr.mxu0 0.0
    %883 = vmatpush2.msra.mxu0 0.0
    %884 = vmatprep.subr.mxu0 0.0
    %885 = vmatpush2.msra.mxu0 0.0
    %886 = vmatprep.subr.mxu0 0.0
    %887 = vmatpush2.msra.mxu0 0.0
    %888 = vmatprep.subr.mxu0 0.0
    %889 = vmatpush2.msra.mxu0 0.0
    %890 = vmatprep.subr.mxu0 0.0
    %891 = vmatpush2.msra.mxu0 0.0
    %892 = vmatprep.subr.mxu0 0.0
    %893 = vmatpush2.msra.mxu0 0.0
    %894 = vmatprep.subr.mxu0 0.0
    %895 = vmatpush2.msra.mxu0 0.0
    %896 = vmatprep.subr.mxu0 0.0
    %897 = vmatpush2.msra.mxu0 0.0
    %898 = vmatprep.subr.mxu0 0.0
    %899 = vmatpush2.msra.mxu0 0.0
    %900 = vmatprep.subr.mxu0 0.0
    %901 = vmatpush2.msra.mxu0 0.0
    %902 = vmatprep.subr.mxu0 0.0
    %903 = vmatpush2.msra.mxu0 0.0
    %904 = vmatprep.subr.mxu0 0.0
    %905 = vmatpush2.msra.mxu0 0.0
    %906 = vmatprep.subr.mxu0 0.0
    %907 = vmatpush2.msra.mxu0 0.0
    %908 = vmatprep.mubr.f32.mxu0 0.0
    %909 = vmatmul.mubr.f32.gmra.mxu0 %v842
    %v910 = vpop.f32.mrf.mxu0
    %v911 = vadd.f32 %v76, %v910
    %v912 = vpop.f32.mrf.mxu0
    %913 = vdwg.mxu0
    %914 = vmatprep.subr.mxu0 0.0
    %915 = vmatpush1.msra.mxu0 0.0
    %916 = vmatprep.subr.mxu0 0.0
    %917 = vmatpush1.msra.mxu0 0.0
    %918 = vmatprep.subr.mxu0 0.0
    %919 = vmatpush1.msra.mxu0 0.0
    %920 = vmatprep.subr.mxu0 0.0
    %921 = vmatpush1.msra.mxu0 0.0
    %922 = vmatprep.subr.mxu0 0.0
    %923 = vmatpush1.msra.mxu0 0.0
    %924 = vmatprep.subr.mxu0 0.0
    %925 = vmatpush1.msra.mxu0 0.0
    %926 = vmatprep.subr.mxu0 0.0
    %927 = vmatpush1.msra.mxu0 0.0
    %928 = vmatprep.subr.mxu0 0.0
    %929 = vmatpush1.msra.mxu0 0.0
    %930 = vmatprep.subr.mxu0 0.0
    %931 = vmatpush1.msra.mxu0 0.0
    %932 = vmatprep.subr.mxu0 0.0
    %933 = vmatpush1.msra.mxu0 0.0
    %934 = vmatprep.subr.mxu0 0.0
    %935 = vmatpush1.msra.mxu0 0.0
    %936 = vmatprep.subr.mxu0 0.0
    %937 = vmatpush1.msra.mxu0 0.0
    %938 = vmatprep.subr.mxu0 0.0
    %939 = vmatpush1.msra.mxu0 %v65
    %940 = vmatprep.subr.mxu0 0.0
    %941 = vmatpush1.msra.mxu0 %v64
    %942 = vmatprep.subr.mxu0 0.0
    %943 = vmatpush1.msra.mxu0 %v63
    %944 = vmatprep.subr.mxu0 0.0
    %945 = vmatpush1.msra.mxu0 %v62
    %946 = vmatprep.subr.mxu0 0.0
    %947 = vmatpush2.msra.mxu0 0.0
    %948 = vmatprep.subr.mxu0 0.0
    %949 = vmatpush2.msra.mxu0 0.0
    %950 = vmatprep.subr.mxu0 0.0
    %951 = vmatpush2.msra.mxu0 0.0
    %952 = vmatprep.subr.mxu0 0.0
    %953 = vmatpush2.msra.mxu0 0.0
    %954 = vmatprep.subr.mxu0 0.0
    %955 = vmatpush2.msra.mxu0 0.0
    %956 = vmatprep.subr.mxu0 0.0
    %957 = vmatpush2.msra.mxu0 0.0
    %958 = vmatprep.subr.mxu0 0.0
    %959 = vmatpush2.msra.mxu0 0.0
    %960 = vmatprep.subr.mxu0 0.0
    %961 = vmatpush2.msra.mxu0 0.0
    %962 = vmatprep.subr.mxu0 0.0
    %963 = vmatpush2.msra.mxu0 0.0
    %964 = vmatprep.subr.mxu0 0.0
    %965 = vmatpush2.msra.mxu0 0.0
    %966 = vmatprep.subr.mxu0 0.0
    %967 = vmatpush2.msra.mxu0 0.0
    %968 = vmatprep.subr.mxu0 0.0
    %969 = vmatpush2.msra.mxu0 0.0
    %970 = vmatprep.subr.mxu0 0.0
    %971 = vmatpush2.msra.mxu0 0.0
    %972 = vmatprep.subr.mxu0 0.0
    %973 = vmatpush2.msra.mxu0 0.0
    %974 = vmatprep.subr.mxu0 0.0
    %975 = vmatpush2.msra.mxu0 0.0
    %976 = vmatprep.subr.mxu0 0.0
    %977 = vmatpush2.msra.mxu0 0.0
    %978 = vmatprep.mubr.f32.mxu0 0.0
    %979 = vmatmul.mubr.f32.gmra.mxu0 %v507
    %v980 = vpop.f32.mrf.mxu0
    %v981 = vadd.f32 %v77, %v980
    %v982 = vpop.f32.mrf.mxu0
    %983 = vdwg.mxu0
    %v984 = vadd.f32 %v911, %v981
    %v985 = vxor.u32 %v984, 2147483648
    %v986 = vmul.f32 %v985, 1.442695
    %v987 = vpow.pop %v986
    %v988 = vadd.f32 %v987, 1.0
    %v989 = vrcp.pop %v988
    %v990 = vmul.f32 1.0, %v989
    %992 = vrot.lane.b32.xlu0 %v981, 64
    %v993 = vpop.permute.xlu0 %992
    %v995 = vmul.f32 %v990, %v993
    %997 = vrot.lane.b32.xlu0 %v995, 64
    %v998 = vpop.permute.xlu0 %997
    %v1000 = vadd.f32 %v911, %v998
    %v1001 = vtanh.pop %v1000
    %v1002 = vsub.f32 1.0, %v990
    %1004 = vrot.lane.b32.xlu0 %v1001, 96
    %v1005 = vpop.permute.xlu0 %1004
    %v1007 = vmul.f32 %v1002, %v1005
    %v1008 = vmul.f32 %v990, %v503
    %v1009 = vadd.f32 %v1007, %v1008
    %1011 = vrot.lane.b32.xlu0 %v1009, 96
    %v1012 = vpop.permute.xlu0 %1011
    %v1013 = vsel %vm91, %v1012, 0
    %1015 = vmatprep.subr.mxu0 0.0
    %1016 = vmatpush1.msra.mxu0 0.0
    %1017 = vmatprep.subr.mxu0 0.0
    %1018 = vmatpush1.msra.mxu0 0.0
    %1019 = vmatprep.subr.mxu0 0.0
    %1020 = vmatpush1.msra.mxu0 0.0
    %1021 = vmatprep.subr.mxu0 0.0
    %1022 = vmatpush1.msra.mxu0 0.0
    %1023 = vmatprep.subr.mxu0 0.0
    %1024 = vmatpush1.msra.mxu0 0.0
    %1025 = vmatprep.subr.mxu0 0.0
    %1026 = vmatpush1.msra.mxu0 0.0
    %1027 = vmatprep.subr.mxu0 0.0
    %1028 = vmatpush1.msra.mxu0 0.0
    %1029 = vmatprep.subr.mxu0 0.0
    %1030 = vmatpush1.msra.mxu0 0.0
    %1031 = vmatprep.subr.mxu0 0.0
    %1032 = vmatpush1.msra.mxu0 0.0
    %1033 = vmatprep.subr.mxu0 0.0
    %1034 = vmatpush1.msra.mxu0 0.0
    %1035 = vmatprep.subr.mxu0 0.0
    %1036 = vmatpush1.msra.mxu0 0.0
    %1037 = vmatprep.subr.mxu0 0.0
    %1038 = vmatpush1.msra.mxu0 0.0
    %1039 = vmatprep.subr.mxu0 0.0
    %1040 = vmatpush1.msra.mxu0 %v69
    %1041 = vmatprep.subr.mxu0 0.0
    %1042 = vmatpush1.msra.mxu0 %v68
    %1043 = vmatprep.subr.mxu0 0.0
    %1044 = vmatpush1.msra.mxu0 %v67
    %1045 = vmatprep.subr.mxu0 0.0
    %1046 = vmatpush1.msra.mxu0 %v66
    %1047 = vmatprep.subr.mxu0 0.0
    %1048 = vmatpush2.msra.mxu0 0.0
    %1049 = vmatprep.subr.mxu0 0.0
    %1050 = vmatpush2.msra.mxu0 0.0
    %1051 = vmatprep.subr.mxu0 0.0
    %1052 = vmatpush2.msra.mxu0 0.0
    %1053 = vmatprep.subr.mxu0 0.0
    %1054 = vmatpush2.msra.mxu0 0.0
    %1055 = vmatprep.subr.mxu0 0.0
    %1056 = vmatpush2.msra.mxu0 0.0
    %1057 = vmatprep.subr.mxu0 0.0
    %1058 = vmatpush2.msra.mxu0 0.0
    %1059 = vmatprep.subr.mxu0 0.0
    %1060 = vmatpush2.msra.mxu0 0.0
    %1061 = vmatprep.subr.mxu0 0.0
    %1062 = vmatpush2.msra.mxu0 0.0
    %1063 = vmatprep.subr.mxu0 0.0
    %1064 = vmatpush2.msra.mxu0 0.0
    %1065 = vmatprep.subr.mxu0 0.0
    %1066 = vmatpush2.msra.mxu0 0.0
    %1067 = vmatprep.subr.mxu0 0.0
    %1068 = vmatpush2.msra.mxu0 0.0
    %1069 = vmatprep.subr.mxu0 0.0
    %1070 = vmatpush2.msra.mxu0 0.0
    %1071 = vmatprep.subr.mxu0 0.0
    %1072 = vmatpush2.msra.mxu0 0.0
    %1073 = vmatprep.subr.mxu0 0.0
    %1074 = vmatpush2.msra.mxu0 0.0
    %1075 = vmatprep.subr.mxu0 0.0
    %1076 = vmatpush2.msra.mxu0 0.0
    %1077 = vmatprep.subr.mxu0 0.0
    %1078 = vmatpush2.msra.mxu0 0.0
    %1079 = vmatprep.mubr.f32.mxu0 0.0
    %1080 = vmatmul.mubr.f32.gmra.mxu0 %v1013
    %v1081 = vpop.f32.mrf.mxu0
    %v1082 = vadd.f32 %v78, %v1081
    %v1083 = vpop.f32.mrf.mxu0
    %1084 = vdwg.mxu0
    %v1085 = vsel %vm167, %v1082, -inf
    %1086 = vmax.xlane.f32.xlu0 %v1085
    %v1087 = vpop.xlane.xlu0 %1086
    %v1088 = vsub.f32 %v1082, %v1087
    %v1089 = vmul.f32 %v1088, 1.442695
    %v1090 = vpow.pop %v1089
    %v1091 = vsel %vm167, %v1090, 0.0
    %1092 = vadd.xlane.f32.xlu0 %v1091
    %v1093 = vpop.xlane.xlu0 %1092
    %v1094 = vlog2.pop %v1093
    %v1095 = vmul.f32 %v1094, 0.6931472
    %v1096 = vadd.f32 %v1095, %v1087
    %v1097 = vsub.f32 %v1082, %v1096
    %1098 = vrot.lane.b32.xlu0 %v688, 64
    %v1099 = vpop.permute.xlu0 %1098
    %v1101 = vsel %vm91, %v1097, %v1009
    %v1102 = vsel %vm93, %v1101, %v1099
    %v1103 = vsel %vm597, %v1102, 0.0
    %s1104 = sld [smem:[#allocation2 + $0x2]]
    %s1105 = scalar_lea.vmem %s1, %s1104
    %v1106 = vld [vmem:[%s1105] sm:$0x1]
    %v1107 = vsel %vm91, %v1106, %v1009
    %v1109 = vsel %vm93, %v1107, 0
    %1111 = vmatprep.subr.mxu0 0.0
    %1112 = vmatpush1.msra.mxu0 0.0
    %1113 = vmatprep.subr.mxu0 0.0
    %1114 = vmatpush1.msra.mxu0 0.0
    %1115 = vmatprep.subr.mxu0 0.0
    %1116 = vmatpush1.msra.mxu0 0.0
    %1117 = vmatprep.subr.mxu0 0.0
    %1118 = vmatpush1.msra.mxu0 0.0
    %1119 = vmatprep.subr.mxu0 0.0
    %1120 = vmatpush1.msra.mxu0 0.0
    %1121 = vmatprep.subr.mxu0 0.0
    %1122 = vmatpush1.msra.mxu0 0.0
    %1123 = vmatprep.subr.mxu0 0.0
    %1124 = vmatpush1.msra.mxu0 0.0
    %1125 = vmatprep.subr.mxu0 0.0
    %1126 = vmatpush1.msra.mxu0 0.0
    %1127 = vmatprep.subr.mxu0 0.0
    %1128 = vmatpush1.msra.mxu0 %v49
    %1129 = vmatprep.subr.mxu0 0.0
    %1130 = vmatpush1.msra.mxu0 %v48
    %1131 = vmatprep.subr.mxu0 0.0
    %1132 = vmatpush1.msra.mxu0 %v47
    %1133 = vmatprep.subr.mxu0 0.0
    %1134 = vmatpush1.msra.mxu0 %v46
    %1135 = vmatprep.subr.mxu0 0.0
    %1136 = vmatpush1.msra.mxu0 %v45
    %1137 = vmatprep.subr.mxu0 0.0
    %1138 = vmatpush1.msra.mxu0 %v44
    %1139 = vmatprep.subr.mxu0 0.0
    %1140 = vmatpush1.msra.mxu0 %v43
    %1141 = vmatprep.subr.mxu0 0.0
    %1142 = vmatpush1.msra.mxu0 %v42
    %1143 = vmatprep.subr.mxu0 0.0
    %1144 = vmatpush2.msra.mxu0 0.0
    %1145 = vmatprep.subr.mxu0 0.0
    %1146 = vmatpush2.msra.mxu0 0.0
    %1147 = vmatprep.subr.mxu0 0.0
    %1148 = vmatpush2.msra.mxu0 0.0
    %1149 = vmatprep.subr.mxu0 0.0
    %1150 = vmatpush2.msra.mxu0 0.0
    %1151 = vmatprep.subr.mxu0 0.0
    %1152 = vmatpush2.msra.mxu0 0.0
    %1153 = vmatprep.subr.mxu0 0.0
    %1154 = vmatpush2.msra.mxu0 0.0
    %1155 = vmatprep.subr.mxu0 0.0
    %1156 = vmatpush2.msra.mxu0 0.0
    %1157 = vmatprep.subr.mxu0 0.0
    %1158 = vmatpush2.msra.mxu0 0.0
    %1159 = vmatprep.subr.mxu0 0.0
    %1160 = vmatpush2.msra.mxu0 0.0
    %1161 = vmatprep.subr.mxu0 0.0
    %1162 = vmatpush2.msra.mxu0 0.0
    %1163 = vmatprep.subr.mxu0 0.0
    %1164 = vmatpush2.msra.mxu0 0.0
    %1165 = vmatprep.subr.mxu0 0.0
    %1166 = vmatpush2.msra.mxu0 0.0
    %1167 = vmatprep.subr.mxu0 0.0
    %1168 = vmatpush2.msra.mxu0 0.0
    %1169 = vmatprep.subr.mxu0 0.0
    %1170 = vmatpush2.msra.mxu0 0.0
    %1171 = vmatprep.subr.mxu0 0.0
    %1172 = vmatpush2.msra.mxu0 0.0
    %1173 = vmatprep.subr.mxu0 0.0
    %1174 = vmatpush2.msra.mxu0 0.0
    %1175 = vmatprep.mubr.f32.mxu0 0.0
    %1176 = vmatmul.mubr.f32.gmra.mxu0 %v1109
    %v1177 = vpop.f32.mrf.mxu0
    %v1178 = vadd.f32 %v74, %v1177
    %v1179 = vpop.f32.mrf.mxu0
    %1180 = vdwg.mxu0
    %v1181 = vsel %vm167, %v1178, -inf
    %1182 = vmax.xlane.f32.xlu0 %v1181
    %v1183 = vpop.xlane.xlu0 %1182
    %v1184 = vsub.f32 %v1178, %v1183
    %v1185 = vmul.f32 %v1184, 1.442695
    %v1186 = vpow.pop %v1185
    %v1187 = vsel %vm167, %v1186, 0.0
    %1188 = vadd.xlane.f32.xlu0 %v1187
    %v1189 = vpop.xlane.xlu0 %1188
    %v1190 = vlog2.pop %v1189
    %v1191 = vmul.f32 %v1190, 0.6931472
    %v1192 = vadd.f32 %v1191, %v1183
    %v1193 = vsub.f32 %v1178, %v1192
    %v1195 = vsel %vm91, %v1193, 0
    %1197 = vmatprep.subr.mxu0 0.0
    %1198 = vmatpush1.msra.mxu0 0.0
    %1199 = vmatprep.subr.mxu0 0.0
    %1200 = vmatpush1.msra.mxu0 0.0
    %1201 = vmatprep.subr.mxu0 0.0
    %1202 = vmatpush1.msra.mxu0 0.0
    %1203 = vmatprep.subr.mxu0 0.0
    %1204 = vmatpush1.msra.mxu0 0.0
    %1205 = vmatprep.subr.mxu0 0.0
    %1206 = vmatpush1.msra.mxu0 0.0
    %1207 = vmatprep.subr.mxu0 0.0
    %1208 = vmatpush1.msra.mxu0 0.0
    %1209 = vmatprep.subr.mxu0 0.0
    %1210 = vmatpush1.msra.mxu0 0.0
    %1211 = vmatprep.subr.mxu0 0.0
    %1212 = vmatpush1.msra.mxu0 0.0
    %1213 = vmatprep.subr.mxu0 0.0
    %1214 = vmatpush1.msra.mxu0 0.0
    %1215 = vmatprep.subr.mxu0 0.0
    %1216 = vmatpush1.msra.mxu0 0.0
    %1217 = vmatprep.subr.mxu0 0.0
    %1218 = vmatpush1.msra.mxu0 0.0
    %1219 = vmatprep.subr.mxu0 0.0
    %1220 = vmatpush1.msra.mxu0 0.0
    %1221 = vmatprep.subr.mxu0 0.0
    %1222 = vmatpush1.msra.mxu0 %v73
    %1223 = vmatprep.subr.mxu0 0.0
    %1224 = vmatpush1.msra.mxu0 %v72
    %1225 = vmatprep.subr.mxu0 0.0
    %1226 = vmatpush1.msra.mxu0 %v71
    %1227 = vmatprep.subr.mxu0 0.0
    %1228 = vmatpush1.msra.mxu0 %v70
    %1229 = vmatprep.subr.mxu0 0.0
    %1230 = vmatpush2.msra.mxu0 0.0
    %1231 = vmatprep.subr.mxu0 0.0
    %1232 = vmatpush2.msra.mxu0 0.0
    %1233 = vmatprep.subr.mxu0 0.0
    %1234 = vmatpush2.msra.mxu0 0.0
    %1235 = vmatprep.subr.mxu0 0.0
    %1236 = vmatpush2.msra.mxu0 0.0
    %1237 = vmatprep.subr.mxu0 0.0
    %1238 = vmatpush2.msra.mxu0 0.0
    %1239 = vmatprep.subr.mxu0 0.0
    %1240 = vmatpush2.msra.mxu0 0.0
    %1241 = vmatprep.subr.mxu0 0.0
    %1242 = vmatpush2.msra.mxu0 0.0
    %1243 = vmatprep.subr.mxu0 0.0
    %1244 = vmatpush2.msra.mxu0 0.0
    %1245 = vmatprep.subr.mxu0 0.0
    %1246 = vmatpush2.msra.mxu0 0.0
    %1247 = vmatprep.subr.mxu0 0.0
    %1248 = vmatpush2.msra.mxu0 0.0
    %1249 = vmatprep.subr.mxu0 0.0
    %1250 = vmatpush2.msra.mxu0 0.0
    %1251 = vmatprep.subr.mxu0 0.0
    %1252 = vmatpush2.msra.mxu0 0.0
    %1253 = vmatprep.subr.mxu0 0.0
    %1254 = vmatpush2.msra.mxu0 0.0
    %1255 = vmatprep.subr.mxu0 0.0
    %1256 = vmatpush2.msra.mxu0 0.0
    %1257 = vmatprep.subr.mxu0 0.0
    %1258 = vmatpush2.msra.mxu0 0.0
    %1259 = vmatprep.subr.mxu0 0.0
    %1260 = vmatpush2.msra.mxu0 0.0
    %1261 = vmatprep.mubr.f32.mxu0 0.0
    %1262 = vmatmul.mubr.f32.gmra.mxu0 %v1195
    %v1263 = vpop.f32.mrf.mxu0
    %v1264 = vadd.f32 0.0, %v1263
    %v1265 = vpop.f32.mrf.mxu0
    %1266 = vdwg.mxu0
    %1268 = vrot.lane.b32.xlu0 %v1264, 32
    %v1269 = vpop.permute.xlu0 %1268
    %v1271 = vsel %vm91, %v1106, %v1269
    %v1273 = vsel %vm93, %v1271, 0
    %1275 = vmatprep.subr.mxu0 0.0
    %1276 = vmatpush1.msra.mxu0 0.0
    %1277 = vmatprep.subr.mxu0 0.0
    %1278 = vmatpush1.msra.mxu0 0.0
    %1279 = vmatprep.subr.mxu0 0.0
    %1280 = vmatpush1.msra.mxu0 0.0
    %1281 = vmatprep.subr.mxu0 0.0
    %1282 = vmatpush1.msra.mxu0 0.0
    %1283 = vmatprep.subr.mxu0 0.0
    %1284 = vmatpush1.msra.mxu0 0.0
    %1285 = vmatprep.subr.mxu0 0.0
    %1286 = vmatpush1.msra.mxu0 0.0
    %1287 = vmatprep.subr.mxu0 0.0
    %1288 = vmatpush1.msra.mxu0 0.0
    %1289 = vmatprep.subr.mxu0 0.0
    %1290 = vmatpush1.msra.mxu0 0.0
    %1291 = vmatprep.subr.mxu0 0.0
    %1292 = vmatpush1.msra.mxu0 %v57
    %1293 = vmatprep.subr.mxu0 0.0
    %1294 = vmatpush1.msra.mxu0 %v56
    %1295 = vmatprep.subr.mxu0 0.0
    %1296 = vmatpush1.msra.mxu0 %v55
    %1297 = vmatprep.subr.mxu0 0.0
    %1298 = vmatpush1.msra.mxu0 %v54
    %1299 = vmatprep.subr.mxu0 0.0
    %1300 = vmatpush1.msra.mxu0 %v53
    %1301 = vmatprep.subr.mxu0 0.0
    %1302 = vmatpush1.msra.mxu0 %v52
    %1303 = vmatprep.subr.mxu0 0.0
    %1304 = vmatpush1.msra.mxu0 %v51
    %1305 = vmatprep.subr.mxu0 0.0
    %1306 = vmatpush1.msra.mxu0 %v50
    %1307 = vmatprep.subr.mxu0 0.0
    %1308 = vmatpush2.msra.mxu0 0.0
    %1309 = vmatprep.subr.mxu0 0.0
    %1310 = vmatpush2.msra.mxu0 0.0
    %1311 = vmatprep.subr.mxu0 0.0
    %1312 = vmatpush2.msra.mxu0 0.0
    %1313 = vmatprep.subr.mxu0 0.0
    %1314 = vmatpush2.msra.mxu0 0.0
    %1315 = vmatprep.subr.mxu0 0.0
    %1316 = vmatpush2.msra.mxu0 0.0
    %1317 = vmatprep.subr.mxu0 0.0
    %1318 = vmatpush2.msra.mxu0 0.0
    %1319 = vmatprep.subr.mxu0 0.0
    %1320 = vmatpush2.msra.mxu0 0.0
    %1321 = vmatprep.subr.mxu0 0.0
    %1322 = vmatpush2.msra.mxu0 0.0
    %1323 = vmatprep.subr.mxu0 0.0
    %1324 = vmatpush2.msra.mxu0 0.0
    %1325 = vmatprep.subr.mxu0 0.0
    %1326 = vmatpush2.msra.mxu0 0.0
    %1327 = vmatprep.subr.mxu0 0.0
    %1328 = vmatpush2.msra.mxu0 0.0
    %1329 = vmatprep.subr.mxu0 0.0
    %1330 = vmatpush2.msra.mxu0 0.0
    %1331 = vmatprep.subr.mxu0 0.0
    %1332 = vmatpush2.msra.mxu0 0.0
    %1333 = vmatprep.subr.mxu0 0.0
    %1334 = vmatpush2.msra.mxu0 0.0
    %1335 = vmatprep.subr.mxu0 0.0
    %1336 = vmatpush2.msra.mxu0 0.0
    %1337 = vmatprep.subr.mxu0 0.0
    %1338 = vmatpush2.msra.mxu0 0.0
    %1339 = vmatprep.mubr.f32.mxu0 0.0
    %1340 = vmatmul.mubr.f32.gmra.mxu0 %v1273
    %v1341 = vpop.f32.mrf.mxu0
    %v1342 = vadd.f32 %v75, %v1341
    %v1343 = vpop.f32.mrf.mxu0
    %1344 = vdwg.mxu0
    %v1345 = vmax.f32 %v1342, 0.0
    %v1347 = vsel %vm91, %v1345, 0
    %1349 = vmatprep.subr.mxu0 0.0
    %1350 = vmatpush1.msra.mxu0 0.0
    %1351 = vmatprep.subr.mxu0 0.0
    %1352 = vmatpush1.msra.mxu0 0.0
    %1353 = vmatprep.subr.mxu0 0.0
    %1354 = vmatpush1.msra.mxu0 0.0
    %1355 = vmatprep.subr.mxu0 0.0
    %1356 = vmatpush1.msra.mxu0 0.0
    %1357 = vmatprep.subr.mxu0 0.0
    %1358 = vmatpush1.msra.mxu0 0.0
    %1359 = vmatprep.subr.mxu0 0.0
    %1360 = vmatpush1.msra.mxu0 0.0
    %1361 = vmatprep.subr.mxu0 0.0
    %1362 = vmatpush1.msra.mxu0 0.0
    %1363 = vmatprep.subr.mxu0 0.0
    %1364 = vmatpush1.msra.mxu0 0.0
    %1365 = vmatprep.subr.mxu0 0.0
    %1366 = vmatpush1.msra.mxu0 0.0
    %1367 = vmatprep.subr.mxu0 0.0
    %1368 = vmatpush1.msra.mxu0 0.0
    %1369 = vmatprep.subr.mxu0 0.0
    %1370 = vmatpush1.msra.mxu0 0.0
    %1371 = vmatprep.subr.mxu0 0.0
    %1372 = vmatpush1.msra.mxu0 0.0
    %1373 = vmatprep.subr.mxu0 0.0
    %1374 = vmatpush1.msra.mxu0 %v61
    %1375 = vmatprep.subr.mxu0 0.0
    %1376 = vmatpush1.msra.mxu0 %v60
    %1377 = vmatprep.subr.mxu0 0.0
    %1378 = vmatpush1.msra.mxu0 %v59
    %1379 = vmatprep.subr.mxu0 0.0
    %1380 = vmatpush1.msra.mxu0 %v58
    %1381 = vmatprep.subr.mxu0 0.0
    %1382 = vmatpush2.msra.mxu0 0.0
    %1383 = vmatprep.subr.mxu0 0.0
    %1384 = vmatpush2.msra.mxu0 0.0
    %1385 = vmatprep.subr.mxu0 0.0
    %1386 = vmatpush2.msra.mxu0 0.0
    %1387 = vmatprep.subr.mxu0 0.0
    %1388 = vmatpush2.msra.mxu0 0.0
    %1389 = vmatprep.subr.mxu0 0.0
    %1390 = vmatpush2.msra.mxu0 0.0
    %1391 = vmatprep.subr.mxu0 0.0
    %1392 = vmatpush2.msra.mxu0 0.0
    %1393 = vmatprep.subr.mxu0 0.0
    %1394 = vmatpush2.msra.mxu0 0.0
    %1395 = vmatprep.subr.mxu0 0.0
    %1396 = vmatpush2.msra.mxu0 0.0
    %1397 = vmatprep.subr.mxu0 0.0
    %1398 = vmatpush2.msra.mxu0 0.0
    %1399 = vmatprep.subr.mxu0 0.0
    %1400 = vmatpush2.msra.mxu0 0.0
    %1401 = vmatprep.subr.mxu0 0.0
    %1402 = vmatpush2.msra.mxu0 0.0
    %1403 = vmatprep.subr.mxu0 0.0
    %1404 = vmatpush2.msra.mxu0 0.0
    %1405 = vmatprep.subr.mxu0 0.0
    %1406 = vmatpush2.msra.mxu0 0.0
    %1407 = vmatprep.subr.mxu0 0.0
    %1408 = vmatpush2.msra.mxu0 0.0
    %1409 = vmatprep.subr.mxu0 0.0
    %1410 = vmatpush2.msra.mxu0 0.0
    %1411 = vmatprep.subr.mxu0 0.0
    %1412 = vmatpush2.msra.mxu0 0.0
    %1413 = vmatprep.mubr.f32.mxu0 0.0
    %1414 = vmatmul.mubr.f32.gmra.mxu0 %v1347
    %v1415 = vpop.f32.mrf.mxu0
    %v1416 = vadd.f32 %v76, %v1415
    %v1417 = vpop.f32.mrf.mxu0
    %1418 = vdwg.mxu0
    %1419 = vmatprep.subr.mxu0 0.0
    %1420 = vmatpush1.msra.mxu0 0.0
    %1421 = vmatprep.subr.mxu0 0.0
    %1422 = vmatpush1.msra.mxu0 0.0
    %1423 = vmatprep.subr.mxu0 0.0
    %1424 = vmatpush1.msra.mxu0 0.0
    %1425 = vmatprep.subr.mxu0 0.0
    %1426 = vmatpush1.msra.mxu0 0.0
    %1427 = vmatprep.subr.mxu0 0.0
    %1428 = vmatpush1.msra.mxu0 0.0
    %1429 = vmatprep.subr.mxu0 0.0
    %1430 = vmatpush1.msra.mxu0 0.0
    %1431 = vmatprep.subr.mxu0 0.0
    %1432 = vmatpush1.msra.mxu0 0.0
    %1433 = vmatprep.subr.mxu0 0.0
    %1434 = vmatpush1.msra.mxu0 0.0
    %1435 = vmatprep.subr.mxu0 0.0
    %1436 = vmatpush1.msra.mxu0 0.0
    %1437 = vmatprep.subr.mxu0 0.0
    %1438 = vmatpush1.msra.mxu0 0.0
    %1439 = vmatprep.subr.mxu0 0.0
    %1440 = vmatpush1.msra.mxu0 0.0
    %1441 = vmatprep.subr.mxu0 0.0
    %1442 = vmatpush1.msra.mxu0 0.0
    %1443 = vmatprep.subr.mxu0 0.0
    %1444 = vmatpush1.msra.mxu0 %v65
    %1445 = vmatprep.subr.mxu0 0.0
    %1446 = vmatpush1.msra.mxu0 %v64
    %1447 = vmatprep.subr.mxu0 0.0
    %1448 = vmatpush1.msra.mxu0 %v63
    %1449 = vmatprep.subr.mxu0 0.0
    %1450 = vmatpush1.msra.mxu0 %v62
    %1451 = vmatprep.subr.mxu0 0.0
    %1452 = vmatpush2.msra.mxu0 0.0
    %1453 = vmatprep.subr.mxu0 0.0
    %1454 = vmatpush2.msra.mxu0 0.0
    %1455 = vmatprep.subr.mxu0 0.0
    %1456 = vmatpush2.msra.mxu0 0.0
    %1457 = vmatprep.subr.mxu0 0.0
    %1458 = vmatpush2.msra.mxu0 0.0
    %1459 = vmatprep.subr.mxu0 0.0
    %1460 = vmatpush2.msra.mxu0 0.0
    %1461 = vmatprep.subr.mxu0 0.0
    %1462 = vmatpush2.msra.mxu0 0.0
    %1463 = vmatprep.subr.mxu0 0.0
    %1464 = vmatpush2.msra.mxu0 0.0
    %1465 = vmatprep.subr.mxu0 0.0
    %1466 = vmatpush2.msra.mxu0 0.0
    %1467 = vmatprep.subr.mxu0 0.0
    %1468 = vmatpush2.msra.mxu0 0.0
    %1469 = vmatprep.subr.mxu0 0.0
    %1470 = vmatpush2.msra.mxu0 0.0
    %1471 = vmatprep.subr.mxu0 0.0
    %1472 = vmatpush2.msra.mxu0 0.0
    %1473 = vmatprep.subr.mxu0 0.0
    %1474 = vmatpush2.msra.mxu0 0.0
    %1475 = vmatprep.subr.mxu0 0.0
    %1476 = vmatpush2.msra.mxu0 0.0
    %1477 = vmatprep.subr.mxu0 0.0
    %1478 = vmatpush2.msra.mxu0 0.0
    %1479 = vmatprep.subr.mxu0 0.0
    %1480 = vmatpush2.msra.mxu0 0.0
    %1481 = vmatprep.subr.mxu0 0.0
    %1482 = vmatpush2.msra.mxu0 0.0
    %1483 = vmatprep.mubr.f32.mxu0 0.0
    %1484 = vmatmul.mubr.f32.gmra.mxu0 %v1013
    %v1485 = vpop.f32.mrf.mxu0
    %v1486 = vadd.f32 %v77, %v1485
    %v1487 = vpop.f32.mrf.mxu0
    %1488 = vdwg.mxu0
    %v1489 = vadd.f32 %v1416, %v1486
    %v1490 = vxor.u32 %v1489, 2147483648
    %v1491 = vmul.f32 %v1490, 1.442695
    %v1492 = vpow.pop %v1491
    %v1493 = vadd.f32 %v1492, 1.0
    %v1494 = vrcp.pop %v1493
    %v1495 = vmul.f32 1.0, %v1494
    %1497 = vrot.lane.b32.xlu0 %v1486, 64
    %v1498 = vpop.permute.xlu0 %1497
    %v1500 = vmul.f32 %v1495, %v1498
    %1502 = vrot.lane.b32.xlu0 %v1500, 64
    %v1503 = vpop.permute.xlu0 %1502
    %v1505 = vadd.f32 %v1416, %v1503
    %v1506 = vtanh.pop %v1505
    %v1507 = vsub.f32 1.0, %v1495
    %1509 = vrot.lane.b32.xlu0 %v1506, 96
    %v1510 = vpop.permute.xlu0 %1509
    %v1512 = vmul.f32 %v1507, %v1510
    %v1513 = vmul.f32 %v1495, %v1009
    %v1514 = vadd.f32 %v1512, %v1513
    %1516 = vrot.lane.b32.xlu0 %v1514, 96
    %v1517 = vpop.permute.xlu0 %1516
    %v1518 = vsel %vm91, %v1517, 0
    %1520 = vmatprep.subr.mxu0 0.0
    %1521 = vmatpush1.msra.mxu0 0.0
    %1522 = vmatprep.subr.mxu0 0.0
    %1523 = vmatpush1.msra.mxu0 0.0
    %1524 = vmatprep.subr.mxu0 0.0
    %1525 = vmatpush1.msra.mxu0 0.0
    %1526 = vmatprep.subr.mxu0 0.0
    %1527 = vmatpush1.msra.mxu0 0.0
    %1528 = vmatprep.subr.mxu0 0.0
    %1529 = vmatpush1.msra.mxu0 0.0
    %1530 = vmatprep.subr.mxu0 0.0
    %1531 = vmatpush1.msra.mxu0 0.0
    %1532 = vmatprep.subr.mxu0 0.0
    %1533 = vmatpush1.msra.mxu0 0.0
    %1534 = vmatprep.subr.mxu0 0.0
    %1535 = vmatpush1.msra.mxu0 0.0
    %1536 = vmatprep.subr.mxu0 0.0
    %1537 = vmatpush1.msra.mxu0 0.0
    %1538 = vmatprep.subr.mxu0 0.0
    %1539 = vmatpush1.msra.mxu0 0.0
    %1540 = vmatprep.subr.mxu0 0.0
    %1541 = vmatpush1.msra.mxu0 0.0
    %1542 = vmatprep.subr.mxu0 0.0
    %1543 = vmatpush1.msra.mxu0 0.0
    %1544 = vmatprep.subr.mxu0 0.0
    %1545 = vmatpush1.msra.mxu0 %v69
    %1546 = vmatprep.subr.mxu0 0.0
    %1547 = vmatpush1.msra.mxu0 %v68
    %1548 = vmatprep.subr.mxu0 0.0
    %1549 = vmatpush1.msra.mxu0 %v67
    %1550 = vmatprep.subr.mxu0 0.0
    %1551 = vmatpush1.msra.mxu0 %v66
    %1552 = vmatprep.subr.mxu0 0.0
    %1553 = vmatpush2.msra.mxu0 0.0
    %1554 = vmatprep.subr.mxu0 0.0
    %1555 = vmatpush2.msra.mxu0 0.0
    %1556 = vmatprep.subr.mxu0 0.0
    %1557 = vmatpush2.msra.mxu0 0.0
    %1558 = vmatprep.subr.mxu0 0.0
    %1559 = vmatpush2.msra.mxu0 0.0
    %1560 = vmatprep.subr.mxu0 0.0
    %1561 = vmatpush2.msra.mxu0 0.0
    %1562 = vmatprep.subr.mxu0 0.0
    %1563 = vmatpush2.msra.mxu0 0.0
    %1564 = vmatprep.subr.mxu0 0.0
    %1565 = vmatpush2.msra.mxu0 0.0
    %1566 = vmatprep.subr.mxu0 0.0
    %1567 = vmatpush2.msra.mxu0 0.0
    %1568 = vmatprep.subr.mxu0 0.0
    %1569 = vmatpush2.msra.mxu0 0.0
    %1570 = vmatprep.subr.mxu0 0.0
    %1571 = vmatpush2.msra.mxu0 0.0
    %1572 = vmatprep.subr.mxu0 0.0
    %1573 = vmatpush2.msra.mxu0 0.0
    %1574 = vmatprep.subr.mxu0 0.0
    %1575 = vmatpush2.msra.mxu0 0.0
    %1576 = vmatprep.subr.mxu0 0.0
    %1577 = vmatpush2.msra.mxu0 0.0
    %1578 = vmatprep.subr.mxu0 0.0
    %1579 = vmatpush2.msra.mxu0 0.0
    %1580 = vmatprep.subr.mxu0 0.0
    %1581 = vmatpush2.msra.mxu0 0.0
    %1582 = vmatprep.subr.mxu0 0.0
    %1583 = vmatpush2.msra.mxu0 0.0
    %1584 = vmatprep.mubr.f32.mxu0 0.0
    %1585 = vmatmul.mubr.f32.gmra.mxu0 %v1518
    %v1586 = vpop.f32.mrf.mxu0
    %v1587 = vadd.f32 %v78, %v1586
    %v1588 = vpop.f32.mrf.mxu0
    %1589 = vdwg.mxu0
    %v1590 = vsel %vm167, %v1587, -inf
    %1591 = vmax.xlane.f32.xlu0 %v1590
    %v1592 = vpop.xlane.xlu0 %1591
    %v1593 = vsub.f32 %v1587, %v1592
    %v1594 = vmul.f32 %v1593, 1.442695
    %v1595 = vpow.pop %v1594
    %v1596 = vsel %vm167, %v1595, 0.0
    %1597 = vadd.xlane.f32.xlu0 %v1596
    %v1598 = vpop.xlane.xlu0 %1597
    %v1599 = vlog2.pop %v1598
    %v1600 = vmul.f32 %v1599, 0.6931472
    %v1601 = vadd.f32 %v1600, %v1592
    %v1602 = vsub.f32 %v1587, %v1601
    %1603 = vrot.lane.b32.xlu0 %v1193, 64
    %v1604 = vpop.permute.xlu0 %1603
    %v1606 = vsel %vm91, %v1602, %v1514
    %v1607 = vsel %vm93, %v1606, %v1604
    %v1608 = vsel %vm597, %v1607, 0.0
    %s1609 = sld [smem:[#allocation2 + $0x3]]
    %s1610 = scalar_lea.vmem %s1, %s1609
    %v1611 = vld [vmem:[%s1610] sm:$0x1]
    %v1612 = vsel %vm91, %v1611, %v1514
    %v1614 = vsel %vm93, %v1612, 0
    %1616 = vmatprep.subr.mxu0 0.0
    %1617 = vmatpush1.msra.mxu0 0.0
    %1618 = vmatprep.subr.mxu0 0.0
    %1619 = vmatpush1.msra.mxu0 0.0
    %1620 = vmatprep.subr.mxu0 0.0
    %1621 = vmatpush1.msra.mxu0 0.0
    %1622 = vmatprep.subr.mxu0 0.0
    %1623 = vmatpush1.msra.mxu0 0.0
    %1624 = vmatprep.subr.mxu0 0.0
    %1625 = vmatpush1.msra.mxu0 0.0
    %1626 = vmatprep.subr.mxu0 0.0
    %1627 = vmatpush1.msra.mxu0 0.0
    %1628 = vmatprep.subr.mxu0 0.0
    %1629 = vmatpush1.msra.mxu0 0.0
    %1630 = vmatprep.subr.mxu0 0.0
    %1631 = vmatpush1.msra.mxu0 0.0
    %1632 = vmatprep.subr.mxu0 0.0
    %1633 = vmatpush1.msra.mxu0 %v49
    %1634 = vmatprep.subr.mxu0 0.0
    %1635 = vmatpush1.msra.mxu0 %v48
    %1636 = vmatprep.subr.mxu0 0.0
    %1637 = vmatpush1.msra.mxu0 %v47
    %1638 = vmatprep.subr.mxu0 0.0
    %1639 = vmatpush1.msra.mxu0 %v46
    %1640 = vmatprep.subr.mxu0 0.0
    %1641 = vmatpush1.msra.mxu0 %v45
    %1642 = vmatprep.subr.mxu0 0.0
    %1643 = vmatpush1.msra.mxu0 %v44
    %1644 = vmatprep.subr.mxu0 0.0
    %1645 = vmatpush1.msra.mxu0 %v43
    %1646 = vmatprep.subr.mxu0 0.0
    %1647 = vmatpush1.msra.mxu0 %v42
    %1648 = vmatprep.subr.mxu0 0.0
    %1649 = vmatpush2.msra.mxu0 0.0
    %1650 = vmatprep.subr.mxu0 0.0
    %1651 = vmatpush2.msra.mxu0 0.0
    %1652 = vmatprep.subr.mxu0 0.0
    %1653 = vmatpush2.msra.mxu0 0.0
    %1654 = vmatprep.subr.mxu0 0.0
    %1655 = vmatpush2.msra.mxu0 0.0
    %1656 = vmatprep.subr.mxu0 0.0
    %1657 = vmatpush2.msra.mxu0 0.0
    %1658 = vmatprep.subr.mxu0 0.0
    %1659 = vmatpush2.msra.mxu0 0.0
    %1660 = vmatprep.subr.mxu0 0.0
    %1661 = vmatpush2.msra.mxu0 0.0
    %1662 = vmatprep.subr.mxu0 0.0
    %1663 = vmatpush2.msra.mxu0 0.0
    %1664 = vmatprep.subr.mxu0 0.0
    %1665 = vmatpush2.msra.mxu0 0.0
    %1666 = vmatprep.subr.mxu0 0.0
    %1667 = vmatpush2.msra.mxu0 0.0
    %1668 = vmatprep.subr.mxu0 0.0
    %1669 = vmatpush2.msra.mxu0 0.0
    %1670 = vmatprep.subr.mxu0 0.0
    %1671 = vmatpush2.msra.mxu0 0.0
    %1672 = vmatprep.subr.mxu0 0.0
    %1673 = vmatpush2.msra.mxu0 0.0
    %1674 = vmatprep.subr.mxu0 0.0
    %1675 = vmatpush2.msra.mxu0 0.0
    %1676 = vmatprep.subr.mxu0 0.0
    %1677 = vmatpush2.msra.mxu0 0.0
    %1678 = vmatprep.subr.mxu0 0.0
    %1679 = vmatpush2.msra.mxu0 0.0
    %1680 = vmatprep.mubr.f32.mxu0 0.0
    %1681 = vmatmul.mubr.f32.gmra.mxu0 %v1614
    %v1682 = vpop.f32.mrf.mxu0
    %v1683 = vadd.f32 %v74, %v1682
    %v1684 = vpop.f32.mrf.mxu0
    %1685 = vdwg.mxu0
    %v1686 = vsel %vm167, %v1683, -inf
    %1687 = vmax.xlane.f32.xlu0 %v1686
    %v1688 = vpop.xlane.xlu0 %1687
    %v1689 = vsub.f32 %v1683, %v1688
    %v1690 = vmul.f32 %v1689, 1.442695
    %v1691 = vpow.pop %v1690
    %v1692 = vsel %vm167, %v1691, 0.0
    %1693 = vadd.xlane.f32.xlu0 %v1692
    %v1694 = vpop.xlane.xlu0 %1693
    %v1695 = vlog2.pop %v1694
    %v1696 = vmul.f32 %v1695, 0.6931472
    %v1697 = vadd.f32 %v1696, %v1688
    %v1698 = vsub.f32 %v1683, %v1697
    %v1700 = vsel %vm91, %v1698, 0
    %1702 = vmatprep.subr.mxu0 0.0
    %1703 = vmatpush1.msra.mxu0 0.0
    %1704 = vmatprep.subr.mxu0 0.0
    %1705 = vmatpush1.msra.mxu0 0.0
    %1706 = vmatprep.subr.mxu0 0.0
    %1707 = vmatpush1.msra.mxu0 0.0
    %1708 = vmatprep.subr.mxu0 0.0
    %1709 = vmatpush1.msra.mxu0 0.0
    %1710 = vmatprep.subr.mxu0 0.0
    %1711 = vmatpush1.msra.mxu0 0.0
    %1712 = vmatprep.subr.mxu0 0.0
    %1713 = vmatpush1.msra.mxu0 0.0
    %1714 = vmatprep.subr.mxu0 0.0
    %1715 = vmatpush1.msra.mxu0 0.0
    %1716 = vmatprep.subr.mxu0 0.0
    %1717 = vmatpush1.msra.mxu0 0.0
    %1718 = vmatprep.subr.mxu0 0.0
    %1719 = vmatpush1.msra.mxu0 0.0
    %1720 = vmatprep.subr.mxu0 0.0
    %1721 = vmatpush1.msra.mxu0 0.0
    %1722 = vmatprep.subr.mxu0 0.0
    %1723 = vmatpush1.msra.mxu0 0.0
    %1724 = vmatprep.subr.mxu0 0.0
    %1725 = vmatpush1.msra.mxu0 0.0
    %1726 = vmatprep.subr.mxu0 0.0
    %1727 = vmatpush1.msra.mxu0 %v73
    %1728 = vmatprep.subr.mxu0 0.0
    %1729 = vmatpush1.msra.mxu0 %v72
    %1730 = vmatprep.subr.mxu0 0.0
    %1731 = vmatpush1.msra.mxu0 %v71
    %1732 = vmatprep.subr.mxu0 0.0
    %1733 = vmatpush1.msra.mxu0 %v70
    %1734 = vmatprep.subr.mxu0 0.0
    %1735 = vmatpush2.msra.mxu0 0.0
    %1736 = vmatprep.subr.mxu0 0.0
    %1737 = vmatpush2.msra.mxu0 0.0
    %1738 = vmatprep.subr.mxu0 0.0
    %1739 = vmatpush2.msra.mxu0 0.0
    %1740 = vmatprep.subr.mxu0 0.0
    %1741 = vmatpush2.msra.mxu0 0.0
    %1742 = vmatprep.subr.mxu0 0.0
    %1743 = vmatpush2.msra.mxu0 0.0
    %1744 = vmatprep.subr.mxu0 0.0
    %1745 = vmatpush2.msra.mxu0 0.0
    %1746 = vmatprep.subr.mxu0 0.0
    %1747 = vmatpush2.msra.mxu0 0.0
    %1748 = vmatprep.subr.mxu0 0.0
    %1749 = vmatpush2.msra.mxu0 0.0
    %1750 = vmatprep.subr.mxu0 0.0
    %1751 = vmatpush2.msra.mxu0 0.0
    %1752 = vmatprep.subr.mxu0 0.0
    %1753 = vmatpush2.msra.mxu0 0.0
    %1754 = vmatprep.subr.mxu0 0.0
    %1755 = vmatpush2.msra.mxu0 0.0
    %1756 = vmatprep.subr.mxu0 0.0
    %1757 = vmatpush2.msra.mxu0 0.0
    %1758 = vmatprep.subr.mxu0 0.0
    %1759 = vmatpush2.msra.mxu0 0.0
    %1760 = vmatprep.subr.mxu0 0.0
    %1761 = vmatpush2.msra.mxu0 0.0
    %1762 = vmatprep.subr.mxu0 0.0
    %1763 = vmatpush2.msra.mxu0 0.0
    %1764 = vmatprep.subr.mxu0 0.0
    %1765 = vmatpush2.msra.mxu0 0.0
    %1766 = vmatprep.mubr.f32.mxu0 0.0
    %1767 = vmatmul.mubr.f32.gmra.mxu0 %v1700
    %v1768 = vpop.f32.mrf.mxu0
    %v1769 = vadd.f32 0.0, %v1768
    %v1770 = vpop.f32.mrf.mxu0
    %1771 = vdwg.mxu0
    %1773 = vrot.lane.b32.xlu0 %v1769, 32
    %v1774 = vpop.permute.xlu0 %1773
    %v1776 = vsel %vm91, %v1611, %v1774
    %v1778 = vsel %vm93, %v1776, 0
    %1780 = vmatprep.subr.mxu0 0.0
    %1781 = vmatpush1.msra.mxu0 0.0
    %1782 = vmatprep.subr.mxu0 0.0
    %1783 = vmatpush1.msra.mxu0 0.0
    %1784 = vmatprep.subr.mxu0 0.0
    %1785 = vmatpush1.msra.mxu0 0.0
    %1786 = vmatprep.subr.mxu0 0.0
    %1787 = vmatpush1.msra.mxu0 0.0
    %1788 = vmatprep.subr.mxu0 0.0
    %1789 = vmatpush1.msra.mxu0 0.0
    %1790 = vmatprep.subr.mxu0 0.0
    %1791 = vmatpush1.msra.mxu0 0.0
    %1792 = vmatprep.subr.mxu0 0.0
    %1793 = vmatpush1.msra.mxu0 0.0
    %1794 = vmatprep.subr.mxu0 0.0
    %1795 = vmatpush1.msra.mxu0 0.0
    %1796 = vmatprep.subr.mxu0 0.0
    %1797 = vmatpush1.msra.mxu0 %v57
    %1798 = vmatprep.subr.mxu0 0.0
    %1799 = vmatpush1.msra.mxu0 %v56
    %1800 = vmatprep.subr.mxu0 0.0
    %1801 = vmatpush1.msra.mxu0 %v55
    %1802 = vmatprep.subr.mxu0 0.0
    %1803 = vmatpush1.msra.mxu0 %v54
    %1804 = vmatprep.subr.mxu0 0.0
    %1805 = vmatpush1.msra.mxu0 %v53
    %1806 = vmatprep.subr.mxu0 0.0
    %1807 = vmatpush1.msra.mxu0 %v52
    %1808 = vmatprep.subr.mxu0 0.0
    %1809 = vmatpush1.msra.mxu0 %v51
    %1810 = vmatprep.subr.mxu0 0.0
    %1811 = vmatpush1.msra.mxu0 %v50
    %1812 = vmatprep.subr.mxu0 0.0
    %1813 = vmatpush2.msra.mxu0 0.0
    %1814 = vmatprep.subr.mxu0 0.0
    %1815 = vmatpush2.msra.mxu0 0.0
    %1816 = vmatprep.subr.mxu0 0.0
    %1817 = vmatpush2.msra.mxu0 0.0
    %1818 = vmatprep.subr.mxu0 0.0
    %1819 = vmatpush2.msra.mxu0 0.0
    %1820 = vmatprep.subr.mxu0 0.0
    %1821 = vmatpush2.msra.mxu0 0.0
    %1822 = vmatprep.subr.mxu0 0.0
    %1823 = vmatpush2.msra.mxu0 0.0
    %1824 = vmatprep.subr.mxu0 0.0
    %1825 = vmatpush2.msra.mxu0 0.0
    %1826 = vmatprep.subr.mxu0 0.0
    %1827 = vmatpush2.msra.mxu0 0.0
    %1828 = vmatprep.subr.mxu0 0.0
    %1829 = vmatpush2.msra.mxu0 0.0
    %1830 = vmatprep.subr.mxu0 0.0
    %1831 = vmatpush2.msra.mxu0 0.0
    %1832 = vmatprep.subr.mxu0 0.0
    %1833 = vmatpush2.msra.mxu0 0.0
    %1834 = vmatprep.subr.mxu0 0.0
    %1835 = vmatpush2.msra.mxu0 0.0
    %1836 = vmatprep.subr.mxu0 0.0
    %1837 = vmatpush2.msra.mxu0 0.0
    %1838 = vmatprep.subr.mxu0 0.0
    %1839 = vmatpush2.msra.mxu0 0.0
    %1840 = vmatprep.subr.mxu0 0.0
    %1841 = vmatpush2.msra.mxu0 0.0
    %1842 = vmatprep.subr.mxu0 0.0
    %1843 = vmatpush2.msra.mxu0 0.0
    %1844 = vmatprep.mubr.f32.mxu0 0.0
    %1845 = vmatmul.mubr.f32.gmra.mxu0 %v1778
    %v1846 = vpop.f32.mrf.mxu0
    %v1847 = vadd.f32 %v75, %v1846
    %v1848 = vpop.f32.mrf.mxu0
    %1849 = vdwg.mxu0
    %v1850 = vmax.f32 %v1847, 0.0
    %v1852 = vsel %vm91, %v1850, 0
    %1854 = vmatprep.subr.mxu0 0.0
    %1855 = vmatpush1.msra.mxu0 0.0
    %1856 = vmatprep.subr.mxu0 0.0
    %1857 = vmatpush1.msra.mxu0 0.0
    %1858 = vmatprep.subr.mxu0 0.0
    %1859 = vmatpush1.msra.mxu0 0.0
    %1860 = vmatprep.subr.mxu0 0.0
    %1861 = vmatpush1.msra.mxu0 0.0
    %1862 = vmatprep.subr.mxu0 0.0
    %1863 = vmatpush1.msra.mxu0 0.0
    %1864 = vmatprep.subr.mxu0 0.0
    %1865 = vmatpush1.msra.mxu0 0.0
    %1866 = vmatprep.subr.mxu0 0.0
    %1867 = vmatpush1.msra.mxu0 0.0
    %1868 = vmatprep.subr.mxu0 0.0
    %1869 = vmatpush1.msra.mxu0 0.0
    %1870 = vmatprep.subr.mxu0 0.0
    %1871 = vmatpush1.msra.mxu0 0.0
    %1872 = vmatprep.subr.mxu0 0.0
    %1873 = vmatpush1.msra.mxu0 0.0
    %1874 = vmatprep.subr.mxu0 0.0
    %1875 = vmatpush1.msra.mxu0 0.0
    %1876 = vmatprep.subr.mxu0 0.0
    %1877 = vmatpush1.msra.mxu0 0.0
    %1878 = vmatprep.subr.mxu0 0.0
    %1879 = vmatpush1.msra.mxu0 %v61
    %1880 = vmatprep.subr.mxu0 0.0
    %1881 = vmatpush1.msra.mxu0 %v60
    %1882 = vmatprep.subr.mxu0 0.0
    %1883 = vmatpush1.msra.mxu0 %v59
    %1884 = vmatprep.subr.mxu0 0.0
    %1885 = vmatpush1.msra.mxu0 %v58
    %1886 = vmatprep.subr.mxu0 0.0
    %1887 = vmatpush2.msra.mxu0 0.0
    %1888 = vmatprep.subr.mxu0 0.0
    %1889 = vmatpush2.msra.mxu0 0.0
    %1890 = vmatprep.subr.mxu0 0.0
    %1891 = vmatpush2.msra.mxu0 0.0
    %1892 = vmatprep.subr.mxu0 0.0
    %1893 = vmatpush2.msra.mxu0 0.0
    %1894 = vmatprep.subr.mxu0 0.0
    %1895 = vmatpush2.msra.mxu0 0.0
    %1896 = vmatprep.subr.mxu0 0.0
    %1897 = vmatpush2.msra.mxu0 0.0
    %1898 = vmatprep.subr.mxu0 0.0
    %1899 = vmatpush2.msra.mxu0 0.0
    %1900 = vmatprep.subr.mxu0 0.0
    %1901 = vmatpush2.msra.mxu0 0.0
    %1902 = vmatprep.subr.mxu0 0.0
    %1903 = vmatpush2.msra.mxu0 0.0
    %1904 = vmatprep.subr.mxu0 0.0
    %1905 = vmatpush2.msra.mxu0 0.0
    %1906 = vmatprep.subr.mxu0 0.0
    %1907 = vmatpush2.msra.mxu0 0.0
    %1908 = vmatprep.subr.mxu0 0.0
    %1909 = vmatpush2.msra.mxu0 0.0
    %1910 = vmatprep.subr.mxu0 0.0
    %1911 = vmatpush2.msra.mxu0 0.0
    %1912 = vmatprep.subr.mxu0 0.0
    %1913 = vmatpush2.msra.mxu0 0.0
    %1914 = vmatprep.subr.mxu0 0.0
    %1915 = vmatpush2.msra.mxu0 0.0
    %1916 = vmatprep.subr.mxu0 0.0
    %1917 = vmatpush2.msra.mxu0 0.0
    %1918 = vmatprep.mubr.f32.mxu0 0.0
    %1919 = vmatmul.mubr.f32.gmra.mxu0 %v1852
    %v1920 = vpop.f32.mrf.mxu0
    %v1921 = vadd.f32 %v76, %v1920
    %v1922 = vpop.f32.mrf.mxu0
    %1923 = vdwg.mxu0
    %1924 = vmatprep.subr.mxu0 0.0
    %1925 = vmatpush1.msra.mxu0 0.0
    %1926 = vmatprep.subr.mxu0 0.0
    %1927 = vmatpush1.msra.mxu0 0.0
    %1928 = vmatprep.subr.mxu0 0.0
    %1929 = vmatpush1.msra.mxu0 0.0
    %1930 = vmatprep.subr.mxu0 0.0
    %1931 = vmatpush1.msra.mxu0 0.0
    %1932 = vmatprep.subr.mxu0 0.0
    %1933 = vmatpush1.msra.mxu0 0.0
    %1934 = vmatprep.subr.mxu0 0.0
    %1935 = vmatpush1.msra.mxu0 0.0
    %1936 = vmatprep.subr.mxu0 0.0
    %1937 = vmatpush1.msra.mxu0 0.0
    %1938 = vmatprep.subr.mxu0 0.0
    %1939 = vmatpush1.msra.mxu0 0.0
    %1940 = vmatprep.subr.mxu0 0.0
    %1941 = vmatpush1.msra.mxu0 0.0
    %1942 = vmatprep.subr.mxu0 0.0
    %1943 = vmatpush1.msra.mxu0 0.0
    %1944 = vmatprep.subr.mxu0 0.0
    %1945 = vmatpush1.msra.mxu0 0.0
    %1946 = vmatprep.subr.mxu0 0.0
    %1947 = vmatpush1.msra.mxu0 0.0
    %1948 = vmatprep.subr.mxu0 0.0
    %1949 = vmatpush1.msra.mxu0 %v65
    %1950 = vmatprep.subr.mxu0 0.0
    %1951 = vmatpush1.msra.mxu0 %v64
    %1952 = vmatprep.subr.mxu0 0.0
    %1953 = vmatpush1.msra.mxu0 %v63
    %1954 = vmatprep.subr.mxu0 0.0
    %1955 = vmatpush1.msra.mxu0 %v62
    %1956 = vmatprep.subr.mxu0 0.0
    %1957 = vmatpush2.msra.mxu0 0.0
    %1958 = vmatprep.subr.mxu0 0.0
    %1959 = vmatpush2.msra.mxu0 0.0
    %1960 = vmatprep.subr.mxu0 0.0
    %1961 = vmatpush2.msra.mxu0 0.0
    %1962 = vmatprep.subr.mxu0 0.0
    %1963 = vmatpush2.msra.mxu0 0.0
    %1964 = vmatprep.subr.mxu0 0.0
    %1965 = vmatpush2.msra.mxu0 0.0
    %1966 = vmatprep.subr.mxu0 0.0
    %1967 = vmatpush2.msra.mxu0 0.0
    %1968 = vmatprep.subr.mxu0 0.0
    %1969 = vmatpush2.msra.mxu0 0.0
    %1970 = vmatprep.subr.mxu0 0.0
    %1971 = vmatpush2.msra.mxu0 0.0
    %1972 = vmatprep.subr.mxu0 0.0
    %1973 = vmatpush2.msra.mxu0 0.0
    %1974 = vmatprep.subr.mxu0 0.0
    %1975 = vmatpush2.msra.mxu0 0.0
    %1976 = vmatprep.subr.mxu0 0.0
    %1977 = vmatpush2.msra.mxu0 0.0
    %1978 = vmatprep.subr.mxu0 0.0
    %1979 = vmatpush2.msra.mxu0 0.0
    %1980 = vmatprep.subr.mxu0 0.0
    %1981 = vmatpush2.msra.mxu0 0.0
    %1982 = vmatprep.subr.mxu0 0.0
    %1983 = vmatpush2.msra.mxu0 0.0
    %1984 = vmatprep.subr.mxu0 0.0
    %1985 = vmatpush2.msra.mxu0 0.0
    %1986 = vmatprep.subr.mxu0 0.0
    %1987 = vmatpush2.msra.mxu0 0.0
    %1988 = vmatprep.mubr.f32.mxu0 0.0
    %1989 = vmatmul.mubr.f32.gmra.mxu0 %v1518
    %v1990 = vpop.f32.mrf.mxu0
    %v1991 = vadd.f32 %v77, %v1990
    %v1992 = vpop.f32.mrf.mxu0
    %1993 = vdwg.mxu0
    %v1994 = vadd.f32 %v1921, %v1991
    %v1995 = vxor.u32 %v1994, 2147483648
    %v1996 = vmul.f32 %v1995, 1.442695
    %v1997 = vpow.pop %v1996
    %v1998 = vadd.f32 %v1997, 1.0
    %v1999 = vrcp.pop %v1998
    %v2000 = vmul.f32 1.0, %v1999
    %2002 = vrot.lane.b32.xlu0 %v1991, 64
    %v2003 = vpop.permute.xlu0 %2002
    %v2005 = vmul.f32 %v2000, %v2003
    %2007 = vrot.lane.b32.xlu0 %v2005, 64
    %v2008 = vpop.permute.xlu0 %2007
    %v2010 = vadd.f32 %v1921, %v2008
    %v2011 = vtanh.pop %v2010
    %v2012 = vsub.f32 1.0, %v2000
    %2014 = vrot.lane.b32.xlu0 %v2011, 96
    %v2015 = vpop.permute.xlu0 %2014
    %v2017 = vmul.f32 %v2012, %v2015
    %v2018 = vmul.f32 %v2000, %v1514
    %v2019 = vadd.f32 %v2017, %v2018
    %2021 = vrot.lane.b32.xlu0 %v2019, 96
    %v2022 = vpop.permute.xlu0 %2021
    %v2023 = vsel %vm91, %v2022, 0
    %2025 = vmatprep.subr.mxu0 0.0
    %2026 = vmatpush1.msra.mxu0 0.0
    %2027 = vmatprep.subr.mxu0 0.0
    %2028 = vmatpush1.msra.mxu0 0.0
    %2029 = vmatprep.subr.mxu0 0.0
    %2030 = vmatpush1.msra.mxu0 0.0
    %2031 = vmatprep.subr.mxu0 0.0
    %2032 = vmatpush1.msra.mxu0 0.0
    %2033 = vmatprep.subr.mxu0 0.0
    %2034 = vmatpush1.msra.mxu0 0.0
    %2035 = vmatprep.subr.mxu0 0.0
    %2036 = vmatpush1.msra.mxu0 0.0
    %2037 = vmatprep.subr.mxu0 0.0
    %2038 = vmatpush1.msra.mxu0 0.0
    %2039 = vmatprep.subr.mxu0 0.0
    %2040 = vmatpush1.msra.mxu0 0.0
    %2041 = vmatprep.subr.mxu0 0.0
    %2042 = vmatpush1.msra.mxu0 0.0
    %2043 = vmatprep.subr.mxu0 0.0
    %2044 = vmatpush1.msra.mxu0 0.0
    %2045 = vmatprep.subr.mxu0 0.0
    %2046 = vmatpush1.msra.mxu0 0.0
    %2047 = vmatprep.subr.mxu0 0.0
    %2048 = vmatpush1.msra.mxu0 0.0
    %2049 = vmatprep.subr.mxu0 0.0
    %2050 = vmatpush1.msra.mxu0 %v69
    %2051 = vmatprep.subr.mxu0 0.0
    %2052 = vmatpush1.msra.mxu0 %v68
    %2053 = vmatprep.subr.mxu0 0.0
    %2054 = vmatpush1.msra.mxu0 %v67
    %2055 = vmatprep.subr.mxu0 0.0
    %2056 = vmatpush1.msra.mxu0 %v66
    %2057 = vmatprep.subr.mxu0 0.0
    %2058 = vmatpush2.msra.mxu0 0.0
    %2059 = vmatprep.subr.mxu0 0.0
    %2060 = vmatpush2.msra.mxu0 0.0
    %2061 = vmatprep.subr.mxu0 0.0
    %2062 = vmatpush2.msra.mxu0 0.0
    %2063 = vmatprep.subr.mxu0 0.0
    %2064 = vmatpush2.msra.mxu0 0.0
    %2065 = vmatprep.subr.mxu0 0.0
    %2066 = vmatpush2.msra.mxu0 0.0
    %2067 = vmatprep.subr.mxu0 0.0
    %2068 = vmatpush2.msra.mxu0 0.0
    %2069 = vmatprep.subr.mxu0 0.0
    %2070 = vmatpush2.msra.mxu0 0.0
    %2071 = vmatprep.subr.mxu0 0.0
    %2072 = vmatpush2.msra.mxu0 0.0
    %2073 = vmatprep.subr.mxu0 0.0
    %2074 = vmatpush2.msra.mxu0 0.0
    %2075 = vmatprep.subr.mxu0 0.0
    %2076 = vmatpush2.msra.mxu0 0.0
    %2077 = vmatprep.subr.mxu0 0.0
    %2078 = vmatpush2.msra.mxu0 0.0
    %2079 = vmatprep.subr.mxu0 0.0
    %2080 = vmatpush2.msra.mxu0 0.0
    %2081 = vmatprep.subr.mxu0 0.0
    %2082 = vmatpush2.msra.mxu0 0.0
    %2083 = vmatprep.subr.mxu0 0.0
    %2084 = vmatpush2.msra.mxu0 0.0
    %2085 = vmatprep.subr.mxu0 0.0
    %2086 = vmatpush2.msra.mxu0 0.0
    %2087 = vmatprep.subr.mxu0 0.0
    %2088 = vmatpush2.msra.mxu0 0.0
    %2089 = vmatprep.mubr.f32.mxu0 0.0
    %2090 = vmatmul.mubr.f32.gmra.mxu0 %v2023
    %v2091 = vpop.f32.mrf.mxu0
    %v2092 = vadd.f32 %v78, %v2091
    %v2093 = vpop.f32.mrf.mxu0
    %2094 = vdwg.mxu0
    %v2095 = vsel %vm167, %v2092, -inf
    %2096 = vmax.xlane.f32.xlu0 %v2095
    %v2097 = vpop.xlane.xlu0 %2096
    %v2098 = vsub.f32 %v2092, %v2097
    %v2099 = vmul.f32 %v2098, 1.442695
    %v2100 = vpow.pop %v2099
    %v2101 = vsel %vm167, %v2100, 0.0
    %2102 = vadd.xlane.f32.xlu0 %v2101
    %v2103 = vpop.xlane.xlu0 %2102
    %v2104 = vlog2.pop %v2103
    %v2105 = vmul.f32 %v2104, 0.6931472
    %v2106 = vadd.f32 %v2105, %v2097
    %v2107 = vsub.f32 %v2092, %v2106
    %2108 = vrot.lane.b32.xlu0 %v1698, 64
    %v2109 = vpop.permute.xlu0 %2108
    %v2111 = vsel %vm91, %v2107, %v2019
    %v2112 = vsel %vm93, %v2111, %v2109
    %v2113 = vsel %vm597, %v2112, 0.0
    %s2114 = sld [smem:[#allocation2 + $0x4]]
    %s2115 = scalar_lea.vmem %s1, %s2114
    %v2116 = vld [vmem:[%s2115] sm:$0x1]
    %v2117 = vsel %vm91, %v2116, %v2019
    %v2119 = vsel %vm93, %v2117, 0
    %2121 = vmatprep.subr.mxu0 0.0
    %2122 = vmatpush1.msra.mxu0 0.0
    %2123 = vmatprep.subr.mxu0 0.0
    %2124 = vmatpush1.msra.mxu0 0.0
    %2125 = vmatprep.subr.mxu0 0.0
    %2126 = vmatpush1.msra.mxu0 0.0
    %2127 = vmatprep.subr.mxu0 0.0
    %2128 = vmatpush1.msra.mxu0 0.0
    %2129 = vmatprep.subr.mxu0 0.0
    %2130 = vmatpush1.msra.mxu0 0.0
    %2131 = vmatprep.subr.mxu0 0.0
    %2132 = vmatpush1.msra.mxu0 0.0
    %2133 = vmatprep.subr.mxu0 0.0
    %2134 = vmatpush1.msra.mxu0 0.0
    %2135 = vmatprep.subr.mxu0 0.0
    %2136 = vmatpush1.msra.mxu0 0.0
    %2137 = vmatprep.subr.mxu0 0.0
    %2138 = vmatpush1.msra.mxu0 %v49
    %2139 = vmatprep.subr.mxu0 0.0
    %2140 = vmatpush1.msra.mxu0 %v48
    %2141 = vmatprep.subr.mxu0 0.0
    %2142 = vmatpush1.msra.mxu0 %v47
    %2143 = vmatprep.subr.mxu0 0.0
    %2144 = vmatpush1.msra.mxu0 %v46
    %2145 = vmatprep.subr.mxu0 0.0
    %2146 = vmatpush1.msra.mxu0 %v45
    %2147 = vmatprep.subr.mxu0 0.0
    %2148 = vmatpush1.msra.mxu0 %v44
    %2149 = vmatprep.subr.mxu0 0.0
    %2150 = vmatpush1.msra.mxu0 %v43
    %2151 = vmatprep.subr.mxu0 0.0
    %2152 = vmatpush1.msra.mxu0 %v42
    %2153 = vmatprep.subr.mxu0 0.0
    %2154 = vmatpush2.msra.mxu0 0.0
    %2155 = vmatprep.subr.mxu0 0.0
    %2156 = vmatpush2.msra.mxu0 0.0
    %2157 = vmatprep.subr.mxu0 0.0
    %2158 = vmatpush2.msra.mxu0 0.0
    %2159 = vmatprep.subr.mxu0 0.0
    %2160 = vmatpush2.msra.mxu0 0.0
    %2161 = vmatprep.subr.mxu0 0.0
    %2162 = vmatpush2.msra.mxu0 0.0
    %2163 = vmatprep.subr.mxu0 0.0
    %2164 = vmatpush2.msra.mxu0 0.0
    %2165 = vmatprep.subr.mxu0 0.0
    %2166 = vmatpush2.msra.mxu0 0.0
    %2167 = vmatprep.subr.mxu0 0.0
    %2168 = vmatpush2.msra.mxu0 0.0
    %2169 = vmatprep.subr.mxu0 0.0
    %2170 = vmatpush2.msra.mxu0 0.0
    %2171 = vmatprep.subr.mxu0 0.0
    %2172 = vmatpush2.msra.mxu0 0.0
    %2173 = vmatprep.subr.mxu0 0.0
    %2174 = vmatpush2.msra.mxu0 0.0
    %2175 = vmatprep.subr.mxu0 0.0
    %2176 = vmatpush2.msra.mxu0 0.0
    %2177 = vmatprep.subr.mxu0 0.0
    %2178 = vmatpush2.msra.mxu0 0.0
    %2179 = vmatprep.subr.mxu0 0.0
    %2180 = vmatpush2.msra.mxu0 0.0
    %2181 = vmatprep.subr.mxu0 0.0
    %2182 = vmatpush2.msra.mxu0 0.0
    %2183 = vmatprep.subr.mxu0 0.0
    %2184 = vmatpush2.msra.mxu0 0.0
    %2185 = vmatprep.mubr.f32.mxu0 0.0
    %2186 = vmatmul.mubr.f32.gmra.mxu0 %v2119
    %v2187 = vpop.f32.mrf.mxu0
    %v2188 = vadd.f32 %v74, %v2187
    %v2189 = vpop.f32.mrf.mxu0
    %2190 = vdwg.mxu0
    %v2191 = vsel %vm167, %v2188, -inf
    %2192 = vmax.xlane.f32.xlu0 %v2191
    %v2193 = vpop.xlane.xlu0 %2192
    %v2194 = vsub.f32 %v2188, %v2193
    %v2195 = vmul.f32 %v2194, 1.442695
    %v2196 = vpow.pop %v2195
    %v2197 = vsel %vm167, %v2196, 0.0
    %2198 = vadd.xlane.f32.xlu0 %v2197
    %v2199 = vpop.xlane.xlu0 %2198
    %v2200 = vlog2.pop %v2199
    %v2201 = vmul.f32 %v2200, 0.6931472
    %v2202 = vadd.f32 %v2201, %v2193
    %v2203 = vsub.f32 %v2188, %v2202
    %v2205 = vsel %vm91, %v2203, 0
    %2207 = vmatprep.subr.mxu0 0.0
    %2208 = vmatpush1.msra.mxu0 0.0
    %2209 = vmatprep.subr.mxu0 0.0
    %2210 = vmatpush1.msra.mxu0 0.0
    %2211 = vmatprep.subr.mxu0 0.0
    %2212 = vmatpush1.msra.mxu0 0.0
    %2213 = vmatprep.subr.mxu0 0.0
    %2214 = vmatpush1.msra.mxu0 0.0
    %2215 = vmatprep.subr.mxu0 0.0
    %2216 = vmatpush1.msra.mxu0 0.0
    %2217 = vmatprep.subr.mxu0 0.0
    %2218 = vmatpush1.msra.mxu0 0.0
    %2219 = vmatprep.subr.mxu0 0.0
    %2220 = vmatpush1.msra.mxu0 0.0
    %2221 = vmatprep.subr.mxu0 0.0
    %2222 = vmatpush1.msra.mxu0 0.0
    %2223 = vmatprep.subr.mxu0 0.0
    %2224 = vmatpush1.msra.mxu0 0.0
    %2225 = vmatprep.subr.mxu0 0.0
    %2226 = vmatpush1.msra.mxu0 0.0
    %2227 = vmatprep.subr.mxu0 0.0
    %2228 = vmatpush1.msra.mxu0 0.0
    %2229 = vmatprep.subr.mxu0 0.0
    %2230 = vmatpush1.msra.mxu0 0.0
    %2231 = vmatprep.subr.mxu0 0.0
    %2232 = vmatpush1.msra.mxu0 %v73
    %2233 = vmatprep.subr.mxu0 0.0
    %2234 = vmatpush1.msra.mxu0 %v72
    %2235 = vmatprep.subr.mxu0 0.0
    %2236 = vmatpush1.msra.mxu0 %v71
    %2237 = vmatprep.subr.mxu0 0.0
    %2238 = vmatpush1.msra.mxu0 %v70
    %2239 = vmatprep.subr.mxu0 0.0
    %2240 = vmatpush2.msra.mxu0 0.0
    %2241 = vmatprep.subr.mxu0 0.0
    %2242 = vmatpush2.msra.mxu0 0.0
    %2243 = vmatprep.subr.mxu0 0.0
    %2244 = vmatpush2.msra.mxu0 0.0
    %2245 = vmatprep.subr.mxu0 0.0
    %2246 = vmatpush2.msra.mxu0 0.0
    %2247 = vmatprep.subr.mxu0 0.0
    %2248 = vmatpush2.msra.mxu0 0.0
    %2249 = vmatprep.subr.mxu0 0.0
    %2250 = vmatpush2.msra.mxu0 0.0
    %2251 = vmatprep.subr.mxu0 0.0
    %2252 = vmatpush2.msra.mxu0 0.0
    %2253 = vmatprep.subr.mxu0 0.0
    %2254 = vmatpush2.msra.mxu0 0.0
    %2255 = vmatprep.subr.mxu0 0.0
    %2256 = vmatpush2.msra.mxu0 0.0
    %2257 = vmatprep.subr.mxu0 0.0
    %2258 = vmatpush2.msra.mxu0 0.0
    %2259 = vmatprep.subr.mxu0 0.0
    %2260 = vmatpush2.msra.mxu0 0.0
    %2261 = vmatprep.subr.mxu0 0.0
    %2262 = vmatpush2.msra.mxu0 0.0
    %2263 = vmatprep.subr.mxu0 0.0
    %2264 = vmatpush2.msra.mxu0 0.0
    %2265 = vmatprep.subr.mxu0 0.0
    %2266 = vmatpush2.msra.mxu0 0.0
    %2267 = vmatprep.subr.mxu0 0.0
    %2268 = vmatpush2.msra.mxu0 0.0
    %2269 = vmatprep.subr.mxu0 0.0
    %2270 = vmatpush2.msra.mxu0 0.0
    %2271 = vmatprep.mubr.f32.mxu0 0.0
    %2272 = vmatmul.mubr.f32.gmra.mxu0 %v2205
    %v2273 = vpop.f32.mrf.mxu0
    %v2274 = vadd.f32 0.0, %v2273
    %v2275 = vpop.f32.mrf.mxu0
    %2276 = vdwg.mxu0
    %2278 = vrot.lane.b32.xlu0 %v2274, 32
    %v2279 = vpop.permute.xlu0 %2278
    %v2281 = vsel %vm91, %v2116, %v2279
    %v2283 = vsel %vm93, %v2281, 0
    %2285 = vmatprep.subr.mxu0 0.0
    %2286 = vmatpush1.msra.mxu0 0.0
    %2287 = vmatprep.subr.mxu0 0.0
    %2288 = vmatpush1.msra.mxu0 0.0
    %2289 = vmatprep.subr.mxu0 0.0
    %2290 = vmatpush1.msra.mxu0 0.0
    %2291 = vmatprep.subr.mxu0 0.0
    %2292 = vmatpush1.msra.mxu0 0.0
    %2293 = vmatprep.subr.mxu0 0.0
    %2294 = vmatpush1.msra.mxu0 0.0
    %2295 = vmatprep.subr.mxu0 0.0
    %2296 = vmatpush1.msra.mxu0 0.0
    %2297 = vmatprep.subr.mxu0 0.0
    %2298 = vmatpush1.msra.mxu0 0.0
    %2299 = vmatprep.subr.mxu0 0.0
    %2300 = vmatpush1.msra.mxu0 0.0
    %2301 = vmatprep.subr.mxu0 0.0
    %2302 = vmatpush1.msra.mxu0 %v57
    %2303 = vmatprep.subr.mxu0 0.0
    %2304 = vmatpush1.msra.mxu0 %v56
    %2305 = vmatprep.subr.mxu0 0.0
    %2306 = vmatpush1.msra.mxu0 %v55
    %2307 = vmatprep.subr.mxu0 0.0
    %2308 = vmatpush1.msra.mxu0 %v54
    %2309 = vmatprep.subr.mxu0 0.0
    %2310 = vmatpush1.msra.mxu0 %v53
    %2311 = vmatprep.subr.mxu0 0.0
    %2312 = vmatpush1.msra.mxu0 %v52
    %2313 = vmatprep.subr.mxu0 0.0
    %2314 = vmatpush1.msra.mxu0 %v51
    %2315 = vmatprep.subr.mxu0 0.0
    %2316 = vmatpush1.msra.mxu0 %v50
    %2317 = vmatprep.subr.mxu0 0.0
    %2318 = vmatpush2.msra.mxu0 0.0
    %2319 = vmatprep.subr.mxu0 0.0
    %2320 = vmatpush2.msra.mxu0 0.0
    %2321 = vmatprep.subr.mxu0 0.0
    %2322 = vmatpush2.msra.mxu0 0.0
    %2323 = vmatprep.subr.mxu0 0.0
    %2324 = vmatpush2.msra.mxu0 0.0
    %2325 = vmatprep.subr.mxu0 0.0
    %2326 = vmatpush2.msra.mxu0 0.0
    %2327 = vmatprep.subr.mxu0 0.0
    %2328 = vmatpush2.msra.mxu0 0.0
    %2329 = vmatprep.subr.mxu0 0.0
    %2330 = vmatpush2.msra.mxu0 0.0
    %2331 = vmatprep.subr.mxu0 0.0
    %2332 = vmatpush2.msra.mxu0 0.0
    %2333 = vmatprep.subr.mxu0 0.0
    %2334 = vmatpush2.msra.mxu0 0.0
    %2335 = vmatprep.subr.mxu0 0.0
    %2336 = vmatpush2.msra.mxu0 0.0
    %2337 = vmatprep.subr.mxu0 0.0
    %2338 = vmatpush2.msra.mxu0 0.0
    %2339 = vmatprep.subr.mxu0 0.0
    %2340 = vmatpush2.msra.mxu0 0.0
    %2341 = vmatprep.subr.mxu0 0.0
    %2342 = vmatpush2.msra.mxu0 0.0
    %2343 = vmatprep.subr.mxu0 0.0
    %2344 = vmatpush2.msra.mxu0 0.0
    %2345 = vmatprep.subr.mxu0 0.0
    %2346 = vmatpush2.msra.mxu0 0.0
    %2347 = vmatprep.subr.mxu0 0.0
    %2348 = vmatpush2.msra.mxu0 0.0
    %2349 = vmatprep.mubr.f32.mxu0 0.0
    %2350 = vmatmul.mubr.f32.gmra.mxu0 %v2283
    %v2351 = vpop.f32.mrf.mxu0
    %v2352 = vadd.f32 %v75, %v2351
    %v2353 = vpop.f32.mrf.mxu0
    %2354 = vdwg.mxu0
    %v2355 = vmax.f32 %v2352, 0.0
    %v2357 = vsel %vm91, %v2355, 0
    %2359 = vmatprep.subr.mxu0 0.0
    %2360 = vmatpush1.msra.mxu0 0.0
    %2361 = vmatprep.subr.mxu0 0.0
    %2362 = vmatpush1.msra.mxu0 0.0
    %2363 = vmatprep.subr.mxu0 0.0
    %2364 = vmatpush1.msra.mxu0 0.0
    %2365 = vmatprep.subr.mxu0 0.0
    %2366 = vmatpush1.msra.mxu0 0.0
    %2367 = vmatprep.subr.mxu0 0.0
    %2368 = vmatpush1.msra.mxu0 0.0
    %2369 = vmatprep.subr.mxu0 0.0
    %2370 = vmatpush1.msra.mxu0 0.0
    %2371 = vmatprep.subr.mxu0 0.0
    %2372 = vmatpush1.msra.mxu0 0.0
    %2373 = vmatprep.subr.mxu0 0.0
    %2374 = vmatpush1.msra.mxu0 0.0
    %2375 = vmatprep.subr.mxu0 0.0
    %2376 = vmatpush1.msra.mxu0 0.0
    %2377 = vmatprep.subr.mxu0 0.0
    %2378 = vmatpush1.msra.mxu0 0.0
    %2379 = vmatprep.subr.mxu0 0.0
    %2380 = vmatpush1.msra.mxu0 0.0
    %2381 = vmatprep.subr.mxu0 0.0
    %2382 = vmatpush1.msra.mxu0 0.0
    %2383 = vmatprep.subr.mxu0 0.0
    %2384 = vmatpush1.msra.mxu0 %v61
    %2385 = vmatprep.subr.mxu0 0.0
    %2386 = vmatpush1.msra.mxu0 %v60
    %2387 = vmatprep.subr.mxu0 0.0
    %2388 = vmatpush1.msra.mxu0 %v59
    %2389 = vmatprep.subr.mxu0 0.0
    %2390 = vmatpush1.msra.mxu0 %v58
    %2391 = vmatprep.subr.mxu0 0.0
    %2392 = vmatpush2.msra.mxu0 0.0
    %2393 = vmatprep.subr.mxu0 0.0
    %2394 = vmatpush2.msra.mxu0 0.0
    %2395 = vmatprep.subr.mxu0 0.0
    %2396 = vmatpush2.msra.mxu0 0.0
    %2397 = vmatprep.subr.mxu0 0.0
    %2398 = vmatpush2.msra.mxu0 0.0
    %2399 = vmatprep.subr.mxu0 0.0
    %2400 = vmatpush2.msra.mxu0 0.0
    %2401 = vmatprep.subr.mxu0 0.0
    %2402 = vmatpush2.msra.mxu0 0.0
    %2403 = vmatprep.subr.mxu0 0.0
    %2404 = vmatpush2.msra.mxu0 0.0
    %2405 = vmatprep.subr.mxu0 0.0
    %2406 = vmatpush2.msra.mxu0 0.0
    %2407 = vmatprep.subr.mxu0 0.0
    %2408 = vmatpush2.msra.mxu0 0.0
    %2409 = vmatprep.subr.mxu0 0.0
    %2410 = vmatpush2.msra.mxu0 0.0
    %2411 = vmatprep.subr.mxu0 0.0
    %2412 = vmatpush2.msra.mxu0 0.0
    %2413 = vmatprep.subr.mxu0 0.0
    %2414 = vmatpush2.msra.mxu0 0.0
    %2415 = vmatprep.subr.mxu0 0.0
    %2416 = vmatpush2.msra.mxu0 0.0
    %2417 = vmatprep.subr.mxu0 0.0
    %2418 = vmatpush2.msra.mxu0 0.0
    %2419 = vmatprep.subr.mxu0 0.0
    %2420 = vmatpush2.msra.mxu0 0.0
    %2421 = vmatprep.subr.mxu0 0.0
    %2422 = vmatpush2.msra.mxu0 0.0
    %2423 = vmatprep.mubr.f32.mxu0 0.0
    %2424 = vmatmul.mubr.f32.gmra.mxu0 %v2357
    %v2425 = vpop.f32.mrf.mxu0
    %v2426 = vadd.f32 %v76, %v2425
    %v2427 = vpop.f32.mrf.mxu0
    %2428 = vdwg.mxu0
    %2429 = vmatprep.subr.mxu0 0.0
    %2430 = vmatpush1.msra.mxu0 0.0
    %2431 = vmatprep.subr.mxu0 0.0
    %2432 = vmatpush1.msra.mxu0 0.0
    %2433 = vmatprep.subr.mxu0 0.0
    %2434 = vmatpush1.msra.mxu0 0.0
    %2435 = vmatprep.subr.mxu0 0.0
    %2436 = vmatpush1.msra.mxu0 0.0
    %2437 = vmatprep.subr.mxu0 0.0
    %2438 = vmatpush1.msra.mxu0 0.0
    %2439 = vmatprep.subr.mxu0 0.0
    %2440 = vmatpush1.msra.mxu0 0.0
    %2441 = vmatprep.subr.mxu0 0.0
    %2442 = vmatpush1.msra.mxu0 0.0
    %2443 = vmatprep.subr.mxu0 0.0
    %2444 = vmatpush1.msra.mxu0 0.0
    %2445 = vmatprep.subr.mxu0 0.0
    %2446 = vmatpush1.msra.mxu0 0.0
    %2447 = vmatprep.subr.mxu0 0.0
    %2448 = vmatpush1.msra.mxu0 0.0
    %2449 = vmatprep.subr.mxu0 0.0
    %2450 = vmatpush1.msra.mxu0 0.0
    %2451 = vmatprep.subr.mxu0 0.0
    %2452 = vmatpush1.msra.mxu0 0.0
    %2453 = vmatprep.subr.mxu0 0.0
    %2454 = vmatpush1.msra.mxu0 %v65
    %2455 = vmatprep.subr.mxu0 0.0
    %2456 = vmatpush1.msra.mxu0 %v64
    %2457 = vmatprep.subr.mxu0 0.0
    %2458 = vmatpush1.msra.mxu0 %v63
    %2459 = vmatprep.subr.mxu0 0.0
    %2460 = vmatpush1.msra.mxu0 %v62
    %2461 = vmatprep.subr.mxu0 0.0
    %2462 = vmatpush2.msra.mxu0 0.0
    %2463 = vmatprep.subr.mxu0 0.0
    %2464 = vmatpush2.msra.mxu0 0.0
    %2465 = vmatprep.subr.mxu0 0.0
    %2466 = vmatpush2.msra.mxu0 0.0
    %2467 = vmatprep.subr.mxu0 0.0
    %2468 = vmatpush2.msra.mxu0 0.0
    %2469 = vmatprep.subr.mxu0 0.0
    %2470 = vmatpush2.msra.mxu0 0.0
    %2471 = vmatprep.subr.mxu0 0.0
    %2472 = vmatpush2.msra.mxu0 0.0
    %2473 = vmatprep.subr.mxu0 0.0
    %2474 = vmatpush2.msra.mxu0 0.0
    %2475 = vmatprep.subr.mxu0 0.0
    %2476 = vmatpush2.msra.mxu0 0.0
    %2477 = vmatprep.subr.mxu0 0.0
    %2478 = vmatpush2.msra.mxu0 0.0
    %2479 = vmatprep.subr.mxu0 0.0
    %2480 = vmatpush2.msra.mxu0 0.0
    %2481 = vmatprep.subr.mxu0 0.0
    %2482 = vmatpush2.msra.mxu0 0.0
    %2483 = vmatprep.subr.mxu0 0.0
    %2484 = vmatpush2.msra.mxu0 0.0
    %2485 = vmatprep.subr.mxu0 0.0
    %2486 = vmatpush2.msra.mxu0 0.0
    %2487 = vmatprep.subr.mxu0 0.0
    %2488 = vmatpush2.msra.mxu0 0.0
    %2489 = vmatprep.subr.mxu0 0.0
    %2490 = vmatpush2.msra.mxu0 0.0
    %2491 = vmatprep.subr.mxu0 0.0
    %2492 = vmatpush2.msra.mxu0 0.0
    %2493 = vmatprep.mubr.f32.mxu0 0.0
    %2494 = vmatmul.mubr.f32.gmra.mxu0 %v2023
    %v2495 = vpop.f32.mrf.mxu0
    %v2496 = vadd.f32 %v77, %v2495
    %v2497 = vpop.f32.mrf.mxu0
    %2498 = vdwg.mxu0
    %v2499 = vadd.f32 %v2426, %v2496
    %v2500 = vxor.u32 %v2499, 2147483648
    %v2501 = vmul.f32 %v2500, 1.442695
    %v2502 = vpow.pop %v2501
    %v2503 = vadd.f32 %v2502, 1.0
    %v2504 = vrcp.pop %v2503
    %v2505 = vmul.f32 1.0, %v2504
    %2507 = vrot.lane.b32.xlu0 %v2496, 64
    %v2508 = vpop.permute.xlu0 %2507
    %v2510 = vmul.f32 %v2505, %v2508
    %2512 = vrot.lane.b32.xlu0 %v2510, 64
    %v2513 = vpop.permute.xlu0 %2512
    %v2515 = vadd.f32 %v2426, %v2513
    %v2516 = vtanh.pop %v2515
    %v2517 = vsub.f32 1.0, %v2505
    %2519 = vrot.lane.b32.xlu0 %v2516, 96
    %v2520 = vpop.permute.xlu0 %2519
    %v2522 = vmul.f32 %v2517, %v2520
    %v2523 = vmul.f32 %v2505, %v2019
    %v2524 = vadd.f32 %v2522, %v2523
    %2526 = vrot.lane.b32.xlu0 %v2524, 96
    %v2527 = vpop.permute.xlu0 %2526
    %v2528 = vsel %vm91, %v2527, 0
    %2530 = vmatprep.subr.mxu0 0.0
    %2531 = vmatpush1.msra.mxu0 0.0
    %2532 = vmatprep.subr.mxu0 0.0
    %2533 = vmatpush1.msra.mxu0 0.0
    %2534 = vmatprep.subr.mxu0 0.0
    %2535 = vmatpush1.msra.mxu0 0.0
    %2536 = vmatprep.subr.mxu0 0.0
    %2537 = vmatpush1.msra.mxu0 0.0
    %2538 = vmatprep.subr.mxu0 0.0
    %2539 = vmatpush1.msra.mxu0 0.0
    %2540 = vmatprep.subr.mxu0 0.0
    %2541 = vmatpush1.msra.mxu0 0.0
    %2542 = vmatprep.subr.mxu0 0.0
    %2543 = vmatpush1.msra.mxu0 0.0
    %2544 = vmatprep.subr.mxu0 0.0
    %2545 = vmatpush1.msra.mxu0 0.0
    %2546 = vmatprep.subr.mxu0 0.0
    %2547 = vmatpush1.msra.mxu0 0.0
    %2548 = vmatprep.subr.mxu0 0.0
    %2549 = vmatpush1.msra.mxu0 0.0
    %2550 = vmatprep.subr.mxu0 0.0
    %2551 = vmatpush1.msra.mxu0 0.0
    %2552 = vmatprep.subr.mxu0 0.0
    %2553 = vmatpush1.msra.mxu0 0.0
    %2554 = vmatprep.subr.mxu0 0.0
    %2555 = vmatpush1.msra.mxu0 %v69
    %2556 = vmatprep.subr.mxu0 0.0
    %2557 = vmatpush1.msra.mxu0 %v68
    %2558 = vmatprep.subr.mxu0 0.0
    %2559 = vmatpush1.msra.mxu0 %v67
    %2560 = vmatprep.subr.mxu0 0.0
    %2561 = vmatpush1.msra.mxu0 %v66
    %2562 = vmatprep.subr.mxu0 0.0
    %2563 = vmatpush2.msra.mxu0 0.0
    %2564 = vmatprep.subr.mxu0 0.0
    %2565 = vmatpush2.msra.mxu0 0.0
    %2566 = vmatprep.subr.mxu0 0.0
    %2567 = vmatpush2.msra.mxu0 0.0
    %2568 = vmatprep.subr.mxu0 0.0
    %2569 = vmatpush2.msra.mxu0 0.0
    %2570 = vmatprep.subr.mxu0 0.0
    %2571 = vmatpush2.msra.mxu0 0.0
    %2572 = vmatprep.subr.mxu0 0.0
    %2573 = vmatpush2.msra.mxu0 0.0
    %2574 = vmatprep.subr.mxu0 0.0
    %2575 = vmatpush2.msra.mxu0 0.0
    %2576 = vmatprep.subr.mxu0 0.0
    %2577 = vmatpush2.msra.mxu0 0.0
    %2578 = vmatprep.subr.mxu0 0.0
    %2579 = vmatpush2.msra.mxu0 0.0
    %2580 = vmatprep.subr.mxu0 0.0
    %2581 = vmatpush2.msra.mxu0 0.0
    %2582 = vmatprep.subr.mxu0 0.0
    %2583 = vmatpush2.msra.mxu0 0.0
    %2584 = vmatprep.subr.mxu0 0.0
    %2585 = vmatpush2.msra.mxu0 0.0
    %2586 = vmatprep.subr.mxu0 0.0
    %2587 = vmatpush2.msra.mxu0 0.0
    %2588 = vmatprep.subr.mxu0 0.0
    %2589 = vmatpush2.msra.mxu0 0.0
    %2590 = vmatprep.subr.mxu0 0.0
    %2591 = vmatpush2.msra.mxu0 0.0
    %2592 = vmatprep.subr.mxu0 0.0
    %2593 = vmatpush2.msra.mxu0 0.0
    %2594 = vmatprep.mubr.f32.mxu0 0.0
    %2595 = vmatmul.mubr.f32.gmra.mxu0 %v2528
    %v2596 = vpop.f32.mrf.mxu0
    %v2597 = vadd.f32 %v78, %v2596
    %v2598 = vpop.f32.mrf.mxu0
    %2599 = vdwg.mxu0
    %v2600 = vsel %vm167, %v2597, -inf
    %2601 = vmax.xlane.f32.xlu0 %v2600
    %v2602 = vpop.xlane.xlu0 %2601
    %v2603 = vsub.f32 %v2597, %v2602
    %v2604 = vmul.f32 %v2603, 1.442695
    %v2605 = vpow.pop %v2604
    %v2606 = vsel %vm167, %v2605, 0.0
    %2607 = vadd.xlane.f32.xlu0 %v2606
    %v2608 = vpop.xlane.xlu0 %2607
    %v2609 = vlog2.pop %v2608
    %v2610 = vmul.f32 %v2609, 0.6931472
    %v2611 = vadd.f32 %v2610, %v2602
    %v2612 = vsub.f32 %v2597, %v2611
    %2613 = vrot.lane.b32.xlu0 %v2203, 64
    %v2614 = vpop.permute.xlu0 %2613
    %v2616 = vsel %vm91, %v2612, %v2524
    %v2617 = vsel %vm93, %v2616, %v2614
    %v2618 = vsel %vm597, %v2617, 0.0
    %s2619 = sld [smem:[#allocation2 + $0x5]]
    %s2620 = scalar_lea.vmem %s1, %s2619
    %v2621 = vld [vmem:[%s2620] sm:$0x1]
    %v2622 = vsel %vm91, %v2621, %v2524
    %v2624 = vsel %vm93, %v2622, 0
    %2626 = vmatprep.subr.mxu0 0.0
    %2627 = vmatpush1.msra.mxu0 0.0
    %2628 = vmatprep.subr.mxu0 0.0
    %2629 = vmatpush1.msra.mxu0 0.0
    %2630 = vmatprep.subr.mxu0 0.0
    %2631 = vmatpush1.msra.mxu0 0.0
    %2632 = vmatprep.subr.mxu0 0.0
    %2633 = vmatpush1.msra.mxu0 0.0
    %2634 = vmatprep.subr.mxu0 0.0
    %2635 = vmatpush1.msra.mxu0 0.0
    %2636 = vmatprep.subr.mxu0 0.0
    %2637 = vmatpush1.msra.mxu0 0.0
    %2638 = vmatprep.subr.mxu0 0.0
    %2639 = vmatpush1.msra.mxu0 0.0
    %2640 = vmatprep.subr.mxu0 0.0
    %2641 = vmatpush1.msra.mxu0 0.0
    %2642 = vmatprep.subr.mxu0 0.0
    %2643 = vmatpush1.msra.mxu0 %v49
    %2644 = vmatprep.subr.mxu0 0.0
    %2645 = vmatpush1.msra.mxu0 %v48
    %2646 = vmatprep.subr.mxu0 0.0
    %2647 = vmatpush1.msra.mxu0 %v47
    %2648 = vmatprep.subr.mxu0 0.0
    %2649 = vmatpush1.msra.mxu0 %v46
    %2650 = vmatprep.subr.mxu0 0.0
    %2651 = vmatpush1.msra.mxu0 %v45
    %2652 = vmatprep.subr.mxu0 0.0
    %2653 = vmatpush1.msra.mxu0 %v44
    %2654 = vmatprep.subr.mxu0 0.0
    %2655 = vmatpush1.msra.mxu0 %v43
    %2656 = vmatprep.subr.mxu0 0.0
    %2657 = vmatpush1.msra.mxu0 %v42
    %2658 = vmatprep.subr.mxu0 0.0
    %2659 = vmatpush2.msra.mxu0 0.0
    %2660 = vmatprep.subr.mxu0 0.0
    %2661 = vmatpush2.msra.mxu0 0.0
    %2662 = vmatprep.subr.mxu0 0.0
    %2663 = vmatpush2.msra.mxu0 0.0
    %2664 = vmatprep.subr.mxu0 0.0
    %2665 = vmatpush2.msra.mxu0 0.0
    %2666 = vmatprep.subr.mxu0 0.0
    %2667 = vmatpush2.msra.mxu0 0.0
    %2668 = vmatprep.subr.mxu0 0.0
    %2669 = vmatpush2.msra.mxu0 0.0
    %2670 = vmatprep.subr.mxu0 0.0
    %2671 = vmatpush2.msra.mxu0 0.0
    %2672 = vmatprep.subr.mxu0 0.0
    %2673 = vmatpush2.msra.mxu0 0.0
    %2674 = vmatprep.subr.mxu0 0.0
    %2675 = vmatpush2.msra.mxu0 0.0
    %2676 = vmatprep.subr.mxu0 0.0
    %2677 = vmatpush2.msra.mxu0 0.0
    %2678 = vmatprep.subr.mxu0 0.0
    %2679 = vmatpush2.msra.mxu0 0.0
    %2680 = vmatprep.subr.mxu0 0.0
    %2681 = vmatpush2.msra.mxu0 0.0
    %2682 = vmatprep.subr.mxu0 0.0
    %2683 = vmatpush2.msra.mxu0 0.0
    %2684 = vmatprep.subr.mxu0 0.0
    %2685 = vmatpush2.msra.mxu0 0.0
    %2686 = vmatprep.subr.mxu0 0.0
    %2687 = vmatpush2.msra.mxu0 0.0
    %2688 = vmatprep.subr.mxu0 0.0
    %2689 = vmatpush2.msra.mxu0 0.0
    %2690 = vmatprep.mubr.f32.mxu0 0.0
    %2691 = vmatmul.mubr.f32.gmra.mxu0 %v2624
    %v2692 = vpop.f32.mrf.mxu0
    %v2693 = vadd.f32 %v74, %v2692
    %v2694 = vpop.f32.mrf.mxu0
    %2695 = vdwg.mxu0
    %v2696 = vsel %vm167, %v2693, -inf
    %2697 = vmax.xlane.f32.xlu0 %v2696
    %v2698 = vpop.xlane.xlu0 %2697
    %v2699 = vsub.f32 %v2693, %v2698
    %v2700 = vmul.f32 %v2699, 1.442695
    %v2701 = vpow.pop %v2700
    %v2702 = vsel %vm167, %v2701, 0.0
    %2703 = vadd.xlane.f32.xlu0 %v2702
    %v2704 = vpop.xlane.xlu0 %2703
    %v2705 = vlog2.pop %v2704
    %v2706 = vmul.f32 %v2705, 0.6931472
    %v2707 = vadd.f32 %v2706, %v2698
    %v2708 = vsub.f32 %v2693, %v2707
    %v2710 = vsel %vm91, %v2708, 0
    %2712 = vmatprep.subr.mxu0 0.0
    %2713 = vmatpush1.msra.mxu0 0.0
    %2714 = vmatprep.subr.mxu0 0.0
    %2715 = vmatpush1.msra.mxu0 0.0
    %2716 = vmatprep.subr.mxu0 0.0
    %2717 = vmatpush1.msra.mxu0 0.0
    %2718 = vmatprep.subr.mxu0 0.0
    %2719 = vmatpush1.msra.mxu0 0.0
    %2720 = vmatprep.subr.mxu0 0.0
    %2721 = vmatpush1.msra.mxu0 0.0
    %2722 = vmatprep.subr.mxu0 0.0
    %2723 = vmatpush1.msra.mxu0 0.0
    %2724 = vmatprep.subr.mxu0 0.0
    %2725 = vmatpush1.msra.mxu0 0.0
    %2726 = vmatprep.subr.mxu0 0.0
    %2727 = vmatpush1.msra.mxu0 0.0
    %2728 = vmatprep.subr.mxu0 0.0
    %2729 = vmatpush1.msra.mxu0 0.0
    %2730 = vmatprep.subr.mxu0 0.0
    %2731 = vmatpush1.msra.mxu0 0.0
    %2732 = vmatprep.subr.mxu0 0.0
    %2733 = vmatpush1.msra.mxu0 0.0
    %2734 = vmatprep.subr.mxu0 0.0
    %2735 = vmatpush1.msra.mxu0 0.0
    %2736 = vmatprep.subr.mxu0 0.0
    %2737 = vmatpush1.msra.mxu0 %v73
    %2738 = vmatprep.subr.mxu0 0.0
    %2739 = vmatpush1.msra.mxu0 %v72
    %2740 = vmatprep.subr.mxu0 0.0
    %2741 = vmatpush1.msra.mxu0 %v71
    %2742 = vmatprep.subr.mxu0 0.0
    %2743 = vmatpush1.msra.mxu0 %v70
    %2744 = vmatprep.subr.mxu0 0.0
    %2745 = vmatpush2.msra.mxu0 0.0
    %2746 = vmatprep.subr.mxu0 0.0
    %2747 = vmatpush2.msra.mxu0 0.0
    %2748 = vmatprep.subr.mxu0 0.0
    %2749 = vmatpush2.msra.mxu0 0.0
    %2750 = vmatprep.subr.mxu0 0.0
    %2751 = vmatpush2.msra.mxu0 0.0
    %2752 = vmatprep.subr.mxu0 0.0
    %2753 = vmatpush2.msra.mxu0 0.0
    %2754 = vmatprep.subr.mxu0 0.0
    %2755 = vmatpush2.msra.mxu0 0.0
    %2756 = vmatprep.subr.mxu0 0.0
    %2757 = vmatpush2.msra.mxu0 0.0
    %2758 = vmatprep.subr.mxu0 0.0
    %2759 = vmatpush2.msra.mxu0 0.0
    %2760 = vmatprep.subr.mxu0 0.0
    %2761 = vmatpush2.msra.mxu0 0.0
    %2762 = vmatprep.subr.mxu0 0.0
    %2763 = vmatpush2.msra.mxu0 0.0
    %2764 = vmatprep.subr.mxu0 0.0
    %2765 = vmatpush2.msra.mxu0 0.0
    %2766 = vmatprep.subr.mxu0 0.0
    %2767 = vmatpush2.msra.mxu0 0.0
    %2768 = vmatprep.subr.mxu0 0.0
    %2769 = vmatpush2.msra.mxu0 0.0
    %2770 = vmatprep.subr.mxu0 0.0
    %2771 = vmatpush2.msra.mxu0 0.0
    %2772 = vmatprep.subr.mxu0 0.0
    %2773 = vmatpush2.msra.mxu0 0.0
    %2774 = vmatprep.subr.mxu0 0.0
    %2775 = vmatpush2.msra.mxu0 0.0
    %2776 = vmatprep.mubr.f32.mxu0 0.0
    %2777 = vmatmul.mubr.f32.gmra.mxu0 %v2710
    %v2778 = vpop.f32.mrf.mxu0
    %v2779 = vadd.f32 0.0, %v2778
    %v2780 = vpop.f32.mrf.mxu0
    %2781 = vdwg.mxu0
    %2783 = vrot.lane.b32.xlu0 %v2779, 32
    %v2784 = vpop.permute.xlu0 %2783
    %v2786 = vsel %vm91, %v2621, %v2784
    %v2788 = vsel %vm93, %v2786, 0
    %2790 = vmatprep.subr.mxu0 0.0
    %2791 = vmatpush1.msra.mxu0 0.0
    %2792 = vmatprep.subr.mxu0 0.0
    %2793 = vmatpush1.msra.mxu0 0.0
    %2794 = vmatprep.subr.mxu0 0.0
    %2795 = vmatpush1.msra.mxu0 0.0
    %2796 = vmatprep.subr.mxu0 0.0
    %2797 = vmatpush1.msra.mxu0 0.0
    %2798 = vmatprep.subr.mxu0 0.0
    %2799 = vmatpush1.msra.mxu0 0.0
    %2800 = vmatprep.subr.mxu0 0.0
    %2801 = vmatpush1.msra.mxu0 0.0
    %2802 = vmatprep.subr.mxu0 0.0
    %2803 = vmatpush1.msra.mxu0 0.0
    %2804 = vmatprep.subr.mxu0 0.0
    %2805 = vmatpush1.msra.mxu0 0.0
    %2806 = vmatprep.subr.mxu0 0.0
    %2807 = vmatpush1.msra.mxu0 %v57
    %2808 = vmatprep.subr.mxu0 0.0
    %2809 = vmatpush1.msra.mxu0 %v56
    %2810 = vmatprep.subr.mxu0 0.0
    %2811 = vmatpush1.msra.mxu0 %v55
    %2812 = vmatprep.subr.mxu0 0.0
    %2813 = vmatpush1.msra.mxu0 %v54
    %2814 = vmatprep.subr.mxu0 0.0
    %2815 = vmatpush1.msra.mxu0 %v53
    %2816 = vmatprep.subr.mxu0 0.0
    %2817 = vmatpush1.msra.mxu0 %v52
    %2818 = vmatprep.subr.mxu0 0.0
    %2819 = vmatpush1.msra.mxu0 %v51
    %2820 = vmatprep.subr.mxu0 0.0
    %2821 = vmatpush1.msra.mxu0 %v50
    %2822 = vmatprep.subr.mxu0 0.0
    %2823 = vmatpush2.msra.mxu0 0.0
    %2824 = vmatprep.subr.mxu0 0.0
    %2825 = vmatpush2.msra.mxu0 0.0
    %2826 = vmatprep.subr.mxu0 0.0
    %2827 = vmatpush2.msra.mxu0 0.0
    %2828 = vmatprep.subr.mxu0 0.0
    %2829 = vmatpush2.msra.mxu0 0.0
    %2830 = vmatprep.subr.mxu0 0.0
    %2831 = vmatpush2.msra.mxu0 0.0
    %2832 = vmatprep.subr.mxu0 0.0
    %2833 = vmatpush2.msra.mxu0 0.0
    %2834 = vmatprep.subr.mxu0 0.0
    %2835 = vmatpush2.msra.mxu0 0.0
    %2836 = vmatprep.subr.mxu0 0.0
    %2837 = vmatpush2.msra.mxu0 0.0
    %2838 = vmatprep.subr.mxu0 0.0
    %2839 = vmatpush2.msra.mxu0 0.0
    %2840 = vmatprep.subr.mxu0 0.0
    %2841 = vmatpush2.msra.mxu0 0.0
    %2842 = vmatprep.subr.mxu0 0.0
    %2843 = vmatpush2.msra.mxu0 0.0
    %2844 = vmatprep.subr.mxu0 0.0
    %2845 = vmatpush2.msra.mxu0 0.0
    %2846 = vmatprep.subr.mxu0 0.0
    %2847 = vmatpush2.msra.mxu0 0.0
    %2848 = vmatprep.subr.mxu0 0.0
    %2849 = vmatpush2.msra.mxu0 0.0
    %2850 = vmatprep.subr.mxu0 0.0
    %2851 = vmatpush2.msra.mxu0 0.0
    %2852 = vmatprep.subr.mxu0 0.0
    %2853 = vmatpush2.msra.mxu0 0.0
    %2854 = vmatprep.mubr.f32.mxu0 0.0
    %2855 = vmatmul.mubr.f32.gmra.mxu0 %v2788
    %v2856 = vpop.f32.mrf.mxu0
    %v2857 = vadd.f32 %v75, %v2856
    %v2858 = vpop.f32.mrf.mxu0
    %2859 = vdwg.mxu0
    %v2860 = vmax.f32 %v2857, 0.0
    %v2862 = vsel %vm91, %v2860, 0
    %2864 = vmatprep.subr.mxu0 0.0
    %2865 = vmatpush1.msra.mxu0 0.0
    %2866 = vmatprep.subr.mxu0 0.0
    %2867 = vmatpush1.msra.mxu0 0.0
    %2868 = vmatprep.subr.mxu0 0.0
    %2869 = vmatpush1.msra.mxu0 0.0
    %2870 = vmatprep.subr.mxu0 0.0
    %2871 = vmatpush1.msra.mxu0 0.0
    %2872 = vmatprep.subr.mxu0 0.0
    %2873 = vmatpush1.msra.mxu0 0.0
    %2874 = vmatprep.subr.mxu0 0.0
    %2875 = vmatpush1.msra.mxu0 0.0
    %2876 = vmatprep.subr.mxu0 0.0
    %2877 = vmatpush1.msra.mxu0 0.0
    %2878 = vmatprep.subr.mxu0 0.0
    %2879 = vmatpush1.msra.mxu0 0.0
    %2880 = vmatprep.subr.mxu0 0.0
    %2881 = vmatpush1.msra.mxu0 0.0
    %2882 = vmatprep.subr.mxu0 0.0
    %2883 = vmatpush1.msra.mxu0 0.0
    %2884 = vmatprep.subr.mxu0 0.0
    %2885 = vmatpush1.msra.mxu0 0.0
    %2886 = vmatprep.subr.mxu0 0.0
    %2887 = vmatpush1.msra.mxu0 0.0
    %2888 = vmatprep.subr.mxu0 0.0
    %2889 = vmatpush1.msra.mxu0 %v61
    %2890 = vmatprep.subr.mxu0 0.0
    %2891 = vmatpush1.msra.mxu0 %v60
    %2892 = vmatprep.subr.mxu0 0.0
    %2893 = vmatpush1.msra.mxu0 %v59
    %2894 = vmatprep.subr.mxu0 0.0
    %2895 = vmatpush1.msra.mxu0 %v58
    %2896 = vmatprep.subr.mxu0 0.0
    %2897 = vmatpush2.msra.mxu0 0.0
    %2898 = vmatprep.subr.mxu0 0.0
    %2899 = vmatpush2.msra.mxu0 0.0
    %2900 = vmatprep.subr.mxu0 0.0
    %2901 = vmatpush2.msra.mxu0 0.0
    %2902 = vmatprep.subr.mxu0 0.0
    %2903 = vmatpush2.msra.mxu0 0.0
    %2904 = vmatprep.subr.mxu0 0.0
    %2905 = vmatpush2.msra.mxu0 0.0
    %2906 = vmatprep.subr.mxu0 0.0
    %2907 = vmatpush2.msra.mxu0 0.0
    %2908 = vmatprep.subr.mxu0 0.0
    %2909 = vmatpush2.msra.mxu0 0.0
    %2910 = vmatprep.subr.mxu0 0.0
    %2911 = vmatpush2.msra.mxu0 0.0
    %2912 = vmatprep.subr.mxu0 0.0
    %2913 = vmatpush2.msra.mxu0 0.0
    %2914 = vmatprep.subr.mxu0 0.0
    %2915 = vmatpush2.msra.mxu0 0.0
    %2916 = vmatprep.subr.mxu0 0.0
    %2917 = vmatpush2.msra.mxu0 0.0
    %2918 = vmatprep.subr.mxu0 0.0
    %2919 = vmatpush2.msra.mxu0 0.0
    %2920 = vmatprep.subr.mxu0 0.0
    %2921 = vmatpush2.msra.mxu0 0.0
    %2922 = vmatprep.subr.mxu0 0.0
    %2923 = vmatpush2.msra.mxu0 0.0
    %2924 = vmatprep.subr.mxu0 0.0
    %2925 = vmatpush2.msra.mxu0 0.0
    %2926 = vmatprep.subr.mxu0 0.0
    %2927 = vmatpush2.msra.mxu0 0.0
    %2928 = vmatprep.mubr.f32.mxu0 0.0
    %2929 = vmatmul.mubr.f32.gmra.mxu0 %v2862
    %v2930 = vpop.f32.mrf.mxu0
    %v2931 = vadd.f32 %v76, %v2930
    %v2932 = vpop.f32.mrf.mxu0
    %2933 = vdwg.mxu0
    %2934 = vmatprep.subr.mxu0 0.0
    %2935 = vmatpush1.msra.mxu0 0.0
    %2936 = vmatprep.subr.mxu0 0.0
    %2937 = vmatpush1.msra.mxu0 0.0
    %2938 = vmatprep.subr.mxu0 0.0
    %2939 = vmatpush1.msra.mxu0 0.0
    %2940 = vmatprep.subr.mxu0 0.0
    %2941 = vmatpush1.msra.mxu0 0.0
    %2942 = vmatprep.subr.mxu0 0.0
    %2943 = vmatpush1.msra.mxu0 0.0
    %2944 = vmatprep.subr.mxu0 0.0
    %2945 = vmatpush1.msra.mxu0 0.0
    %2946 = vmatprep.subr.mxu0 0.0
    %2947 = vmatpush1.msra.mxu0 0.0
    %2948 = vmatprep.subr.mxu0 0.0
    %2949 = vmatpush1.msra.mxu0 0.0
    %2950 = vmatprep.subr.mxu0 0.0
    %2951 = vmatpush1.msra.mxu0 0.0
    %2952 = vmatprep.subr.mxu0 0.0
    %2953 = vmatpush1.msra.mxu0 0.0
    %2954 = vmatprep.subr.mxu0 0.0
    %2955 = vmatpush1.msra.mxu0 0.0
    %2956 = vmatprep.subr.mxu0 0.0
    %2957 = vmatpush1.msra.mxu0 0.0
    %2958 = vmatprep.subr.mxu0 0.0
    %2959 = vmatpush1.msra.mxu0 %v65
    %2960 = vmatprep.subr.mxu0 0.0
    %2961 = vmatpush1.msra.mxu0 %v64
    %2962 = vmatprep.subr.mxu0 0.0
    %2963 = vmatpush1.msra.mxu0 %v63
    %2964 = vmatprep.subr.mxu0 0.0
    %2965 = vmatpush1.msra.mxu0 %v62
    %2966 = vmatprep.subr.mxu0 0.0
    %2967 = vmatpush2.msra.mxu0 0.0
    %2968 = vmatprep.subr.mxu0 0.0
    %2969 = vmatpush2.msra.mxu0 0.0
    %2970 = vmatprep.subr.mxu0 0.0
    %2971 = vmatpush2.msra.mxu0 0.0
    %2972 = vmatprep.subr.mxu0 0.0
    %2973 = vmatpush2.msra.mxu0 0.0
    %2974 = vmatprep.subr.mxu0 0.0
    %2975 = vmatpush2.msra.mxu0 0.0
    %2976 = vmatprep.subr.mxu0 0.0
    %2977 = vmatpush2.msra.mxu0 0.0
    %2978 = vmatprep.subr.mxu0 0.0
    %2979 = vmatpush2.msra.mxu0 0.0
    %2980 = vmatprep.subr.mxu0 0.0
    %2981 = vmatpush2.msra.mxu0 0.0
    %2982 = vmatprep.subr.mxu0 0.0
    %2983 = vmatpush2.msra.mxu0 0.0
    %2984 = vmatprep.subr.mxu0 0.0
    %2985 = vmatpush2.msra.mxu0 0.0
    %2986 = vmatprep.subr.mxu0 0.0
    %2987 = vmatpush2.msra.mxu0 0.0
    %2988 = vmatprep.subr.mxu0 0.0
    %2989 = vmatpush2.msra.mxu0 0.0
    %2990 = vmatprep.subr.mxu0 0.0
    %2991 = vmatpush2.msra.mxu0 0.0
    %2992 = vmatprep.subr.mxu0 0.0
    %2993 = vmatpush2.msra.mxu0 0.0
    %2994 = vmatprep.subr.mxu0 0.0
    %2995 = vmatpush2.msra.mxu0 0.0
    %2996 = vmatprep.subr.mxu0 0.0
    %2997 = vmatpush2.msra.mxu0 0.0
    %2998 = vmatprep.mubr.f32.mxu0 0.0
    %2999 = vmatmul.mubr.f32.gmra.mxu0 %v2528
    %v3000 = vpop.f32.mrf.mxu0
    %v3001 = vadd.f32 %v77, %v3000
    %v3002 = vpop.f32.mrf.mxu0
    %3003 = vdwg.mxu0
    %v3004 = vadd.f32 %v2931, %v3001
    %v3005 = vxor.u32 %v3004, 2147483648
    %v3006 = vmul.f32 %v3005, 1.442695
    %v3007 = vpow.pop %v3006
    %v3008 = vadd.f32 %v3007, 1.0
    %v3009 = vrcp.pop %v3008
    %v3010 = vmul.f32 1.0, %v3009
    %3012 = vrot.lane.b32.xlu0 %v3001, 64
    %v3013 = vpop.permute.xlu0 %3012
    %v3015 = vmul.f32 %v3010, %v3013
    %3017 = vrot.lane.b32.xlu0 %v3015, 64
    %v3018 = vpop.permute.xlu0 %3017
    %v3020 = vadd.f32 %v2931, %v3018
    %v3021 = vtanh.pop %v3020
    %v3022 = vsub.f32 1.0, %v3010
    %3024 = vrot.lane.b32.xlu0 %v3021, 96
    %v3025 = vpop.permute.xlu0 %3024
    %v3027 = vmul.f32 %v3022, %v3025
    %v3028 = vmul.f32 %v3010, %v2524
    %v3029 = vadd.f32 %v3027, %v3028
    %3031 = vrot.lane.b32.xlu0 %v3029, 96
    %v3032 = vpop.permute.xlu0 %3031
    %v3033 = vsel %vm91, %v3032, 0
    %3035 = vmatprep.subr.mxu0 0.0
    %3036 = vmatpush1.msra.mxu0 0.0
    %3037 = vmatprep.subr.mxu0 0.0
    %3038 = vmatpush1.msra.mxu0 0.0
    %3039 = vmatprep.subr.mxu0 0.0
    %3040 = vmatpush1.msra.mxu0 0.0
    %3041 = vmatprep.subr.mxu0 0.0
    %3042 = vmatpush1.msra.mxu0 0.0
    %3043 = vmatprep.subr.mxu0 0.0
    %3044 = vmatpush1.msra.mxu0 0.0
    %3045 = vmatprep.subr.mxu0 0.0
    %3046 = vmatpush1.msra.mxu0 0.0
    %3047 = vmatprep.subr.mxu0 0.0
    %3048 = vmatpush1.msra.mxu0 0.0
    %3049 = vmatprep.subr.mxu0 0.0
    %3050 = vmatpush1.msra.mxu0 0.0
    %3051 = vmatprep.subr.mxu0 0.0
    %3052 = vmatpush1.msra.mxu0 0.0
    %3053 = vmatprep.subr.mxu0 0.0
    %3054 = vmatpush1.msra.mxu0 0.0
    %3055 = vmatprep.subr.mxu0 0.0
    %3056 = vmatpush1.msra.mxu0 0.0
    %3057 = vmatprep.subr.mxu0 0.0
    %3058 = vmatpush1.msra.mxu0 0.0
    %3059 = vmatprep.subr.mxu0 0.0
    %3060 = vmatpush1.msra.mxu0 %v69
    %3061 = vmatprep.subr.mxu0 0.0
    %3062 = vmatpush1.msra.mxu0 %v68
    %3063 = vmatprep.subr.mxu0 0.0
    %3064 = vmatpush1.msra.mxu0 %v67
    %3065 = vmatprep.subr.mxu0 0.0
    %3066 = vmatpush1.msra.mxu0 %v66
    %3067 = vmatprep.subr.mxu0 0.0
    %3068 = vmatpush2.msra.mxu0 0.0
    %3069 = vmatprep.subr.mxu0 0.0
    %3070 = vmatpush2.msra.mxu0 0.0
    %3071 = vmatprep.subr.mxu0 0.0
    %3072 = vmatpush2.msra.mxu0 0.0
    %3073 = vmatprep.subr.mxu0 0.0
    %3074 = vmatpush2.msra.mxu0 0.0
    %3075 = vmatprep.subr.mxu0 0.0
    %3076 = vmatpush2.msra.mxu0 0.0
    %3077 = vmatprep.subr.mxu0 0.0
    %3078 = vmatpush2.msra.mxu0 0.0
    %3079 = vmatprep.subr.mxu0 0.0
    %3080 = vmatpush2.msra.mxu0 0.0
    %3081 = vmatprep.subr.mxu0 0.0
    %3082 = vmatpush2.msra.mxu0 0.0
    %3083 = vmatprep.subr.mxu0 0.0
    %3084 = vmatpush2.msra.mxu0 0.0
    %3085 = vmatprep.subr.mxu0 0.0
    %3086 = vmatpush2.msra.mxu0 0.0
    %3087 = vmatprep.subr.mxu0 0.0
    %3088 = vmatpush2.msra.mxu0 0.0
    %3089 = vmatprep.subr.mxu0 0.0
    %3090 = vmatpush2.msra.mxu0 0.0
    %3091 = vmatprep.subr.mxu0 0.0
    %3092 = vmatpush2.msra.mxu0 0.0
    %3093 = vmatprep.subr.mxu0 0.0
    %3094 = vmatpush2.msra.mxu0 0.0
    %3095 = vmatprep.subr.mxu0 0.0
    %3096 = vmatpush2.msra.mxu0 0.0
    %3097 = vmatprep.subr.mxu0 0.0
    %3098 = vmatpush2.msra.mxu0 0.0
    %3099 = vmatprep.mubr.f32.mxu0 0.0
    %3100 = vmatmul.mubr.f32.gmra.mxu0 %v3033
    %v3101 = vpop.f32.mrf.mxu0
    %v3102 = vadd.f32 %v78, %v3101
    %v3103 = vpop.f32.mrf.mxu0
    %3104 = vdwg.mxu0
    %v3105 = vsel %vm167, %v3102, -inf
    %3106 = vmax.xlane.f32.xlu0 %v3105
    %v3107 = vpop.xlane.xlu0 %3106
    %v3108 = vsub.f32 %v3102, %v3107
    %v3109 = vmul.f32 %v3108, 1.442695
    %v3110 = vpow.pop %v3109
    %v3111 = vsel %vm167, %v3110, 0.0
    %3112 = vadd.xlane.f32.xlu0 %v3111
    %v3113 = vpop.xlane.xlu0 %3112
    %v3114 = vlog2.pop %v3113
    %v3115 = vmul.f32 %v3114, 0.6931472
    %v3116 = vadd.f32 %v3115, %v3107
    %v3117 = vsub.f32 %v3102, %v3116
    %3118 = vrot.lane.b32.xlu0 %v2708, 64
    %v3119 = vpop.permute.xlu0 %3118
    %v3121 = vsel %vm91, %v3117, %v3029
    %v3122 = vsel %vm93, %v3121, %v3119
    %v3123 = vsel %vm597, %v3122, 0.0
    %s3124 = sld [smem:[#allocation2 + $0x6]]
    %s3125 = scalar_lea.vmem %s1, %s3124
    %v3126 = vld [vmem:[%s3125] sm:$0x1]
    %v3127 = vsel %vm91, %v3126, %v3029
    %v3129 = vsel %vm93, %v3127, 0
    %3131 = vmatprep.subr.mxu0 0.0
    %3132 = vmatpush1.msra.mxu0 0.0
    %3133 = vmatprep.subr.mxu0 0.0
    %3134 = vmatpush1.msra.mxu0 0.0
    %3135 = vmatprep.subr.mxu0 0.0
    %3136 = vmatpush1.msra.mxu0 0.0
    %3137 = vmatprep.subr.mxu0 0.0
    %3138 = vmatpush1.msra.mxu0 0.0
    %3139 = vmatprep.subr.mxu0 0.0
    %3140 = vmatpush1.msra.mxu0 0.0
    %3141 = vmatprep.subr.mxu0 0.0
    %3142 = vmatpush1.msra.mxu0 0.0
    %3143 = vmatprep.subr.mxu0 0.0
    %3144 = vmatpush1.msra.mxu0 0.0
    %3145 = vmatprep.subr.mxu0 0.0
    %3146 = vmatpush1.msra.mxu0 0.0
    %3147 = vmatprep.subr.mxu0 0.0
    %3148 = vmatpush1.msra.mxu0 %v49
    %3149 = vmatprep.subr.mxu0 0.0
    %3150 = vmatpush1.msra.mxu0 %v48
    %3151 = vmatprep.subr.mxu0 0.0
    %3152 = vmatpush1.msra.mxu0 %v47
    %3153 = vmatprep.subr.mxu0 0.0
    %3154 = vmatpush1.msra.mxu0 %v46
    %3155 = vmatprep.subr.mxu0 0.0
    %3156 = vmatpush1.msra.mxu0 %v45
    %3157 = vmatprep.subr.mxu0 0.0
    %3158 = vmatpush1.msra.mxu0 %v44
    %3159 = vmatprep.subr.mxu0 0.0
    %3160 = vmatpush1.msra.mxu0 %v43
    %3161 = vmatprep.subr.mxu0 0.0
    %3162 = vmatpush1.msra.mxu0 %v42
    %3163 = vmatprep.subr.mxu0 0.0
    %3164 = vmatpush2.msra.mxu0 0.0
    %3165 = vmatprep.subr.mxu0 0.0
    %3166 = vmatpush2.msra.mxu0 0.0
    %3167 = vmatprep.subr.mxu0 0.0
    %3168 = vmatpush2.msra.mxu0 0.0
    %3169 = vmatprep.subr.mxu0 0.0
    %3170 = vmatpush2.msra.mxu0 0.0
    %3171 = vmatprep.subr.mxu0 0.0
    %3172 = vmatpush2.msra.mxu0 0.0
    %3173 = vmatprep.subr.mxu0 0.0
    %3174 = vmatpush2.msra.mxu0 0.0
    %3175 = vmatprep.subr.mxu0 0.0
    %3176 = vmatpush2.msra.mxu0 0.0
    %3177 = vmatprep.subr.mxu0 0.0
    %3178 = vmatpush2.msra.mxu0 0.0
    %3179 = vmatprep.subr.mxu0 0.0
    %3180 = vmatpush2.msra.mxu0 0.0
    %3181 = vmatprep.subr.mxu0 0.0
    %3182 = vmatpush2.msra.mxu0 0.0
    %3183 = vmatprep.subr.mxu0 0.0
    %3184 = vmatpush2.msra.mxu0 0.0
    %3185 = vmatprep.subr.mxu0 0.0
    %3186 = vmatpush2.msra.mxu0 0.0
    %3187 = vmatprep.subr.mxu0 0.0
    %3188 = vmatpush2.msra.mxu0 0.0
    %3189 = vmatprep.subr.mxu0 0.0
    %3190 = vmatpush2.msra.mxu0 0.0
    %3191 = vmatprep.subr.mxu0 0.0
    %3192 = vmatpush2.msra.mxu0 0.0
    %3193 = vmatprep.subr.mxu0 0.0
    %3194 = vmatpush2.msra.mxu0 0.0
    %3195 = vmatprep.mubr.f32.mxu0 0.0
    %3196 = vmatmul.mubr.f32.gmra.mxu0 %v3129
    %v3197 = vpop.f32.mrf.mxu0
    %v3198 = vadd.f32 %v74, %v3197
    %v3199 = vpop.f32.mrf.mxu0
    %3200 = vdwg.mxu0
    %v3201 = vsel %vm167, %v3198, -inf
    %3202 = vmax.xlane.f32.xlu0 %v3201
    %v3203 = vpop.xlane.xlu0 %3202
    %v3204 = vsub.f32 %v3198, %v3203
    %v3205 = vmul.f32 %v3204, 1.442695
    %v3206 = vpow.pop %v3205
    %v3207 = vsel %vm167, %v3206, 0.0
    %3208 = vadd.xlane.f32.xlu0 %v3207
    %v3209 = vpop.xlane.xlu0 %3208
    %v3210 = vlog2.pop %v3209
    %v3211 = vmul.f32 %v3210, 0.6931472
    %v3212 = vadd.f32 %v3211, %v3203
    %v3213 = vsub.f32 %v3198, %v3212
    %v3215 = vsel %vm91, %v3213, 0
    %3217 = vmatprep.subr.mxu0 0.0
    %3218 = vmatpush1.msra.mxu0 0.0
    %3219 = vmatprep.subr.mxu0 0.0
    %3220 = vmatpush1.msra.mxu0 0.0
    %3221 = vmatprep.subr.mxu0 0.0
    %3222 = vmatpush1.msra.mxu0 0.0
    %3223 = vmatprep.subr.mxu0 0.0
    %3224 = vmatpush1.msra.mxu0 0.0
    %3225 = vmatprep.subr.mxu0 0.0
    %3226 = vmatpush1.msra.mxu0 0.0
    %3227 = vmatprep.subr.mxu0 0.0
    %3228 = vmatpush1.msra.mxu0 0.0
    %3229 = vmatprep.subr.mxu0 0.0
    %3230 = vmatpush1.msra.mxu0 0.0
    %3231 = vmatprep.subr.mxu0 0.0
    %3232 = vmatpush1.msra.mxu0 0.0
    %3233 = vmatprep.subr.mxu0 0.0
    %3234 = vmatpush1.msra.mxu0 0.0
    %3235 = vmatprep.subr.mxu0 0.0
    %3236 = vmatpush1.msra.mxu0 0.0
    %3237 = vmatprep.subr.mxu0 0.0
    %3238 = vmatpush1.msra.mxu0 0.0
    %3239 = vmatprep.subr.mxu0 0.0
    %3240 = vmatpush1.msra.mxu0 0.0
    %3241 = vmatprep.subr.mxu0 0.0
    %3242 = vmatpush1.msra.mxu0 %v73
    %3243 = vmatprep.subr.mxu0 0.0
    %3244 = vmatpush1.msra.mxu0 %v72
    %3245 = vmatprep.subr.mxu0 0.0
    %3246 = vmatpush1.msra.mxu0 %v71
    %3247 = vmatprep.subr.mxu0 0.0
    %3248 = vmatpush1.msra.mxu0 %v70
    %3249 = vmatprep.subr.mxu0 0.0
    %3250 = vmatpush2.msra.mxu0 0.0
    %3251 = vmatprep.subr.mxu0 0.0
    %3252 = vmatpush2.msra.mxu0 0.0
    %3253 = vmatprep.subr.mxu0 0.0
    %3254 = vmatpush2.msra.mxu0 0.0
    %3255 = vmatprep.subr.mxu0 0.0
    %3256 = vmatpush2.msra.mxu0 0.0
    %3257 = vmatprep.subr.mxu0 0.0
    %3258 = vmatpush2.msra.mxu0 0.0
    %3259 = vmatprep.subr.mxu0 0.0
    %3260 = vmatpush2.msra.mxu0 0.0
    %3261 = vmatprep.subr.mxu0 0.0
    %3262 = vmatpush2.msra.mxu0 0.0
    %3263 = vmatprep.subr.mxu0 0.0
    %3264 = vmatpush2.msra.mxu0 0.0
    %3265 = vmatprep.subr.mxu0 0.0
    %3266 = vmatpush2.msra.mxu0 0.0
    %3267 = vmatprep.subr.mxu0 0.0
    %3268 = vmatpush2.msra.mxu0 0.0
    %3269 = vmatprep.subr.mxu0 0.0
    %3270 = vmatpush2.msra.mxu0 0.0
    %3271 = vmatprep.subr.mxu0 0.0
    %3272 = vmatpush2.msra.mxu0 0.0
    %3273 = vmatprep.subr.mxu0 0.0
    %3274 = vmatpush2.msra.mxu0 0.0
    %3275 = vmatprep.subr.mxu0 0.0
    %3276 = vmatpush2.msra.mxu0 0.0
    %3277 = vmatprep.subr.mxu0 0.0
    %3278 = vmatpush2.msra.mxu0 0.0
    %3279 = vmatprep.subr.mxu0 0.0
    %3280 = vmatpush2.msra.mxu0 0.0
    %3281 = vmatprep.mubr.f32.mxu0 0.0
    %3282 = vmatmul.mubr.f32.gmra.mxu0 %v3215
    %v3283 = vpop.f32.mrf.mxu0
    %v3284 = vadd.f32 0.0, %v3283
    %v3285 = vpop.f32.mrf.mxu0
    %3286 = vdwg.mxu0
    %3288 = vrot.lane.b32.xlu0 %v3284, 32
    %v3289 = vpop.permute.xlu0 %3288
    %v3291 = vsel %vm91, %v3126, %v3289
    %v3293 = vsel %vm93, %v3291, 0
    %3295 = vmatprep.subr.mxu0 0.0
    %3296 = vmatpush1.msra.mxu0 0.0
    %3297 = vmatprep.subr.mxu0 0.0
    %3298 = vmatpush1.msra.mxu0 0.0
    %3299 = vmatprep.subr.mxu0 0.0
    %3300 = vmatpush1.msra.mxu0 0.0
    %3301 = vmatprep.subr.mxu0 0.0
    %3302 = vmatpush1.msra.mxu0 0.0
    %3303 = vmatprep.subr.mxu0 0.0
    %3304 = vmatpush1.msra.mxu0 0.0
    %3305 = vmatprep.subr.mxu0 0.0
    %3306 = vmatpush1.msra.mxu0 0.0
    %3307 = vmatprep.subr.mxu0 0.0
    %3308 = vmatpush1.msra.mxu0 0.0
    %3309 = vmatprep.subr.mxu0 0.0
    %3310 = vmatpush1.msra.mxu0 0.0
    %3311 = vmatprep.subr.mxu0 0.0
    %3312 = vmatpush1.msra.mxu0 %v57
    %3313 = vmatprep.subr.mxu0 0.0
    %3314 = vmatpush1.msra.mxu0 %v56
    %3315 = vmatprep.subr.mxu0 0.0
    %3316 = vmatpush1.msra.mxu0 %v55
    %3317 = vmatprep.subr.mxu0 0.0
    %3318 = vmatpush1.msra.mxu0 %v54
    %3319 = vmatprep.subr.mxu0 0.0
    %3320 = vmatpush1.msra.mxu0 %v53
    %3321 = vmatprep.subr.mxu0 0.0
    %3322 = vmatpush1.msra.mxu0 %v52
    %3323 = vmatprep.subr.mxu0 0.0
    %3324 = vmatpush1.msra.mxu0 %v51
    %3325 = vmatprep.subr.mxu0 0.0
    %3326 = vmatpush1.msra.mxu0 %v50
    %3327 = vmatprep.subr.mxu0 0.0
    %3328 = vmatpush2.msra.mxu0 0.0
    %3329 = vmatprep.subr.mxu0 0.0
    %3330 = vmatpush2.msra.mxu0 0.0
    %3331 = vmatprep.subr.mxu0 0.0
    %3332 = vmatpush2.msra.mxu0 0.0
    %3333 = vmatprep.subr.mxu0 0.0
    %3334 = vmatpush2.msra.mxu0 0.0
    %3335 = vmatprep.subr.mxu0 0.0
    %3336 = vmatpush2.msra.mxu0 0.0
    %3337 = vmatprep.subr.mxu0 0.0
    %3338 = vmatpush2.msra.mxu0 0.0
    %3339 = vmatprep.subr.mxu0 0.0
    %3340 = vmatpush2.msra.mxu0 0.0
    %3341 = vmatprep.subr.mxu0 0.0
    %3342 = vmatpush2.msra.mxu0 0.0
    %3343 = vmatprep.subr.mxu0 0.0
    %3344 = vmatpush2.msra.mxu0 0.0
    %3345 = vmatprep.subr.mxu0 0.0
    %3346 = vmatpush2.msra.mxu0 0.0
    %3347 = vmatprep.subr.mxu0 0.0
    %3348 = vmatpush2.msra.mxu0 0.0
    %3349 = vmatprep.subr.mxu0 0.0
    %3350 = vmatpush2.msra.mxu0 0.0
    %3351 = vmatprep.subr.mxu0 0.0
    %3352 = vmatpush2.msra.mxu0 0.0
    %3353 = vmatprep.subr.mxu0 0.0
    %3354 = vmatpush2.msra.mxu0 0.0
    %3355 = vmatprep.subr.mxu0 0.0
    %3356 = vmatpush2.msra.mxu0 0.0
    %3357 = vmatprep.subr.mxu0 0.0
    %3358 = vmatpush2.msra.mxu0 0.0
    %3359 = vmatprep.mubr.f32.mxu0 0.0
    %3360 = vmatmul.mubr.f32.gmra.mxu0 %v3293
    %v3361 = vpop.f32.mrf.mxu0
    %v3362 = vadd.f32 %v75, %v3361
    %v3363 = vpop.f32.mrf.mxu0
    %3364 = vdwg.mxu0
    %v3365 = vmax.f32 %v3362, 0.0
    %v3367 = vsel %vm91, %v3365, 0
    %3369 = vmatprep.subr.mxu0 0.0
    %3370 = vmatpush1.msra.mxu0 0.0
    %3371 = vmatprep.subr.mxu0 0.0
    %3372 = vmatpush1.msra.mxu0 0.0
    %3373 = vmatprep.subr.mxu0 0.0
    %3374 = vmatpush1.msra.mxu0 0.0
    %3375 = vmatprep.subr.mxu0 0.0
    %3376 = vmatpush1.msra.mxu0 0.0
    %3377 = vmatprep.subr.mxu0 0.0
    %3378 = vmatpush1.msra.mxu0 0.0
    %3379 = vmatprep.subr.mxu0 0.0
    %3380 = vmatpush1.msra.mxu0 0.0
    %3381 = vmatprep.subr.mxu0 0.0
    %3382 = vmatpush1.msra.mxu0 0.0
    %3383 = vmatprep.subr.mxu0 0.0
    %3384 = vmatpush1.msra.mxu0 0.0
    %3385 = vmatprep.subr.mxu0 0.0
    %3386 = vmatpush1.msra.mxu0 0.0
    %3387 = vmatprep.subr.mxu0 0.0
    %3388 = vmatpush1.msra.mxu0 0.0
    %3389 = vmatprep.subr.mxu0 0.0
    %3390 = vmatpush1.msra.mxu0 0.0
    %3391 = vmatprep.subr.mxu0 0.0
    %3392 = vmatpush1.msra.mxu0 0.0
    %3393 = vmatprep.subr.mxu0 0.0
    %3394 = vmatpush1.msra.mxu0 %v61
    %3395 = vmatprep.subr.mxu0 0.0
    %3396 = vmatpush1.msra.mxu0 %v60
    %3397 = vmatprep.subr.mxu0 0.0
    %3398 = vmatpush1.msra.mxu0 %v59
    %3399 = vmatprep.subr.mxu0 0.0
    %3400 = vmatpush1.msra.mxu0 %v58
    %3401 = vmatprep.subr.mxu0 0.0
    %3402 = vmatpush2.msra.mxu0 0.0
    %3403 = vmatprep.subr.mxu0 0.0
    %3404 = vmatpush2.msra.mxu0 0.0
    %3405 = vmatprep.subr.mxu0 0.0
    %3406 = vmatpush2.msra.mxu0 0.0
    %3407 = vmatprep.subr.mxu0 0.0
    %3408 = vmatpush2.msra.mxu0 0.0
    %3409 = vmatprep.subr.mxu0 0.0
    %3410 = vmatpush2.msra.mxu0 0.0
    %3411 = vmatprep.subr.mxu0 0.0
    %3412 = vmatpush2.msra.mxu0 0.0
    %3413 = vmatprep.subr.mxu0 0.0
    %3414 = vmatpush2.msra.mxu0 0.0
    %3415 = vmatprep.subr.mxu0 0.0
    %3416 = vmatpush2.msra.mxu0 0.0
    %3417 = vmatprep.subr.mxu0 0.0
    %3418 = vmatpush2.msra.mxu0 0.0
    %3419 = vmatprep.subr.mxu0 0.0
    %3420 = vmatpush2.msra.mxu0 0.0
    %3421 = vmatprep.subr.mxu0 0.0
    %3422 = vmatpush2.msra.mxu0 0.0
    %3423 = vmatprep.subr.mxu0 0.0
    %3424 = vmatpush2.msra.mxu0 0.0
    %3425 = vmatprep.subr.mxu0 0.0
    %3426 = vmatpush2.msra.mxu0 0.0
    %3427 = vmatprep.subr.mxu0 0.0
    %3428 = vmatpush2.msra.mxu0 0.0
    %3429 = vmatprep.subr.mxu0 0.0
    %3430 = vmatpush2.msra.mxu0 0.0
    %3431 = vmatprep.subr.mxu0 0.0
    %3432 = vmatpush2.msra.mxu0 0.0
    %3433 = vmatprep.mubr.f32.mxu0 0.0
    %3434 = vmatmul.mubr.f32.gmra.mxu0 %v3367
    %v3435 = vpop.f32.mrf.mxu0
    %v3436 = vadd.f32 %v76, %v3435
    %v3437 = vpop.f32.mrf.mxu0
    %3438 = vdwg.mxu0
    %3439 = vmatprep.subr.mxu0 0.0
    %3440 = vmatpush1.msra.mxu0 0.0
    %3441 = vmatprep.subr.mxu0 0.0
    %3442 = vmatpush1.msra.mxu0 0.0
    %3443 = vmatprep.subr.mxu0 0.0
    %3444 = vmatpush1.msra.mxu0 0.0
    %3445 = vmatprep.subr.mxu0 0.0
    %3446 = vmatpush1.msra.mxu0 0.0
    %3447 = vmatprep.subr.mxu0 0.0
    %3448 = vmatpush1.msra.mxu0 0.0
    %3449 = vmatprep.subr.mxu0 0.0
    %3450 = vmatpush1.msra.mxu0 0.0
    %3451 = vmatprep.subr.mxu0 0.0
    %3452 = vmatpush1.msra.mxu0 0.0
    %3453 = vmatprep.subr.mxu0 0.0
    %3454 = vmatpush1.msra.mxu0 0.0
    %3455 = vmatprep.subr.mxu0 0.0
    %3456 = vmatpush1.msra.mxu0 0.0
    %3457 = vmatprep.subr.mxu0 0.0
    %3458 = vmatpush1.msra.mxu0 0.0
    %3459 = vmatprep.subr.mxu0 0.0
    %3460 = vmatpush1.msra.mxu0 0.0
    %3461 = vmatprep.subr.mxu0 0.0
    %3462 = vmatpush1.msra.mxu0 0.0
    %3463 = vmatprep.subr.mxu0 0.0
    %3464 = vmatpush1.msra.mxu0 %v65
    %3465 = vmatprep.subr.mxu0 0.0
    %3466 = vmatpush1.msra.mxu0 %v64
    %3467 = vmatprep.subr.mxu0 0.0
    %3468 = vmatpush1.msra.mxu0 %v63
    %3469 = vmatprep.subr.mxu0 0.0
    %3470 = vmatpush1.msra.mxu0 %v62
    %3471 = vmatprep.subr.mxu0 0.0
    %3472 = vmatpush2.msra.mxu0 0.0
    %3473 = vmatprep.subr.mxu0 0.0
    %3474 = vmatpush2.msra.mxu0 0.0
    %3475 = vmatprep.subr.mxu0 0.0
    %3476 = vmatpush2.msra.mxu0 0.0
    %3477 = vmatprep.subr.mxu0 0.0
    %3478 = vmatpush2.msra.mxu0 0.0
    %3479 = vmatprep.subr.mxu0 0.0
    %3480 = vmatpush2.msra.mxu0 0.0
    %3481 = vmatprep.subr.mxu0 0.0
    %3482 = vmatpush2.msra.mxu0 0.0
    %3483 = vmatprep.subr.mxu0 0.0
    %3484 = vmatpush2.msra.mxu0 0.0
    %3485 = vmatprep.subr.mxu0 0.0
    %3486 = vmatpush2.msra.mxu0 0.0
    %3487 = vmatprep.subr.mxu0 0.0
    %3488 = vmatpush2.msra.mxu0 0.0
    %3489 = vmatprep.subr.mxu0 0.0
    %3490 = vmatpush2.msra.mxu0 0.0
    %3491 = vmatprep.subr.mxu0 0.0
    %3492 = vmatpush2.msra.mxu0 0.0
    %3493 = vmatprep.subr.mxu0 0.0
    %3494 = vmatpush2.msra.mxu0 0.0
    %3495 = vmatprep.subr.mxu0 0.0
    %3496 = vmatpush2.msra.mxu0 0.0
    %3497 = vmatprep.subr.mxu0 0.0
    %3498 = vmatpush2.msra.mxu0 0.0
    %3499 = vmatprep.subr.mxu0 0.0
    %3500 = vmatpush2.msra.mxu0 0.0
    %3501 = vmatprep.subr.mxu0 0.0
    %3502 = vmatpush2.msra.mxu0 0.0
    %3503 = vmatprep.mubr.f32.mxu0 0.0
    %3504 = vmatmul.mubr.f32.gmra.mxu0 %v3033
    %v3505 = vpop.f32.mrf.mxu0
    %v3506 = vadd.f32 %v77, %v3505
    %v3507 = vpop.f32.mrf.mxu0
    %3508 = vdwg.mxu0
    %v3509 = vadd.f32 %v3436, %v3506
    %v3510 = vxor.u32 %v3509, 2147483648
    %v3511 = vmul.f32 %v3510, 1.442695
    %v3512 = vpow.pop %v3511
    %v3513 = vadd.f32 %v3512, 1.0
    %v3514 = vrcp.pop %v3513
    %v3515 = vmul.f32 1.0, %v3514
    %3517 = vrot.lane.b32.xlu0 %v3506, 64
    %v3518 = vpop.permute.xlu0 %3517
    %v3520 = vmul.f32 %v3515, %v3518
    %3522 = vrot.lane.b32.xlu0 %v3520, 64
    %v3523 = vpop.permute.xlu0 %3522
    %v3525 = vadd.f32 %v3436, %v3523
    %v3526 = vtanh.pop %v3525
    %v3527 = vsub.f32 1.0, %v3515
    %3529 = vrot.lane.b32.xlu0 %v3526, 96
    %v3530 = vpop.permute.xlu0 %3529
    %v3532 = vmul.f32 %v3527, %v3530
    %v3533 = vmul.f32 %v3515, %v3029
    %v3534 = vadd.f32 %v3532, %v3533
    %3536 = vrot.lane.b32.xlu0 %v3534, 96
    %v3537 = vpop.permute.xlu0 %3536
    %v3538 = vsel %vm91, %v3537, 0
    %3540 = vmatprep.subr.mxu0 0.0
    %3541 = vmatpush1.msra.mxu0 0.0
    %3542 = vmatprep.subr.mxu0 0.0
    %3543 = vmatpush1.msra.mxu0 0.0
    %3544 = vmatprep.subr.mxu0 0.0
    %3545 = vmatpush1.msra.mxu0 0.0
    %3546 = vmatprep.subr.mxu0 0.0
    %3547 = vmatpush1.msra.mxu0 0.0
    %3548 = vmatprep.subr.mxu0 0.0
    %3549 = vmatpush1.msra.mxu0 0.0
    %3550 = vmatprep.subr.mxu0 0.0
    %3551 = vmatpush1.msra.mxu0 0.0
    %3552 = vmatprep.subr.mxu0 0.0
    %3553 = vmatpush1.msra.mxu0 0.0
    %3554 = vmatprep.subr.mxu0 0.0
    %3555 = vmatpush1.msra.mxu0 0.0
    %3556 = vmatprep.subr.mxu0 0.0
    %3557 = vmatpush1.msra.mxu0 0.0
    %3558 = vmatprep.subr.mxu0 0.0
    %3559 = vmatpush1.msra.mxu0 0.0
    %3560 = vmatprep.subr.mxu0 0.0
    %3561 = vmatpush1.msra.mxu0 0.0
    %3562 = vmatprep.subr.mxu0 0.0
    %3563 = vmatpush1.msra.mxu0 0.0
    %3564 = vmatprep.subr.mxu0 0.0
    %3565 = vmatpush1.msra.mxu0 %v69
    %3566 = vmatprep.subr.mxu0 0.0
    %3567 = vmatpush1.msra.mxu0 %v68
    %3568 = vmatprep.subr.mxu0 0.0
    %3569 = vmatpush1.msra.mxu0 %v67
    %3570 = vmatprep.subr.mxu0 0.0
    %3571 = vmatpush1.msra.mxu0 %v66
    %3572 = vmatprep.subr.mxu0 0.0
    %3573 = vmatpush2.msra.mxu0 0.0
    %3574 = vmatprep.subr.mxu0 0.0
    %3575 = vmatpush2.msra.mxu0 0.0
    %3576 = vmatprep.subr.mxu0 0.0
    %3577 = vmatpush2.msra.mxu0 0.0
    %3578 = vmatprep.subr.mxu0 0.0
    %3579 = vmatpush2.msra.mxu0 0.0
    %3580 = vmatprep.subr.mxu0 0.0
    %3581 = vmatpush2.msra.mxu0 0.0
    %3582 = vmatprep.subr.mxu0 0.0
    %3583 = vmatpush2.msra.mxu0 0.0
    %3584 = vmatprep.subr.mxu0 0.0
    %3585 = vmatpush2.msra.mxu0 0.0
    %3586 = vmatprep.subr.mxu0 0.0
    %3587 = vmatpush2.msra.mxu0 0.0
    %3588 = vmatprep.subr.mxu0 0.0
    %3589 = vmatpush2.msra.mxu0 0.0
    %3590 = vmatprep.subr.mxu0 0.0
    %3591 = vmatpush2.msra.mxu0 0.0
    %3592 = vmatprep.subr.mxu0 0.0
    %3593 = vmatpush2.msra.mxu0 0.0
    %3594 = vmatprep.subr.mxu0 0.0
    %3595 = vmatpush2.msra.mxu0 0.0
    %3596 = vmatprep.subr.mxu0 0.0
    %3597 = vmatpush2.msra.mxu0 0.0
    %3598 = vmatprep.subr.mxu0 0.0
    %3599 = vmatpush2.msra.mxu0 0.0
    %3600 = vmatprep.subr.mxu0 0.0
    %3601 = vmatpush2.msra.mxu0 0.0
    %3602 = vmatprep.subr.mxu0 0.0
    %3603 = vmatpush2.msra.mxu0 0.0
    %3604 = vmatprep.mubr.f32.mxu0 0.0
    %3605 = vmatmul.mubr.f32.gmra.mxu0 %v3538
    %v3606 = vpop.f32.mrf.mxu0
    %v3607 = vadd.f32 %v78, %v3606
    %v3608 = vpop.f32.mrf.mxu0
    %3609 = vdwg.mxu0
    %v3610 = vsel %vm167, %v3607, -inf
    %3611 = vmax.xlane.f32.xlu0 %v3610
    %v3612 = vpop.xlane.xlu0 %3611
    %v3613 = vsub.f32 %v3607, %v3612
    %v3614 = vmul.f32 %v3613, 1.442695
    %v3615 = vpow.pop %v3614
    %v3616 = vsel %vm167, %v3615, 0.0
    %3617 = vadd.xlane.f32.xlu0 %v3616
    %v3618 = vpop.xlane.xlu0 %3617
    %v3619 = vlog2.pop %v3618
    %v3620 = vmul.f32 %v3619, 0.6931472
    %v3621 = vadd.f32 %v3620, %v3612
    %v3622 = vsub.f32 %v3607, %v3621
    %3623 = vrot.lane.b32.xlu0 %v3213, 64
    %v3624 = vpop.permute.xlu0 %3623
    %v3626 = vsel %vm91, %v3622, %v3534
    %v3627 = vsel %vm93, %v3626, %v3624
    %v3628 = vsel %vm597, %v3627, 0.0
    %s3629 = sld [smem:[#allocation2 + $0x7]]
    %s3630 = scalar_lea.vmem %s1, %s3629
    %v3631 = vld [vmem:[%s3630] sm:$0x1]
    %v3632 = vsel %vm91, %v3631, %v3534
    %v3634 = vsel %vm93, %v3632, 0
    %3636 = vmatprep.subr.mxu0 0.0
    %3637 = vmatpush1.msra.mxu0 0.0
    %3638 = vmatprep.subr.mxu0 0.0
    %3639 = vmatpush1.msra.mxu0 0.0
    %3640 = vmatprep.subr.mxu0 0.0
    %3641 = vmatpush1.msra.mxu0 0.0
    %3642 = vmatprep.subr.mxu0 0.0
    %3643 = vmatpush1.msra.mxu0 0.0
    %3644 = vmatprep.subr.mxu0 0.0
    %3645 = vmatpush1.msra.mxu0 0.0
    %3646 = vmatprep.subr.mxu0 0.0
    %3647 = vmatpush1.msra.mxu0 0.0
    %3648 = vmatprep.subr.mxu0 0.0
    %3649 = vmatpush1.msra.mxu0 0.0
    %3650 = vmatprep.subr.mxu0 0.0
    %3651 = vmatpush1.msra.mxu0 0.0
    %3652 = vmatprep.subr.mxu0 0.0
    %3653 = vmatpush1.msra.mxu0 %v49
    %3654 = vmatprep.subr.mxu0 0.0
    %3655 = vmatpush1.msra.mxu0 %v48
    %3656 = vmatprep.subr.mxu0 0.0
    %3657 = vmatpush1.msra.mxu0 %v47
    %3658 = vmatprep.subr.mxu0 0.0
    %3659 = vmatpush1.msra.mxu0 %v46
    %3660 = vmatprep.subr.mxu0 0.0
    %3661 = vmatpush1.msra.mxu0 %v45
    %3662 = vmatprep.subr.mxu0 0.0
    %3663 = vmatpush1.msra.mxu0 %v44
    %3664 = vmatprep.subr.mxu0 0.0
    %3665 = vmatpush1.msra.mxu0 %v43
    %3666 = vmatprep.subr.mxu0 0.0
    %3667 = vmatpush1.msra.mxu0 %v42
    %3668 = vmatprep.subr.mxu0 0.0
    %3669 = vmatpush2.msra.mxu0 0.0
    %3670 = vmatprep.subr.mxu0 0.0
    %3671 = vmatpush2.msra.mxu0 0.0
    %3672 = vmatprep.subr.mxu0 0.0
    %3673 = vmatpush2.msra.mxu0 0.0
    %3674 = vmatprep.subr.mxu0 0.0
    %3675 = vmatpush2.msra.mxu0 0.0
    %3676 = vmatprep.subr.mxu0 0.0
    %3677 = vmatpush2.msra.mxu0 0.0
    %3678 = vmatprep.subr.mxu0 0.0
    %3679 = vmatpush2.msra.mxu0 0.0
    %3680 = vmatprep.subr.mxu0 0.0
    %3681 = vmatpush2.msra.mxu0 0.0
    %3682 = vmatprep.subr.mxu0 0.0
    %3683 = vmatpush2.msra.mxu0 0.0
    %3684 = vmatprep.subr.mxu0 0.0
    %3685 = vmatpush2.msra.mxu0 0.0
    %3686 = vmatprep.subr.mxu0 0.0
    %3687 = vmatpush2.msra.mxu0 0.0
    %3688 = vmatprep.subr.mxu0 0.0
    %3689 = vmatpush2.msra.mxu0 0.0
    %3690 = vmatprep.subr.mxu0 0.0
    %3691 = vmatpush2.msra.mxu0 0.0
    %3692 = vmatprep.subr.mxu0 0.0
    %3693 = vmatpush2.msra.mxu0 0.0
    %3694 = vmatprep.subr.mxu0 0.0
    %3695 = vmatpush2.msra.mxu0 0.0
    %3696 = vmatprep.subr.mxu0 0.0
    %3697 = vmatpush2.msra.mxu0 0.0
    %3698 = vmatprep.subr.mxu0 0.0
    %3699 = vmatpush2.msra.mxu0 0.0
    %3700 = vmatprep.mubr.f32.mxu0 0.0
    %3701 = vmatmul.mubr.f32.gmra.mxu0 %v3634
    %v3702 = vpop.f32.mrf.mxu0
    %v3703 = vadd.f32 %v74, %v3702
    %v3704 = vpop.f32.mrf.mxu0
    %3705 = vdwg.mxu0
    %v3706 = vsel %vm167, %v3703, -inf
    %3707 = vmax.xlane.f32.xlu0 %v3706
    %v3708 = vpop.xlane.xlu0 %3707
    %v3709 = vsub.f32 %v3703, %v3708
    %v3710 = vmul.f32 %v3709, 1.442695
    %v3711 = vpow.pop %v3710
    %v3712 = vsel %vm167, %v3711, 0.0
    %3713 = vadd.xlane.f32.xlu0 %v3712
    %v3714 = vpop.xlane.xlu0 %3713
    %v3715 = vlog2.pop %v3714
    %v3716 = vmul.f32 %v3715, 0.6931472
    %v3717 = vadd.f32 %v3716, %v3708
    %v3718 = vsub.f32 %v3703, %v3717
    %v3720 = vsel %vm91, %v3718, 0
    %3722 = vmatprep.subr.mxu0 0.0
    %3723 = vmatpush1.msra.mxu0 0.0
    %3724 = vmatprep.subr.mxu0 0.0
    %3725 = vmatpush1.msra.mxu0 0.0
    %3726 = vmatprep.subr.mxu0 0.0
    %3727 = vmatpush1.msra.mxu0 0.0
    %3728 = vmatprep.subr.mxu0 0.0
    %3729 = vmatpush1.msra.mxu0 0.0
    %3730 = vmatprep.subr.mxu0 0.0
    %3731 = vmatpush1.msra.mxu0 0.0
    %3732 = vmatprep.subr.mxu0 0.0
    %3733 = vmatpush1.msra.mxu0 0.0
    %3734 = vmatprep.subr.mxu0 0.0
    %3735 = vmatpush1.msra.mxu0 0.0
    %3736 = vmatprep.subr.mxu0 0.0
    %3737 = vmatpush1.msra.mxu0 0.0
    %3738 = vmatprep.subr.mxu0 0.0
    %3739 = vmatpush1.msra.mxu0 0.0
    %3740 = vmatprep.subr.mxu0 0.0
    %3741 = vmatpush1.msra.mxu0 0.0
    %3742 = vmatprep.subr.mxu0 0.0
    %3743 = vmatpush1.msra.mxu0 0.0
    %3744 = vmatprep.subr.mxu0 0.0
    %3745 = vmatpush1.msra.mxu0 0.0
    %3746 = vmatprep.subr.mxu0 0.0
    %3747 = vmatpush1.msra.mxu0 %v73
    %3748 = vmatprep.subr.mxu0 0.0
    %3749 = vmatpush1.msra.mxu0 %v72
    %3750 = vmatprep.subr.mxu0 0.0
    %3751 = vmatpush1.msra.mxu0 %v71
    %3752 = vmatprep.subr.mxu0 0.0
    %3753 = vmatpush1.msra.mxu0 %v70
    %3754 = vmatprep.subr.mxu0 0.0
    %3755 = vmatpush2.msra.mxu0 0.0
    %3756 = vmatprep.subr.mxu0 0.0
    %3757 = vmatpush2.msra.mxu0 0.0
    %3758 = vmatprep.subr.mxu0 0.0
    %3759 = vmatpush2.msra.mxu0 0.0
    %3760 = vmatprep.subr.mxu0 0.0
    %3761 = vmatpush2.msra.mxu0 0.0
    %3762 = vmatprep.subr.mxu0 0.0
    %3763 = vmatpush2.msra.mxu0 0.0
    %3764 = vmatprep.subr.mxu0 0.0
    %3765 = vmatpush2.msra.mxu0 0.0
    %3766 = vmatprep.subr.mxu0 0.0
    %3767 = vmatpush2.msra.mxu0 0.0
    %3768 = vmatprep.subr.mxu0 0.0
    %3769 = vmatpush2.msra.mxu0 0.0
    %3770 = vmatprep.subr.mxu0 0.0
    %3771 = vmatpush2.msra.mxu0 0.0
    %3772 = vmatprep.subr.mxu0 0.0
    %3773 = vmatpush2.msra.mxu0 0.0
    %3774 = vmatprep.subr.mxu0 0.0
    %3775 = vmatpush2.msra.mxu0 0.0
    %3776 = vmatprep.subr.mxu0 0.0
    %3777 = vmatpush2.msra.mxu0 0.0
    %3778 = vmatprep.subr.mxu0 0.0
    %3779 = vmatpush2.msra.mxu0 0.0
    %3780 = vmatprep.subr.mxu0 0.0
    %3781 = vmatpush2.msra.mxu0 0.0
    %3782 = vmatprep.subr.mxu0 0.0
    %3783 = vmatpush2.msra.mxu0 0.0
    %3784 = vmatprep.subr.mxu0 0.0
    %3785 = vmatpush2.msra.mxu0 0.0
    %3786 = vmatprep.mubr.f32.mxu0 0.0
    %3787 = vmatmul.mubr.f32.gmra.mxu0 %v3720
    %v3788 = vpop.f32.mrf.mxu0
    %v3789 = vadd.f32 0.0, %v3788
    %v3790 = vpop.f32.mrf.mxu0
    %3791 = vdwg.mxu0
    %3793 = vrot.lane.b32.xlu0 %v3789, 32
    %v3794 = vpop.permute.xlu0 %3793
    %v3796 = vsel %vm91, %v3631, %v3794
    %v3798 = vsel %vm93, %v3796, 0
    %3800 = vmatprep.subr.mxu0 0.0
    %3801 = vmatpush1.msra.mxu0 0.0
    %3802 = vmatprep.subr.mxu0 0.0
    %3803 = vmatpush1.msra.mxu0 0.0
    %3804 = vmatprep.subr.mxu0 0.0
    %3805 = vmatpush1.msra.mxu0 0.0
    %3806 = vmatprep.subr.mxu0 0.0
    %3807 = vmatpush1.msra.mxu0 0.0
    %3808 = vmatprep.subr.mxu0 0.0
    %3809 = vmatpush1.msra.mxu0 0.0
    %3810 = vmatprep.subr.mxu0 0.0
    %3811 = vmatpush1.msra.mxu0 0.0
    %3812 = vmatprep.subr.mxu0 0.0
    %3813 = vmatpush1.msra.mxu0 0.0
    %3814 = vmatprep.subr.mxu0 0.0
    %3815 = vmatpush1.msra.mxu0 0.0
    %3816 = vmatprep.subr.mxu0 0.0
    %3817 = vmatpush1.msra.mxu0 %v57
    %3818 = vmatprep.subr.mxu0 0.0
    %3819 = vmatpush1.msra.mxu0 %v56
    %3820 = vmatprep.subr.mxu0 0.0
    %3821 = vmatpush1.msra.mxu0 %v55
    %3822 = vmatprep.subr.mxu0 0.0
    %3823 = vmatpush1.msra.mxu0 %v54
    %3824 = vmatprep.subr.mxu0 0.0
    %3825 = vmatpush1.msra.mxu0 %v53
    %3826 = vmatprep.subr.mxu0 0.0
    %3827 = vmatpush1.msra.mxu0 %v52
    %3828 = vmatprep.subr.mxu0 0.0
    %3829 = vmatpush1.msra.mxu0 %v51
    %3830 = vmatprep.subr.mxu0 0.0
    %3831 = vmatpush1.msra.mxu0 %v50
    %3832 = vmatprep.subr.mxu0 0.0
    %3833 = vmatpush2.msra.mxu0 0.0
    %3834 = vmatprep.subr.mxu0 0.0
    %3835 = vmatpush2.msra.mxu0 0.0
    %3836 = vmatprep.subr.mxu0 0.0
    %3837 = vmatpush2.msra.mxu0 0.0
    %3838 = vmatprep.subr.mxu0 0.0
    %3839 = vmatpush2.msra.mxu0 0.0
    %3840 = vmatprep.subr.mxu0 0.0
    %3841 = vmatpush2.msra.mxu0 0.0
    %3842 = vmatprep.subr.mxu0 0.0
    %3843 = vmatpush2.msra.mxu0 0.0
    %3844 = vmatprep.subr.mxu0 0.0
    %3845 = vmatpush2.msra.mxu0 0.0
    %3846 = vmatprep.subr.mxu0 0.0
    %3847 = vmatpush2.msra.mxu0 0.0
    %3848 = vmatprep.subr.mxu0 0.0
    %3849 = vmatpush2.msra.mxu0 0.0
    %3850 = vmatprep.subr.mxu0 0.0
    %3851 = vmatpush2.msra.mxu0 0.0
    %3852 = vmatprep.subr.mxu0 0.0
    %3853 = vmatpush2.msra.mxu0 0.0
    %3854 = vmatprep.subr.mxu0 0.0
    %3855 = vmatpush2.msra.mxu0 0.0
    %3856 = vmatprep.subr.mxu0 0.0
    %3857 = vmatpush2.msra.mxu0 0.0
    %3858 = vmatprep.subr.mxu0 0.0
    %3859 = vmatpush2.msra.mxu0 0.0
    %3860 = vmatprep.subr.mxu0 0.0
    %3861 = vmatpush2.msra.mxu0 0.0
    %3862 = vmatprep.subr.mxu0 0.0
    %3863 = vmatpush2.msra.mxu0 0.0
    %3864 = vmatprep.mubr.f32.mxu0 0.0
    %3865 = vmatmul.mubr.f32.gmra.mxu0 %v3798
    %v3866 = vpop.f32.mrf.mxu0
    %v3867 = vadd.f32 %v75, %v3866
    %v3868 = vpop.f32.mrf.mxu0
    %3869 = vdwg.mxu0
    %v3870 = vmax.f32 %v3867, 0.0
    %v3872 = vsel %vm91, %v3870, 0
    %3874 = vmatprep.subr.mxu0 0.0
    %3875 = vmatpush1.msra.mxu0 0.0
    %3876 = vmatprep.subr.mxu0 0.0
    %3877 = vmatpush1.msra.mxu0 0.0
    %3878 = vmatprep.subr.mxu0 0.0
    %3879 = vmatpush1.msra.mxu0 0.0
    %3880 = vmatprep.subr.mxu0 0.0
    %3881 = vmatpush1.msra.mxu0 0.0
    %3882 = vmatprep.subr.mxu0 0.0
    %3883 = vmatpush1.msra.mxu0 0.0
    %3884 = vmatprep.subr.mxu0 0.0
    %3885 = vmatpush1.msra.mxu0 0.0
    %3886 = vmatprep.subr.mxu0 0.0
    %3887 = vmatpush1.msra.mxu0 0.0
    %3888 = vmatprep.subr.mxu0 0.0
    %3889 = vmatpush1.msra.mxu0 0.0
    %3890 = vmatprep.subr.mxu0 0.0
    %3891 = vmatpush1.msra.mxu0 0.0
    %3892 = vmatprep.subr.mxu0 0.0
    %3893 = vmatpush1.msra.mxu0 0.0
    %3894 = vmatprep.subr.mxu0 0.0
    %3895 = vmatpush1.msra.mxu0 0.0
    %3896 = vmatprep.subr.mxu0 0.0
    %3897 = vmatpush1.msra.mxu0 0.0
    %3898 = vmatprep.subr.mxu0 0.0
    %3899 = vmatpush1.msra.mxu0 %v61
    %3900 = vmatprep.subr.mxu0 0.0
    %3901 = vmatpush1.msra.mxu0 %v60
    %3902 = vmatprep.subr.mxu0 0.0
    %3903 = vmatpush1.msra.mxu0 %v59
    %3904 = vmatprep.subr.mxu0 0.0
    %3905 = vmatpush1.msra.mxu0 %v58
    %3906 = vmatprep.subr.mxu0 0.0
    %3907 = vmatpush2.msra.mxu0 0.0
    %3908 = vmatprep.subr.mxu0 0.0
    %3909 = vmatpush2.msra.mxu0 0.0
    %3910 = vmatprep.subr.mxu0 0.0
    %3911 = vmatpush2.msra.mxu0 0.0
    %3912 = vmatprep.subr.mxu0 0.0
    %3913 = vmatpush2.msra.mxu0 0.0
    %3914 = vmatprep.subr.mxu0 0.0
    %3915 = vmatpush2.msra.mxu0 0.0
    %3916 = vmatprep.subr.mxu0 0.0
    %3917 = vmatpush2.msra.mxu0 0.0
    %3918 = vmatprep.subr.mxu0 0.0
    %3919 = vmatpush2.msra.mxu0 0.0
    %3920 = vmatprep.subr.mxu0 0.0
    %3921 = vmatpush2.msra.mxu0 0.0
    %3922 = vmatprep.subr.mxu0 0.0
    %3923 = vmatpush2.msra.mxu0 0.0
    %3924 = vmatprep.subr.mxu0 0.0
    %3925 = vmatpush2.msra.mxu0 0.0
    %3926 = vmatprep.subr.mxu0 0.0
    %3927 = vmatpush2.msra.mxu0 0.0
    %3928 = vmatprep.subr.mxu0 0.0
    %3929 = vmatpush2.msra.mxu0 0.0
    %3930 = vmatprep.subr.mxu0 0.0
    %3931 = vmatpush2.msra.mxu0 0.0
    %3932 = vmatprep.subr.mxu0 0.0
    %3933 = vmatpush2.msra.mxu0 0.0
    %3934 = vmatprep.subr.mxu0 0.0
    %3935 = vmatpush2.msra.mxu0 0.0
    %3936 = vmatprep.subr.mxu0 0.0
    %3937 = vmatpush2.msra.mxu0 0.0
    %3938 = vmatprep.mubr.f32.mxu0 0.0
    %3939 = vmatmul.mubr.f32.gmra.mxu0 %v3872
    %v3940 = vpop.f32.mrf.mxu0
    %v3941 = vadd.f32 %v76, %v3940
    %v3942 = vpop.f32.mrf.mxu0
    %3943 = vdwg.mxu0
    %3944 = vmatprep.subr.mxu0 0.0
    %3945 = vmatpush1.msra.mxu0 0.0
    %3946 = vmatprep.subr.mxu0 0.0
    %3947 = vmatpush1.msra.mxu0 0.0
    %3948 = vmatprep.subr.mxu0 0.0
    %3949 = vmatpush1.msra.mxu0 0.0
    %3950 = vmatprep.subr.mxu0 0.0
    %3951 = vmatpush1.msra.mxu0 0.0
    %3952 = vmatprep.subr.mxu0 0.0
    %3953 = vmatpush1.msra.mxu0 0.0
    %3954 = vmatprep.subr.mxu0 0.0
    %3955 = vmatpush1.msra.mxu0 0.0
    %3956 = vmatprep.subr.mxu0 0.0
    %3957 = vmatpush1.msra.mxu0 0.0
    %3958 = vmatprep.subr.mxu0 0.0
    %3959 = vmatpush1.msra.mxu0 0.0
    %3960 = vmatprep.subr.mxu0 0.0
    %3961 = vmatpush1.msra.mxu0 0.0
    %3962 = vmatprep.subr.mxu0 0.0
    %3963 = vmatpush1.msra.mxu0 0.0
    %3964 = vmatprep.subr.mxu0 0.0
    %3965 = vmatpush1.msra.mxu0 0.0
    %3966 = vmatprep.subr.mxu0 0.0
    %3967 = vmatpush1.msra.mxu0 0.0
    %3968 = vmatprep.subr.mxu0 0.0
    %3969 = vmatpush1.msra.mxu0 %v65
    %3970 = vmatprep.subr.mxu0 0.0
    %3971 = vmatpush1.msra.mxu0 %v64
    %3972 = vmatprep.subr.mxu0 0.0
    %3973 = vmatpush1.msra.mxu0 %v63
    %3974 = vmatprep.subr.mxu0 0.0
    %3975 = vmatpush1.msra.mxu0 %v62
    %3976 = vmatprep.subr.mxu0 0.0
    %3977 = vmatpush2.msra.mxu0 0.0
    %3978 = vmatprep.subr.mxu0 0.0
    %3979 = vmatpush2.msra.mxu0 0.0
    %3980 = vmatprep.subr.mxu0 0.0
    %3981 = vmatpush2.msra.mxu0 0.0
    %3982 = vmatprep.subr.mxu0 0.0
    %3983 = vmatpush2.msra.mxu0 0.0
    %3984 = vmatprep.subr.mxu0 0.0
    %3985 = vmatpush2.msra.mxu0 0.0
    %3986 = vmatprep.subr.mxu0 0.0
    %3987 = vmatpush2.msra.mxu0 0.0
    %3988 = vmatprep.subr.mxu0 0.0
    %3989 = vmatpush2.msra.mxu0 0.0
    %3990 = vmatprep.subr.mxu0 0.0
    %3991 = vmatpush2.msra.mxu0 0.0
    %3992 = vmatprep.subr.mxu0 0.0
    %3993 = vmatpush2.msra.mxu0 0.0
    %3994 = vmatprep.subr.mxu0 0.0
    %3995 = vmatpush2.msra.mxu0 0.0
    %3996 = vmatprep.subr.mxu0 0.0
    %3997 = vmatpush2.msra.mxu0 0.0
    %3998 = vmatprep.subr.mxu0 0.0
    %3999 = vmatpush2.msra.mxu0 0.0
    %4000 = vmatprep.subr.mxu0 0.0
    %4001 = vmatpush2.msra.mxu0 0.0
    %4002 = vmatprep.subr.mxu0 0.0
    %4003 = vmatpush2.msra.mxu0 0.0
    %4004 = vmatprep.subr.mxu0 0.0
    %4005 = vmatpush2.msra.mxu0 0.0
    %4006 = vmatprep.subr.mxu0 0.0
    %4007 = vmatpush2.msra.mxu0 0.0
    %4008 = vmatprep.mubr.f32.mxu0 0.0
    %4009 = vmatmul.mubr.f32.gmra.mxu0 %v3538
    %v4010 = vpop.f32.mrf.mxu0
    %v4011 = vadd.f32 %v77, %v4010
    %v4012 = vpop.f32.mrf.mxu0
    %4013 = vdwg.mxu0
    %v4014 = vadd.f32 %v3941, %v4011
    %v4015 = vxor.u32 %v4014, 2147483648
    %v4016 = vmul.f32 %v4015, 1.442695
    %v4017 = vpow.pop %v4016
    %v4018 = vadd.f32 %v4017, 1.0
    %v4019 = vrcp.pop %v4018
    %v4020 = vmul.f32 1.0, %v4019
    %4022 = vrot.lane.b32.xlu0 %v4011, 64
    %v4023 = vpop.permute.xlu0 %4022
    %v4025 = vmul.f32 %v4020, %v4023
    %4027 = vrot.lane.b32.xlu0 %v4025, 64
    %v4028 = vpop.permute.xlu0 %4027
    %v4030 = vadd.f32 %v3941, %v4028
    %v4031 = vtanh.pop %v4030
    %v4032 = vsub.f32 1.0, %v4020
    %4034 = vrot.lane.b32.xlu0 %v4031, 96
    %v4035 = vpop.permute.xlu0 %4034
    %v4037 = vmul.f32 %v4032, %v4035
    %v4038 = vmul.f32 %v4020, %v3534
    %v4039 = vadd.f32 %v4037, %v4038
    %4041 = vrot.lane.b32.xlu0 %v4039, 96
    %v4042 = vpop.permute.xlu0 %4041
    %v4043 = vsel %vm91, %v4042, 0
    %4045 = vmatprep.subr.mxu0 0.0
    %4046 = vmatpush1.msra.mxu0 0.0
    %4047 = vmatprep.subr.mxu0 0.0
    %4048 = vmatpush1.msra.mxu0 0.0
    %4049 = vmatprep.subr.mxu0 0.0
    %4050 = vmatpush1.msra.mxu0 0.0
    %4051 = vmatprep.subr.mxu0 0.0
    %4052 = vmatpush1.msra.mxu0 0.0
    %4053 = vmatprep.subr.mxu0 0.0
    %4054 = vmatpush1.msra.mxu0 0.0
    %4055 = vmatprep.subr.mxu0 0.0
    %4056 = vmatpush1.msra.mxu0 0.0
    %4057 = vmatprep.subr.mxu0 0.0
    %4058 = vmatpush1.msra.mxu0 0.0
    %4059 = vmatprep.subr.mxu0 0.0
    %4060 = vmatpush1.msra.mxu0 0.0
    %4061 = vmatprep.subr.mxu0 0.0
    %4062 = vmatpush1.msra.mxu0 0.0
    %4063 = vmatprep.subr.mxu0 0.0
    %4064 = vmatpush1.msra.mxu0 0.0
    %4065 = vmatprep.subr.mxu0 0.0
    %4066 = vmatpush1.msra.mxu0 0.0
    %4067 = vmatprep.subr.mxu0 0.0
    %4068 = vmatpush1.msra.mxu0 0.0
    %4069 = vmatprep.subr.mxu0 0.0
    %4070 = vmatpush1.msra.mxu0 %v69
    %4071 = vmatprep.subr.mxu0 0.0
    %4072 = vmatpush1.msra.mxu0 %v68
    %4073 = vmatprep.subr.mxu0 0.0
    %4074 = vmatpush1.msra.mxu0 %v67
    %4075 = vmatprep.subr.mxu0 0.0
    %4076 = vmatpush1.msra.mxu0 %v66
    %4077 = vmatprep.subr.mxu0 0.0
    %4078 = vmatpush2.msra.mxu0 0.0
    %4079 = vmatprep.subr.mxu0 0.0
    %4080 = vmatpush2.msra.mxu0 0.0
    %4081 = vmatprep.subr.mxu0 0.0
    %4082 = vmatpush2.msra.mxu0 0.0
    %4083 = vmatprep.subr.mxu0 0.0
    %4084 = vmatpush2.msra.mxu0 0.0
    %4085 = vmatprep.subr.mxu0 0.0
    %4086 = vmatpush2.msra.mxu0 0.0
    %4087 = vmatprep.subr.mxu0 0.0
    %4088 = vmatpush2.msra.mxu0 0.0
    %4089 = vmatprep.subr.mxu0 0.0
    %4090 = vmatpush2.msra.mxu0 0.0
    %4091 = vmatprep.subr.mxu0 0.0
    %4092 = vmatpush2.msra.mxu0 0.0
    %4093 = vmatprep.subr.mxu0 0.0
    %4094 = vmatpush2.msra.mxu0 0.0
    %4095 = vmatprep.subr.mxu0 0.0
    %4096 = vmatpush2.msra.mxu0 0.0
    %4097 = vmatprep.subr.mxu0 0.0
    %4098 = vmatpush2.msra.mxu0 0.0
    %4099 = vmatprep.subr.mxu0 0.0
    %4100 = vmatpush2.msra.mxu0 0.0
    %4101 = vmatprep.subr.mxu0 0.0
    %4102 = vmatpush2.msra.mxu0 0.0
    %4103 = vmatprep.subr.mxu0 0.0
    %4104 = vmatpush2.msra.mxu0 0.0
    %4105 = vmatprep.subr.mxu0 0.0
    %4106 = vmatpush2.msra.mxu0 0.0
    %4107 = vmatprep.subr.mxu0 0.0
    %4108 = vmatpush2.msra.mxu0 0.0
    %4109 = vmatprep.mubr.f32.mxu0 0.0
    %4110 = vmatmul.mubr.f32.gmra.mxu0 %v4043
    %v4111 = vpop.f32.mrf.mxu0
    %v4112 = vadd.f32 %v78, %v4111
    %v4113 = vpop.f32.mrf.mxu0
    %4114 = vdwg.mxu0
    %v4115 = vsel %vm167, %v4112, -inf
    %4116 = vmax.xlane.f32.xlu0 %v4115
    %v4117 = vpop.xlane.xlu0 %4116
    %v4118 = vsub.f32 %v4112, %v4117
    %v4119 = vmul.f32 %v4118, 1.442695
    %v4120 = vpow.pop %v4119
    %v4121 = vsel %vm167, %v4120, 0.0
    %4122 = vadd.xlane.f32.xlu0 %v4121
    %v4123 = vpop.xlane.xlu0 %4122
    %v4124 = vlog2.pop %v4123
    %v4125 = vmul.f32 %v4124, 0.6931472
    %v4126 = vadd.f32 %v4125, %v4117
    %v4127 = vsub.f32 %v4112, %v4126
    %4128 = vrot.lane.b32.xlu0 %v3718, 64
    %v4129 = vpop.permute.xlu0 %4128
    %v4131 = vsel %vm91, %v4127, %v4039
    %v4132 = vsel %vm93, %v4131, %v4129
    %v4133 = vsel %vm597, %v4132, 0.0
    %v4135 = vrot.slane %v1103, 7
    %v4138 = vrot.slane %v1608, 6
    %v4141 = vrot.slane %v2113, 5
    %v4144 = vrot.slane %v2618, 4
    %v4147 = vrot.slane %v3123, 3
    %v4150 = vrot.slane %v3628, 2
    %v4153 = vrot.slane %v4133, 1
    %vm4155 = vcmask 1040384
    %v4156 = vsel %vm4155, %v598, %v4135
    %vm4157 = vcmask 1041408
    %v4158 = vsel %vm4157, %v4156, %v4138
    %vm4159 = vcmask 1042432
    %v4160 = vsel %vm4159, %v4158, %v4141
    %vm4161 = vcmask 1043456
    %v4162 = vsel %vm4161, %v4160, %v4144
    %vm4163 = vcmask 1044480
    %v4164 = vsel %vm4163, %v4162, %v4147
    %vm4165 = vcmask 1045504
    %v4166 = vsel %vm4165, %v4164, %v4150
    %vm4167 = vcmask 1046528
    %v4168 = vsel %vm4167, %v4166, %v4153
    %4169 = vst [vmem:[%s8] sm:$0xff] %v4168
    // Predicated region
    $region38: #{attend_decoder_forward_seq.1} parent=1 // pred_check
      _
    $region39: #{attend_decoder_forward_seq.1} parent=1 // pred_check_branch
      %4171 = sbr.rel (0) target = $region41
    $region40: #{attend_decoder_forward_seq.1} parent=1 // pred_region
      _
    $region41: #{attend_decoder_forward_seq.1} parent=1 // pred_fallthru
      _
    // Predicated region
    $region42: #{attend_decoder_forward_seq.1} parent=1 // pred_check
      _
    $region43: #{attend_decoder_forward_seq.1} parent=1 // pred_check_branch
      %4173 = sbr.rel (0) target = $region45
    $region44: #{attend_decoder_forward_seq.1} parent=1 // pred_region
      _
    $region45: #{attend_decoder_forward_seq.1} parent=1 // pred_fallthru
      _
    %4174 = vsyncpa [#allocation3], 1

</llo_original>
